<compile_context>
chip_gen: v6e
topology: v6e:2x2x1
jax: 0.10.0
libtpu: 0.0.40
codegen_flags: <defaults>
</compile_context>

<pallas_src>
import functools
import math

import jax
import jax.numpy as jnp
import numpy as np
from jax.experimental import pallas as pl
from jax.experimental.pallas import tpu as pltpu

_BN_EPS = 1e-5
_HIGHEST = jax.lax.Precision.HIGHEST


def _sigmoid(x):
    # 1 / (1 + exp(-x)): EUP exp + VPU ops.
    return 1.0 / (1.0 + jnp.exp(-x))


def _erf(x):
    # Abramowitz & Stegun 7.1.26 rational approximation, |err| <= 1.5e-7.
    a1, a2, a3, a4, a5 = (0.254829592, -0.284496736, 1.421413741,
                          -1.453152027, 1.061405429)
    p = 0.3275911
    s = jnp.where(x >= 0.0, 1.0, -1.0)
    ax = jnp.abs(x)
    t = 1.0 / (1.0 + p * ax)
    poly = ((((a5 * t + a4) * t + a3) * t + a2) * t + a1) * t
    return s * (1.0 - poly * jnp.exp(-ax * ax))


def _gelu_exact(x):
    # PyTorch nn.GELU() default is the exact erf-based GELU (not tanh approx).
    return 0.5 * x * (1.0 + _erf(x * 0.7071067811865476))


def _dot(a, b):
    # Per-dot precision (no global matmul-precision flag).
    return jnp.dot(a, b, preferred_element_type=jnp.float32, precision=_HIGHEST)


def _am_kernel(x1_ref, x2_ref, mask_ref, w1_ref, b1_ref, w2_ref, b2_ref,
               w3_ref, b3_ref, wg_ref, bg_ref, p1_ref, p2_ref, o_ref,
               *, W, HW, bt):
    w1 = w1_ref[...]
    b1 = b1_ref[...]
    w2 = w2_ref[...]
    b2 = b2_ref[...]
    w3 = w3_ref[...]
    b3 = b3_ref[...]
    wg = wg_ref[...]
    bg = bg_ref[...]
    p1 = p1_ref[...]
    p2 = p2_ref[...]
    inv_hw = 1.0 / HW

    # Static unroll over the (small) batch tile.
    for b in range(bt):
        # torch.cat(dim=1): sublane concat in-kernel (no wrapper HBM pass).
        x = jnp.concatenate(
            [x1_ref[b].astype(jnp.float32), x2_ref[b].astype(jnp.float32)],
            axis=0)                                          # (Cin, HW)

        # conv1 (1x1, BN folded) + exact GELU.
        y = _gelu_exact(_dot(w1, x) + b1)                    # (Cin, HW)

        # conv2 (1x1, BN folded) -> sigmoid gate on the concatenated input.
        z = x * _sigmoid(_dot(w2, y) + b2)                   # (Cin, HW)

        # conv3 (3x3, pad=1, BN folded): spatial shift (dy, dx) == lane-axis
        # roll by dy*W+dx on the flattened HW axis (XLU); the edge mask zeroes
        # out-of-image / row-wrap taps.  All 9 taps are stacked and contracted
        # in one K = 9*Cin MXU matmul.
        taps = []
        for ky in range(3):
            for kx in range(3):
                s = (ky - 1) * W + (kx - 1)
                if s == 0:
                    taps.append(z)                           # center: no mask
                else:
                    zs = pltpu.roll(z, shift=(-s) % HW, axis=1)
                    taps.append(zs * mask_ref[ky * 3 + kx])  # (1, HW) mask
        zstack = jnp.concatenate(taps, axis=0)               # (9*Cin, HW)
        t3 = _dot(w3, zstack) + b3                           # (Cout, HW)

        # MetaAconC.  fc2(fc1(.)) was pre-folded to (wg, bg) in the wrapper;
        # mean and matmul commute, so apply wg to t3 and reduce over lanes.
        gsum = jnp.sum(_dot(wg, t3), axis=1, keepdims=True)  # (Cout, 1)
        beta = _sigmoid(gsum * inv_hw + bg)                  # (Cout, 1)
        d = (p1 - p2) * t3
        out = d * _sigmoid(beta * d) + p2 * t3

        o_ref[b] = out.astype(o_ref.dtype)                   # lane-dense store


def _fold_bn(w, gamma, beta, mean, var, eps=_BN_EPS):
    # Inference-mode BatchNorm folded into conv weight/bias.
    s = gamma / jnp.sqrt(var + eps)
    return w * s[:, None, None, None], beta - mean * s


def _round_up(x, m):
    return (x + m - 1) // m * m


def _padded_bytes(shape, itemsize):
    # VMEM footprint of one buffer: last dim lane-padded to 128, second-to-last
    # sublane-padded (8 for 4-byte, 16 for 2-byte dtypes).
    s = list(shape)
    s[-1] = _round_up(s[-1], 128)
    if len(s) >= 2:
        s[-2] = _round_up(s[-2], {4: 8, 2: 16, 1: 32}.get(itemsize, 8))
    return int(np.prod(s)) * itemsize


def _full_spec(shape):
    # Whole (small) array resident in VMEM, same block every grid step.
    return pl.BlockSpec(shape, lambda *_: (0,) * len(shape))


def am_forward(input_x, input_y, params):
    """AM forward.  input_x: (B, Cx, H, W), input_y: (B, Cy, H, W), NCHW."""
    B, Cx, H, W = input_x.shape
    Cy = input_y.shape[1]
    Cin = Cx + Cy
    HW = H * W
    f32 = jnp.float32

    # ---- fold BatchNorm; lay weights out for the (C, HW) lane-dense kernel --
    w1e, b1 = _fold_bn(params["w1"], *params["bn1"])
    w2e, b2 = _fold_bn(params["w2"], *params["bn2"])
    w3e, b3 = _fold_bn(params["w3"], *params["bn3"])
    Cout = w3e.shape[0]

    w1 = w1e[:, :, 0, 0].astype(f32)                                   # (Cin, Cin)
    w2 = w2e[:, :, 0, 0].astype(f32)                                   # (Cin, Cin)
    # Fused 3x3 weight: (Cout, 9*Cin), tap-major (ky*3+kx) to match the kernel.
    w3f = jnp.transpose(w3e, (0, 2, 3, 1)).reshape(Cout, 9 * Cin).astype(f32)
    b1c = b1.reshape(Cin, 1).astype(f32)
    b2c = b2.reshape(Cin, 1).astype(f32)
    b3c = b3.reshape(Cout, 1).astype(f32)
    # MetaAconC: fc2(fc1(.)) has no activation in between -> fold to one GEMM.
    wfc1 = params["wfc1"][:, :, 0, 0].astype(f32)                      # (hidden, Cout)
    wfc2 = params["wfc2"][:, :, 0, 0].astype(f32)                      # (Cout, hidden)
    wg = jnp.dot(wfc2, wfc1, precision=_HIGHEST)                       # (Cout, Cout)
    bg = (jnp.dot(wfc2, params["bfc1"].astype(f32), precision=_HIGHEST)
          + params["bfc2"].astype(f32)).reshape(Cout, 1)
    p1 = params["p1"].reshape(Cout, 1).astype(f32)
    p2 = params["p2"].reshape(Cout, 1).astype(f32)

    # Static edge masks for the 9 conv taps, HW on the lane axis (lane-dense).
    masks_np = np.zeros((9, 1, HW), np.float32)
    n = np.arange(HW)
    hh, ww = n // W, n % W
    for ky in range(3):
        for kx in range(3):
            dy, dx = ky - 1, kx - 1
            valid = ((hh + dy >= 0) & (hh + dy < H) &
                     (ww + dx >= 0) & (ww + dx < W))
            masks_np[ky * 3 + kx, 0] = valid.astype(np.float32)
    masks = jnp.asarray(masks_np)

    # ---- NCHW -> (B, C, HW) is a pure reshape: no transpose, no extra HBM ---
    x1 = input_x.reshape(B, Cx, HW)
    x2 = input_y.reshape(B, Cy, HW)
    itemsize = x1.dtype.itemsize

    # ---- batch tile: amortize grid-step overhead, keep >= 2 steps (megacore)
    per_batch_io = (_padded_bytes((Cx, HW), itemsize)
                    + _padded_bytes((Cy, HW), itemsize)
                    + _padded_bytes((Cout, HW), itemsize))
    bt = 1
    for cand in range(1, B + 1):
        if B % cand:
            continue
        if B >= 2 and B // cand < 2:
            continue                      # keep both cores busy
        if cand * per_batch_io > (4 << 20):
            continue
        bt = cand
    grid = (B // bt,)

    # ---- VMEM budget from padded block sizes, capped per TPU generation -----
    act_bytes = bt * per_batch_io
    const_shapes = [(9, 1, HW), (Cin, Cin), (Cin, 1), (Cin, Cin), (Cin, 1),
                    (Cout, 9 * Cin), (Cout, 1), (Cout, Cout), (Cout, 1),
                    (Cout, 1), (Cout, 1)]
    const_bytes = sum(_padded_bytes(s, 4) for s in const_shapes)
    temp_bytes = ((24 * _round_up(Cin, 8) + 6 * _round_up(Cout, 8))
                  * _round_up(HW, 128) * 4)
    vmem_need = 2 * act_bytes + 2 * const_bytes + temp_bytes + (2 << 20)
    try:
        cap = getattr(pltpu.get_tpu_info(), "vmem_capacity_bytes", None)
        cap = (cap * 3 // 4) if cap else (48 << 20)
    except Exception:
        cap = 48 << 20                    # safe under v7x's 64 MiB VMEM
    vmem_limit = int(max(16 << 20, min(vmem_need, cap)))

    out = pl.pallas_call(
        functools.partial(_am_kernel, W=W, HW=HW, bt=bt),
        out_shape=jax.ShapeDtypeStruct((B, Cout, HW), x1.dtype),
        grid=grid,
        in_specs=[
            pl.BlockSpec((bt, Cx, HW), lambda i: (i, 0, 0)),   # input_x slab
            pl.BlockSpec((bt, Cy, HW), lambda i: (i, 0, 0)),   # input_y slab
            _full_spec((9, 1, HW)),                            # tap edge masks
            _full_spec((Cin, Cin)), _full_spec((Cin, 1)),      # conv1 (folded)
            _full_spec((Cin, Cin)), _full_spec((Cin, 1)),      # conv2 (folded)
            _full_spec((Cout, 9 * Cin)), _full_spec((Cout, 1)),  # conv3 fused
            _full_spec((Cout, Cout)), _full_spec((Cout, 1)),   # folded fc2∘fc1
            _full_spec((Cout, 1)), _full_spec((Cout, 1)),      # p1, p2
        ],
        out_specs=pl.BlockSpec((bt, Cout, HW), lambda i: (i, 0, 0)),
        compiler_params=pltpu.CompilerParams(
            dimension_semantics=("parallel",),
            vmem_limit_bytes=vmem_limit),
    )(x1, x2, masks, w1, b1c, w2, b2c, w3f, b3c, wg, bg, p1, p2)

    # (B, Cout, HW) -> (B, Cout, H, W): pure reshape, no transpose.
    return out.reshape(B, Cout, H, W)


# --------------------------- pure-JAX reference -----------------------------
def am_reference(input_x, input_y, params, eps=_BN_EPS):
    # Precision scoped locally (no global config mutation).
    with jax.default_matmul_precision("highest"):
        x = jnp.concatenate([input_x, input_y], axis=1)

        def conv_bn(v, w, bn, pad):
            y = jax.lax.conv_general_dilated(
                v, w, window_strides=(1, 1), padding=[(pad, pad), (pad, pad)],
                dimension_numbers=("NCHW", "OIHW", "NCHW"),
                precision=_HIGHEST)
            gamma, beta, mean, var = bn
            s = (gamma / jnp.sqrt(var + eps))[None, :, None, None]
            return (y - mean[None, :, None, None]) * s + beta[None, :, None, None]

        t1 = conv_bn(x, params["w1"], params["bn1"], 0)
        y = jax.nn.gelu(t1, approximate=False)
        t2 = conv_bn(y, params["w2"], params["bn2"], 0)
        z = x * jax.nn.sigmoid(t2)
        t3 = conv_bn(z, params["w3"], params["bn3"], 1)

        m = t3.mean(axis=(2, 3))                                        # (B, Cout)
        h = m @ params["wfc1"][:, :, 0, 0].T + params["bfc1"]
        beta_g = jax.nn.sigmoid(h @ params["wfc2"][:, :, 0, 0].T + params["bfc2"])
        beta4 = beta_g[:, :, None, None]
        p1 = params["p1"][None, :, None, None]
        p2 = params["p2"][None, :, None, None]
        d = (p1 - p2) * t3
        return d * jax.nn.sigmoid(beta4 * d) + p2 * t3


if __name__ == "__main__":
    B, Cx, Cy, H, W = 2, 8, 8, 16, 16
    Cin = Cx + Cy                    # AM in_ch (after channel concat) = 16
    Cout = 16                        # AM out_ch
    hidden = max(4, Cout // 16)      # MetaAconC bottleneck width = 4

    key = jax.random.PRNGKey(0)
    ks = jax.random.split(key, 14)

    def bn_init(k, C):
        k1, k2, k3, k4 = jax.random.split(k, 4)
        return (1.0 + 0.1 * jax.random.normal(k1, (C,), jnp.float32),   # gamma
                0.1 * jax.random.normal(k2, (C,), jnp.float32),         # beta
                0.1 * jax.random.normal(k3, (C,), jnp.float32),         # running mean
                1.0 + 0.1 * jax.random.uniform(k4, (C,), jnp.float32))  # running var

    params = {
        "w1": jax.random.normal(ks[0], (Cin, Cin, 1, 1), jnp.float32) / math.sqrt(Cin),
        "bn1": bn_init(ks[1], Cin),
        "w2": jax.random.normal(ks[2], (Cin, Cin, 1, 1), jnp.float32) / math.sqrt(Cin),
        "bn2": bn_init(ks[3], Cin),
        "w3": jax.random.normal(ks[4], (Cout, Cin, 3, 3), jnp.float32) / math.sqrt(9 * Cin),
        "bn3": bn_init(ks[5], Cout),
        "wfc1": jax.random.normal(ks[6], (hidden, Cout, 1, 1), jnp.float32) / math.sqrt(Cout),
        "bfc1": 0.1 * jax.random.normal(ks[7], (hidden,), jnp.float32),
        "wfc2": jax.random.normal(ks[8], (Cout, hidden, 1, 1), jnp.float32) / math.sqrt(hidden),
        "bfc2": 0.1 * jax.random.normal(ks[9], (Cout,), jnp.float32),
        "p1": jax.random.normal(ks[10], (Cout,), jnp.float32),
        "p2": jax.random.normal(ks[11], (Cout,), jnp.float32),
    }

    input_x = jax.random.normal(ks[12], (B, Cx, H, W), jnp.float32)
    input_y = jax.random.normal(ks[13], (B, Cy, H, W), jnp.float32)

    out = jax.jit(am_forward)(input_x, input_y, params)
    out = jax.block_until_ready(out)

    ref = am_reference(input_x, input_y, params)
    np.testing.assert_allclose(np.asarray(out), np.asarray(ref),
                               rtol=1e-3, atol=1e-3)

    print("KERNEL_OK")
</pallas_src>

<mosaic_0001>
module attributes {stable_mosaic.version = 11 : i64} {
  func.func @_am_kernel(%arg0: i32, %arg1: memref<1x8x256xf32, #tpu.memory_space<vmem>>, %arg2: memref<1x8x256xf32, #tpu.memory_space<vmem>>, %arg3: memref<9x1x256xf32, #tpu.memory_space<vmem>>, %arg4: memref<16x16xf32, #tpu.memory_space<vmem>>, %arg5: memref<16x1xf32, #tpu.memory_space<vmem>>, %arg6: memref<16x16xf32, #tpu.memory_space<vmem>>, %arg7: memref<16x1xf32, #tpu.memory_space<vmem>>, %arg8: memref<16x144xf32, #tpu.memory_space<vmem>>, %arg9: memref<16x1xf32, #tpu.memory_space<vmem>>, %arg10: memref<16x16xf32, #tpu.memory_space<vmem>>, %arg11: memref<16x1xf32, #tpu.memory_space<vmem>>, %arg12: memref<16x1xf32, #tpu.memory_space<vmem>>, %arg13: memref<16x1xf32, #tpu.memory_space<vmem>>, %arg14: memref<1x16x256xf32, #tpu.memory_space<vmem>>) attributes {dimension_semantics = [#tpu.dimension_semantics<parallel>], iteration_bounds = array<i64: 2>, scalar_prefetch = 0 : i64, scratch_operands = 0 : i64, tpu.core_type = #tpu.core_type<tc>, window_params = [{transform_indices = @transform_0, window_bounds = array<i64: 1, 8, 256>}, {transform_indices = @transform_1, window_bounds = array<i64: 1, 8, 256>}, {pipeline_mode = #tpu.pipeline_mode<synchronous>, transform_indices = @transform_2, window_bounds = array<i64: 9, 1, 256>}, {pipeline_mode = #tpu.pipeline_mode<synchronous>, transform_indices = @transform_3, window_bounds = array<i64: 16, 16>}, {pipeline_mode = #tpu.pipeline_mode<synchronous>, transform_indices = @transform_4, window_bounds = array<i64: 16, 1>}, {pipeline_mode = #tpu.pipeline_mode<synchronous>, transform_indices = @transform_5, window_bounds = array<i64: 16, 16>}, {pipeline_mode = #tpu.pipeline_mode<synchronous>, transform_indices = @transform_6, window_bounds = array<i64: 16, 1>}, {pipeline_mode = #tpu.pipeline_mode<synchronous>, transform_indices = @transform_7, window_bounds = array<i64: 16, 144>}, {pipeline_mode = #tpu.pipeline_mode<synchronous>, transform_indices = @transform_8, window_bounds = array<i64: 16, 1>}, {pipeline_mode = #tpu.pipeline_mode<synchronous>, transform_indices = @transform_9, window_bounds = array<i64: 16, 16>}, {pipeline_mode = #tpu.pipeline_mode<synchronous>, transform_indices = @transform_10, window_bounds = array<i64: 16, 1>}, {pipeline_mode = #tpu.pipeline_mode<synchronous>, transform_indices = @transform_11, window_bounds = array<i64: 16, 1>}, {pipeline_mode = #tpu.pipeline_mode<synchronous>, transform_indices = @transform_12, window_bounds = array<i64: 16, 1>}, {transform_indices = @transform_13, window_bounds = array<i64: 1, 16, 256>}]} {
    %c0 = arith.constant 0 : index
    %c0_0 = arith.constant 0 : index
    %0 = vector.load %arg4[%c0, %c0_0] : memref<16x16xf32, #tpu.memory_space<vmem>>, vector<16x16xf32>
    %c0_1 = arith.constant 0 : index
    %c0_2 = arith.constant 0 : index
    %1 = vector.load %arg5[%c0_1, %c0_2] : memref<16x1xf32, #tpu.memory_space<vmem>>, vector<16x1xf32>
    %c0_3 = arith.constant 0 : index
    %c0_4 = arith.constant 0 : index
    %2 = vector.load %arg6[%c0_3, %c0_4] : memref<16x16xf32, #tpu.memory_space<vmem>>, vector<16x16xf32>
    %c0_5 = arith.constant 0 : index
    %c0_6 = arith.constant 0 : index
    %3 = vector.load %arg7[%c0_5, %c0_6] : memref<16x1xf32, #tpu.memory_space<vmem>>, vector<16x1xf32>
    %c0_7 = arith.constant 0 : index
    %c0_8 = arith.constant 0 : index
    %4 = vector.load %arg8[%c0_7, %c0_8] : memref<16x144xf32, #tpu.memory_space<vmem>>, vector<16x144xf32>
    %c0_9 = arith.constant 0 : index
    %c0_10 = arith.constant 0 : index
    %5 = vector.load %arg9[%c0_9, %c0_10] : memref<16x1xf32, #tpu.memory_space<vmem>>, vector<16x1xf32>
    %c0_11 = arith.constant 0 : index
    %c0_12 = arith.constant 0 : index
    %6 = vector.load %arg10[%c0_11, %c0_12] : memref<16x16xf32, #tpu.memory_space<vmem>>, vector<16x16xf32>
    %c0_13 = arith.constant 0 : index
    %c0_14 = arith.constant 0 : index
    %7 = vector.load %arg11[%c0_13, %c0_14] : memref<16x1xf32, #tpu.memory_space<vmem>>, vector<16x1xf32>
    %c0_15 = arith.constant 0 : index
    %c0_16 = arith.constant 0 : index
    %8 = vector.load %arg12[%c0_15, %c0_16] : memref<16x1xf32, #tpu.memory_space<vmem>>, vector<16x1xf32>
    %c0_17 = arith.constant 0 : index
    %c0_18 = arith.constant 0 : index
    %9 = vector.load %arg13[%c0_17, %c0_18] : memref<16x1xf32, #tpu.memory_space<vmem>>, vector<16x1xf32>
    %c0_19 = arith.constant 0 : index
    %c0_20 = arith.constant 0 : index
    %c0_21 = arith.constant 0 : index
    %10 = vector.load %arg1[%c0_19, %c0_20, %c0_21] : memref<1x8x256xf32, #tpu.memory_space<vmem>>, vector<1x8x256xf32>
    %11 = vector.shape_cast %10 : vector<1x8x256xf32> to vector<8x256xf32>
    %c0_22 = arith.constant 0 : index
    %c0_23 = arith.constant 0 : index
    %c0_24 = arith.constant 0 : index
    %12 = vector.load %arg2[%c0_22, %c0_23, %c0_24] : memref<1x8x256xf32, #tpu.memory_space<vmem>>, vector<1x8x256xf32>
    %13 = vector.shape_cast %12 : vector<1x8x256xf32> to vector<8x256xf32>
    %14 = tpu.concatenate %11, %13 in 0 : vector<8x256xf32>, vector<8x256xf32> -> vector<16x256xf32>
    %cst = arith.constant dense<0.000000e+00> : vector<16x256xf32>
    %15 = tpu.matmul %0, %14, %cst {dimension_numbers = #tpu.dot_dimension_numbers<[1], [0], [0], [1], [0, 0, 1, 1], [], []>, precision = #tpu.contract_precision<fp32>} : vector<16x16xf32>, vector<16x256xf32>, vector<16x256xf32> -> vector<16x256xf32>
    %16 = vector.broadcast %1 : vector<16x1xf32> to vector<16x256xf32>
    %17 = arith.addf %15, %16 : vector<16x256xf32>
    %cst_25 = arith.constant 5.000000e-01 : f32
    %18 = vector.broadcast %cst_25 : f32 to vector<16x256xf32>
    %19 = arith.mulf %18, %17 : vector<16x256xf32>
    %cst_26 = arith.constant 0.707106769 : f32
    %20 = vector.broadcast %cst_26 : f32 to vector<16x256xf32>
    %21 = arith.mulf %17, %20 : vector<16x256xf32>
    %cst_27 = arith.constant 0.000000e+00 : f32
    %22 = vector.broadcast %cst_27 : f32 to vector<16x256xf32>
    %23 = arith.cmpf oge, %21, %22 : vector<16x256xf32>
    %cst_28 = arith.constant 1.000000e+00 : f32
    %cst_29 = arith.constant -1.000000e+00 : f32
    %24 = vector.broadcast %cst_28 : f32 to vector<16x256xf32>
    %25 = vector.broadcast %cst_29 : f32 to vector<16x256xf32>
    %26 = arith.select %23, %24, %25 : vector<16x256xi1>, vector<16x256xf32>
    %27 = math.absf %21 : vector<16x256xf32>
    %cst_30 = arith.constant 0.327591091 : f32
    %28 = vector.broadcast %cst_30 : f32 to vector<16x256xf32>
    %29 = arith.mulf %28, %27 : vector<16x256xf32>
    %cst_31 = arith.constant 1.000000e+00 : f32
    %30 = vector.broadcast %cst_31 : f32 to vector<16x256xf32>
    %31 = arith.addf %30, %29 : vector<16x256xf32>
    %cst_32 = arith.constant 1.000000e+00 : f32
    %32 = vector.broadcast %cst_32 : f32 to vector<16x256xf32>
    %33 = arith.divf %32, %31 : vector<16x256xf32>
    %cst_33 = arith.constant 1.06140542 : f32
    %34 = vector.broadcast %cst_33 : f32 to vector<16x256xf32>
    %35 = arith.mulf %34, %33 : vector<16x256xf32>
    %cst_34 = arith.constant -1.45315206 : f32
    %36 = vector.broadcast %cst_34 : f32 to vector<16x256xf32>
    %37 = arith.addf %35, %36 : vector<16x256xf32>
    %38 = arith.mulf %37, %33 : vector<16x256xf32>
    %cst_35 = arith.constant 1.42141378 : f32
    %39 = vector.broadcast %cst_35 : f32 to vector<16x256xf32>
    %40 = arith.addf %38, %39 : vector<16x256xf32>
    %41 = arith.mulf %40, %33 : vector<16x256xf32>
    %cst_36 = arith.constant -0.284496725 : f32
    %42 = vector.broadcast %cst_36 : f32 to vector<16x256xf32>
    %43 = arith.addf %41, %42 : vector<16x256xf32>
    %44 = arith.mulf %43, %33 : vector<16x256xf32>
    %cst_37 = arith.constant 0.254829586 : f32
    %45 = vector.broadcast %cst_37 : f32 to vector<16x256xf32>
    %46 = arith.addf %44, %45 : vector<16x256xf32>
    %47 = arith.mulf %46, %33 : vector<16x256xf32>
    %cst_38 = arith.constant 0.000000e+00 : f32
    %48 = vector.broadcast %cst_38 : f32 to vector<16x256xf32>
    %49 = arith.subf %48, %27 : vector<16x256xf32>
    %50 = arith.mulf %49, %27 : vector<16x256xf32>
    %51 = math.exp %50 : vector<16x256xf32>
    %52 = arith.mulf %47, %51 : vector<16x256xf32>
    %cst_39 = arith.constant 1.000000e+00 : f32
    %53 = vector.broadcast %cst_39 : f32 to vector<16x256xf32>
    %54 = arith.subf %53, %52 : vector<16x256xf32>
    %55 = arith.mulf %26, %54 : vector<16x256xf32>
    %cst_40 = arith.constant 1.000000e+00 : f32
    %56 = vector.broadcast %cst_40 : f32 to vector<16x256xf32>
    %57 = arith.addf %56, %55 : vector<16x256xf32>
    %58 = arith.mulf %19, %57 : vector<16x256xf32>
    %cst_41 = arith.constant dense<0.000000e+00> : vector<16x256xf32>
    %59 = tpu.matmul %2, %58, %cst_41 {dimension_numbers = #tpu.dot_dimension_numbers<[1], [0], [0], [1], [0, 0, 1, 1], [], []>, precision = #tpu.contract_precision<fp32>} : vector<16x16xf32>, vector<16x256xf32>, vector<16x256xf32> -> vector<16x256xf32>
    %60 = vector.broadcast %3 : vector<16x1xf32> to vector<16x256xf32>
    %61 = arith.addf %59, %60 : vector<16x256xf32>
    %cst_42 = arith.constant 0.000000e+00 : f32
    %62 = vector.broadcast %cst_42 : f32 to vector<16x256xf32>
    %63 = arith.subf %62, %61 : vector<16x256xf32>
    %64 = math.exp %63 : vector<16x256xf32>
    %cst_43 = arith.constant 1.000000e+00 : f32
    %65 = vector.broadcast %cst_43 : f32 to vector<16x256xf32>
    %66 = arith.addf %65, %64 : vector<16x256xf32>
    %cst_44 = arith.constant 1.000000e+00 : f32
    %67 = vector.broadcast %cst_44 : f32 to vector<16x256xf32>
    %68 = arith.divf %67, %66 : vector<16x256xf32>
    %69 = arith.mulf %14, %68 : vector<16x256xf32>
    %c17_i32 = arith.constant 17 : i32
    %70 = tpu.dynamic_rotate %69 by %c17_i32 dim 1 : vector<16x256xf32>, i32 -> vector<16x256xf32>
    %c0_45 = arith.constant 0 : index
    %c0_46 = arith.constant 0 : index
    %c0_47 = arith.constant 0 : index
    %71 = vector.load %arg3[%c0_45, %c0_46, %c0_47] : memref<9x1x256xf32, #tpu.memory_space<vmem>>, vector<1x1x256xf32>
    %72 = vector.shape_cast %71 : vector<1x1x256xf32> to vector<1x256xf32>
    %73 = vector.broadcast %72 : vector<1x256xf32> to vector<16x256xf32>
    %74 = arith.mulf %70, %73 : vector<16x256xf32>
    %c16_i32 = arith.constant 16 : i32
    %75 = tpu.dynamic_rotate %69 by %c16_i32 dim 1 : vector<16x256xf32>, i32 -> vector<16x256xf32>
    %c1 = arith.constant 1 : index
    %c0_48 = arith.constant 0 : index
    %c0_49 = arith.constant 0 : index
    %76 = vector.load %arg3[%c1, %c0_48, %c0_49] : memref<9x1x256xf32, #tpu.memory_space<vmem>>, vector<1x1x256xf32>
    %77 = vector.shape_cast %76 : vector<1x1x256xf32> to vector<1x256xf32>
    %78 = vector.broadcast %77 : vector<1x256xf32> to vector<16x256xf32>
    %79 = arith.mulf %75, %78 : vector<16x256xf32>
    %c15_i32 = arith.constant 15 : i32
    %80 = tpu.dynamic_rotate %69 by %c15_i32 dim 1 : vector<16x256xf32>, i32 -> vector<16x256xf32>
    %c2 = arith.constant 2 : index
    %c0_50 = arith.constant 0 : index
    %c0_51 = arith.constant 0 : index
    %81 = vector.load %arg3[%c2, %c0_50, %c0_51] : memref<9x1x256xf32, #tpu.memory_space<vmem>>, vector<1x1x256xf32>
    %82 = vector.shape_cast %81 : vector<1x1x256xf32> to vector<1x256xf32>
    %83 = vector.broadcast %82 : vector<1x256xf32> to vector<16x256xf32>
    %84 = arith.mulf %80, %83 : vector<16x256xf32>
    %c1_i32 = arith.constant 1 : i32
    %85 = tpu.dynamic_rotate %69 by %c1_i32 dim 1 : vector<16x256xf32>, i32 -> vector<16x256xf32>
    %c3 = arith.constant 3 : index
    %c0_52 = arith.constant 0 : index
    %c0_53 = arith.constant 0 : index
    %86 = vector.load %arg3[%c3, %c0_52, %c0_53] : memref<9x1x256xf32, #tpu.memory_space<vmem>>, vector<1x1x256xf32>
    %87 = vector.shape_cast %86 : vector<1x1x256xf32> to vector<1x256xf32>
    %88 = vector.broadcast %87 : vector<1x256xf32> to vector<16x256xf32>
    %89 = arith.mulf %85, %88 : vector<16x256xf32>
    %c255_i32 = arith.constant 255 : i32
    %90 = tpu.dynamic_rotate %69 by %c255_i32 dim 1 : vector<16x256xf32>, i32 -> vector<16x256xf32>
    %c5 = arith.constant 5 : index
    %c0_54 = arith.constant 0 : index
    %c0_55 = arith.constant 0 : index
    %91 = vector.load %arg3[%c5, %c0_54, %c0_55] : memref<9x1x256xf32, #tpu.memory_space<vmem>>, vector<1x1x256xf32>
    %92 = vector.shape_cast %91 : vector<1x1x256xf32> to vector<1x256xf32>
    %93 = vector.broadcast %92 : vector<1x256xf32> to vector<16x256xf32>
    %94 = arith.mulf %90, %93 : vector<16x256xf32>
    %c241_i32 = arith.constant 241 : i32
    %95 = tpu.dynamic_rotate %69 by %c241_i32 dim 1 : vector<16x256xf32>, i32 -> vector<16x256xf32>
    %c6 = arith.constant 6 : index
    %c0_56 = arith.constant 0 : index
    %c0_57 = arith.constant 0 : index
    %96 = vector.load %arg3[%c6, %c0_56, %c0_57] : memref<9x1x256xf32, #tpu.memory_space<vmem>>, vector<1x1x256xf32>
    %97 = vector.shape_cast %96 : vector<1x1x256xf32> to vector<1x256xf32>
    %98 = vector.broadcast %97 : vector<1x256xf32> to vector<16x256xf32>
    %99 = arith.mulf %95, %98 : vector<16x256xf32>
    %c240_i32 = arith.constant 240 : i32
    %100 = tpu.dynamic_rotate %69 by %c240_i32 dim 1 : vector<16x256xf32>, i32 -> vector<16x256xf32>
    %c7 = arith.constant 7 : index
    %c0_58 = arith.constant 0 : index
    %c0_59 = arith.constant 0 : index
    %101 = vector.load %arg3[%c7, %c0_58, %c0_59] : memref<9x1x256xf32, #tpu.memory_space<vmem>>, vector<1x1x256xf32>
    %102 = vector.shape_cast %101 : vector<1x1x256xf32> to vector<1x256xf32>
    %103 = vector.broadcast %102 : vector<1x256xf32> to vector<16x256xf32>
    %104 = arith.mulf %100, %103 : vector<16x256xf32>
    %c239_i32 = arith.constant 239 : i32
    %105 = tpu.dynamic_rotate %69 by %c239_i32 dim 1 : vector<16x256xf32>, i32 -> vector<16x256xf32>
    %c8 = arith.constant 8 : index
    %c0_60 = arith.constant 0 : index
    %c0_61 = arith.constant 0 : index
    %106 = vector.load %arg3[%c8, %c0_60, %c0_61] : memref<9x1x256xf32, #tpu.memory_space<vmem>>, vector<1x1x256xf32>
    %107 = vector.shape_cast %106 : vector<1x1x256xf32> to vector<1x256xf32>
    %108 = vector.broadcast %107 : vector<1x256xf32> to vector<16x256xf32>
    %109 = arith.mulf %105, %108 : vector<16x256xf32>
    %110 = tpu.concatenate %74, %79, %84, %89, %69, %94, %99, %104, %109 in 0 : vector<16x256xf32>, vector<16x256xf32>, vector<16x256xf32>, vector<16x256xf32>, vector<16x256xf32>, vector<16x256xf32>, vector<16x256xf32>, vector<16x256xf32>, vector<16x256xf32> -> vector<144x256xf32>
    %cst_62 = arith.constant dense<0.000000e+00> : vector<16x256xf32>
    %111 = tpu.matmul %4, %110, %cst_62 {dimension_numbers = #tpu.dot_dimension_numbers<[1], [0], [0], [1], [0, 0, 1, 1], [], []>, precision = #tpu.contract_precision<fp32>} : vector<16x144xf32>, vector<144x256xf32>, vector<16x256xf32> -> vector<16x256xf32>
    %112 = vector.broadcast %5 : vector<16x1xf32> to vector<16x256xf32>
    %113 = arith.addf %111, %112 : vector<16x256xf32>
    %cst_63 = arith.constant dense<0.000000e+00> : vector<16x256xf32>
    %114 = tpu.matmul %6, %113, %cst_63 {dimension_numbers = #tpu.dot_dimension_numbers<[1], [0], [0], [1], [0, 0, 1, 1], [], []>, precision = #tpu.contract_precision<fp32>} : vector<16x16xf32>, vector<16x256xf32>, vector<16x256xf32> -> vector<16x256xf32>
    %cst_64 = arith.constant dense<0.000000e+00> : vector<16xf32>
    %115 = vector.multi_reduction <add>, %114, %cst_64 [1] : vector<16x256xf32> to vector<16xf32>
    %116 = vector.shape_cast %115 : vector<16xf32> to vector<16x1xf32>
    %cst_65 = arith.constant 3.906250e-03 : f32
    %117 = vector.broadcast %cst_65 : f32 to vector<16x1xf32>
    %118 = arith.mulf %116, %117 : vector<16x1xf32>
    %119 = arith.addf %118, %7 : vector<16x1xf32>
    %cst_66 = arith.constant 0.000000e+00 : f32
    %120 = vector.broadcast %cst_66 : f32 to vector<16x1xf32>
    %121 = arith.subf %120, %119 : vector<16x1xf32>
    %122 = math.exp %121 : vector<16x1xf32>
    %cst_67 = arith.constant 1.000000e+00 : f32
    %123 = vector.broadcast %cst_67 : f32 to vector<16x1xf32>
    %124 = arith.addf %123, %122 : vector<16x1xf32>
    %cst_68 = arith.constant 1.000000e+00 : f32
    %125 = vector.broadcast %cst_68 : f32 to vector<16x1xf32>
    %126 = arith.divf %125, %124 : vector<16x1xf32>
    %127 = arith.subf %8, %9 : vector<16x1xf32>
    %128 = vector.broadcast %127 : vector<16x1xf32> to vector<16x256xf32>
    %129 = arith.mulf %128, %113 : vector<16x256xf32>
    %130 = vector.broadcast %126 : vector<16x1xf32> to vector<16x256xf32>
    %131 = arith.mulf %130, %129 : vector<16x256xf32>
    %cst_69 = arith.constant 0.000000e+00 : f32
    %132 = vector.broadcast %cst_69 : f32 to vector<16x256xf32>
    %133 = arith.subf %132, %131 : vector<16x256xf32>
    %134 = math.exp %133 : vector<16x256xf32>
    %cst_70 = arith.constant 1.000000e+00 : f32
    %135 = vector.broadcast %cst_70 : f32 to vector<16x256xf32>
    %136 = arith.addf %135, %134 : vector<16x256xf32>
    %cst_71 = arith.constant 1.000000e+00 : f32
    %137 = vector.broadcast %cst_71 : f32 to vector<16x256xf32>
    %138 = arith.divf %137, %136 : vector<16x256xf32>
    %139 = arith.mulf %129, %138 : vector<16x256xf32>
    %140 = vector.broadcast %9 : vector<16x1xf32> to vector<16x256xf32>
    %141 = arith.mulf %140, %113 : vector<16x256xf32>
    %142 = arith.addf %139, %141 : vector<16x256xf32>
    %c0_72 = arith.constant 0 : index
    %c0_73 = arith.constant 0 : index
    %c0_74 = arith.constant 0 : index
    %143 = vector.load %arg14[%c0_72, %c0_73, %c0_74] : memref<1x16x256xf32, #tpu.memory_space<vmem>>, vector<1x16x256xf32>
    %144 = vector.shape_cast %143 : vector<1x16x256xf32> to vector<16x256xf32>
    %145 = vector.shape_cast %142 : vector<16x256xf32> to vector<1x16x256xf32>
    tpu.vector_store %arg14[%c0_72, %c0_73, %c0_74], %145 {strides = array<i32>} : memref<1x16x256xf32, #tpu.memory_space<vmem>>, vector<1x16x256xf32>,
    return
  }
  func.func @transform_0(%arg0: i32) -> (i32, i32, i32) {
    %c0_i32 = arith.constant 0 : i32
    %c0_i32_0 = arith.constant 0 : i32
    %c0_i32_1 = arith.constant 0 : i32
    return %arg0, %c0_i32, %c0_i32_0 : i32, i32, i32
  }
  func.func @transform_1(%arg0: i32) -> (i32, i32, i32) {
    %c0_i32 = arith.constant 0 : i32
    %c0_i32_0 = arith.constant 0 : i32
    %c0_i32_1 = arith.constant 0 : i32
    return %arg0, %c0_i32, %c0_i32_0 : i32, i32, i32
  }
  func.func @transform_2(%arg0: i32) -> (i32, i32, i32) {
    %c0_i32 = arith.constant 0 : i32
    %c0_i32_0 = arith.constant 0 : i32
    %c0_i32_1 = arith.constant 0 : i32
    %c0_i32_2 = arith.constant 0 : i32
    return %c0_i32, %c0_i32_0, %c0_i32_1 : i32, i32, i32
  }
  func.func @transform_3(%arg0: i32) -> (i32, i32) {
    %c0_i32 = arith.constant 0 : i32
    %c0_i32_0 = arith.constant 0 : i32
    %c0_i32_1 = arith.constant 0 : i32
    return %c0_i32, %c0_i32_0 : i32, i32
  }
  func.func @transform_4(%arg0: i32) -> (i32, i32) {
    %c0_i32 = arith.constant 0 : i32
    %c0_i32_0 = arith.constant 0 : i32
    %c0_i32_1 = arith.constant 0 : i32
    return %c0_i32, %c0_i32_0 : i32, i32
  }
  func.func @transform_5(%arg0: i32) -> (i32, i32) {
    %c0_i32 = arith.constant 0 : i32
    %c0_i32_0 = arith.constant 0 : i32
    %c0_i32_1 = arith.constant 0 : i32
    return %c0_i32, %c0_i32_0 : i32, i32
  }
  func.func @transform_6(%arg0: i32) -> (i32, i32) {
    %c0_i32 = arith.constant 0 : i32
    %c0_i32_0 = arith.constant 0 : i32
    %c0_i32_1 = arith.constant 0 : i32
    return %c0_i32, %c0_i32_0 : i32, i32
  }
  func.func @transform_7(%arg0: i32) -> (i32, i32) {
    %c0_i32 = arith.constant 0 : i32
    %c0_i32_0 = arith.constant 0 : i32
    %c0_i32_1 = arith.constant 0 : i32
    return %c0_i32, %c0_i32_0 : i32, i32
  }
  func.func @transform_8(%arg0: i32) -> (i32, i32) {
    %c0_i32 = arith.constant 0 : i32
    %c0_i32_0 = arith.constant 0 : i32
    %c0_i32_1 = arith.constant 0 : i32
    return %c0_i32, %c0_i32_0 : i32, i32
  }
  func.func @transform_9(%arg0: i32) -> (i32, i32) {
    %c0_i32 = arith.constant 0 : i32
    %c0_i32_0 = arith.constant 0 : i32
    %c0_i32_1 = arith.constant 0 : i32
    return %c0_i32, %c0_i32_0 : i32, i32
  }
  func.func @transform_10(%arg0: i32) -> (i32, i32) {
    %c0_i32 = arith.constant 0 : i32
    %c0_i32_0 = arith.constant 0 : i32
    %c0_i32_1 = arith.constant 0 : i32
    return %c0_i32, %c0_i32_0 : i32, i32
  }
  func.func @transform_11(%arg0: i32) -> (i32, i32) {
    %c0_i32 = arith.constant 0 : i32
    %c0_i32_0 = arith.constant 0 : i32
    %c0_i32_1 = arith.constant 0 : i32
    return %c0_i32, %c0_i32_0 : i32, i32
  }
  func.func @transform_12(%arg0: i32) -> (i32, i32) {
    %c0_i32 = arith.constant 0 : i32
    %c0_i32_0 = arith.constant 0 : i32
    %c0_i32_1 = arith.constant 0 : i32
    return %c0_i32, %c0_i32_0 : i32, i32
  }
  func.func @transform_13(%arg0: i32) -> (i32, i32, i32) {
    %c0_i32 = arith.constant 0 : i32
    %c0_i32_0 = arith.constant 0 : i32
    %c0_i32_1 = arith.constant 0 : i32
    return %arg0, %c0_i32, %c0_i32_0 : i32, i32, i32
  }
}

</mosaic_0001>

<llo_original>
// kernel: am_forward.1
$region0: #{am_forward.1}
  #allocation0 [shape = 'u32[]', space=smem, size = 0x4, offset = 0x4, fixed_abs, tag = 'smem constant byte address 0x4 - core index']
  #allocation1 [shape = 'u32[144,128]{1,0:T(1,128)}', space=vmem, size = 0x12000, scoped, tag = 'internal scratch']
  %s0 = inlined_call_operand.vmem [shape: f32[2,8,256], index: 0, kind: input, shape index: {}]
  %s1 = inlined_call_operand.vmem [shape: f32[2,8,256], index: 1, kind: input, shape index: {}]
  %s2 = inlined_call_operand.vmem [shape: f32[9,1,256], index: 2, kind: input, shape index: {}]
  %s3 = inlined_call_operand.vmem [shape: f32[16,16], index: 3, kind: input, shape index: {}]
  %s4 = inlined_call_operand.vmem [shape: f32[16,1], index: 4, kind: input, shape index: {}]
  %s5 = inlined_call_operand.vmem [shape: f32[16,16], index: 5, kind: input, shape index: {}]
  %s6 = inlined_call_operand.vmem [shape: f32[16,1], index: 6, kind: input, shape index: {}]
  %s7 = inlined_call_operand.vmem [shape: f32[16,144], index: 7, kind: input, shape index: {}]
  %s8 = inlined_call_operand.vmem [shape: f32[16,1], index: 8, kind: input, shape index: {}]
  %s9 = inlined_call_operand.vmem [shape: f32[16,16], index: 9, kind: input, shape index: {}]
  %s10 = inlined_call_operand.vmem [shape: f32[16,1], index: 10, kind: input, shape index: {}]
  %s11 = inlined_call_operand.vmem [shape: f32[16,1], index: 11, kind: input, shape index: {}]
  %s12 = inlined_call_operand.vmem [shape: f32[16,1], index: 12, kind: input, shape index: {}]
  %s13 = inlined_call_operand.vmem [shape: f32[2,16,256], index: 13, kind: output, shape index: {}]
  %s14 = sld [smem:[#allocation0]]
  $region85: #{am_forward.1} parent=0
    _
  %s16 = ssub.s32 1, %s14
  %s17 = scalar_select 0, %s16, %s14
  loop: start=0, step=1, limit=4
  $region2: #{am_forward.1} parent=0 // loop_pre_header
    _
  $region3: #{am_forward.1} parent=0 // loop_header
    %s19 = sphi 0, %s23
    %p20 = scmp.ge.s32.totalorder %s19, 4
    %s29 = sphi 0, %s31
    %s32 = sphi 0, %s29
    %s33 = sphi 0, %s32
    %s49 = sphi 0, %s33
    %s55 = sphi 0, %s57
    %s58 = sphi 0, %s55
    %s59 = sphi 0, %s58
    %s75 = sphi 0, %s59
    %s79 = sphi 0, %s79
    %s81 = sphi 0, %s79
    %s82 = sphi 0, %s81
    %s96 = sphi 0, %s82
    %s100 = sphi 0, %s100
    %s102 = sphi 0, %s100
    %s103 = sphi 0, %s102
    %s117 = sphi 0, %s103
    %s121 = sphi 0, %s121
    %s123 = sphi 0, %s121
    %s124 = sphi 0, %s123
    %s138 = sphi 0, %s124
    %s142 = sphi 0, %s142
    %s144 = sphi 0, %s142
    %s145 = sphi 0, %s144
    %s159 = sphi 0, %s145
    %s163 = sphi 0, %s163
    %s165 = sphi 0, %s163
    %s166 = sphi 0, %s165
    %s180 = sphi 0, %s166
    %s184 = sphi 0, %s184
    %s186 = sphi 0, %s184
    %s187 = sphi 0, %s186
    %s201 = sphi 0, %s187
    %s205 = sphi 0, %s205
    %s207 = sphi 0, %s205
    %s208 = sphi 0, %s207
    %s222 = sphi 0, %s208
    %s226 = sphi 0, %s226
    %s228 = sphi 0, %s226
    %s229 = sphi 0, %s228
    %s243 = sphi 0, %s229
    %s247 = sphi 0, %s247
    %s249 = sphi 0, %s247
    %s250 = sphi 0, %s249
    %s264 = sphi 0, %s250
    %s268 = sphi 0, %s268
    %s270 = sphi 0, %s268
    %s271 = sphi 0, %s270
    %s285 = sphi 0, %s271
    %s289 = sphi 0, %s289
    %s291 = sphi 0, %s289
    %s292 = sphi 0, %s291
    %s306 = sphi 0, %s292
    %s312 = sphi 0, %s314
    %s315 = sphi 0, %s312
    %s316 = sphi 0, %s315
    %s332 = sphi 0, %s316
  $region4: #{am_forward.1} parent=0 // loop_header_branch
    %22 = sbr.rel (%p20) target = $region8
  $region5: #{am_forward.1} parent=0 // loop_body
    %s24 = ssub.s32 %s19, 1
    %s25 = ssub.s32 %s19, 2
    %s26 = sadd.s32 %s19, 1
    %s27 = ssub.s32 %s19, %s26
    %p28 = scmp.eq.s32.totalorder %s27, 0
    %s30 = sadd.s32 %s29, 1
    %s31 = scalar_select %p28, %s29, %s30
    %p34 = pneg %p28
    %p35 = scmp.eq.s32.totalorder %s19, 1
    %p36 = por %p34, %p35
    %p37 = scmp.ne.s32.totalorder %s29, %s32
    %p38 = scmp.eq.s32.totalorder %s19, 0
    %p39 = por %p37, %p38
    %p40 = scmp.ne.s32.totalorder %s29, %s32
    %p41 = scmp.eq.s32.totalorder %s24, 1
    %p42 = por %p40, %p41
    %p43 = scmp.ne.s32.totalorder %s32, %s33
    %p44 = scmp.eq.s32.totalorder %s24, 0
    %p45 = por %p43, %p44
    %p46 = scmp.ne.s32.totalorder %s32, %s33
    %p47 = scmp.eq.s32.totalorder %s25, 1
    %p48 = por %p46, %p47
    %p50 = scmp.ne.s32.totalorder %s33, %s49
    %p51 = scmp.eq.s32.totalorder %s25, 0
    %p52 = por %p50, %p51
    %s53 = ssub.s32 %s19, %s26
    %p54 = scmp.eq.s32.totalorder %s53, 0
    %s56 = sadd.s32 %s55, 1
    %s57 = scalar_select %p54, %s55, %s56
    %p60 = pneg %p54
    %p61 = scmp.eq.s32.totalorder %s19, 1
    %p62 = por %p60, %p61
    %p63 = scmp.ne.s32.totalorder %s55, %s58
    %p64 = scmp.eq.s32.totalorder %s19, 0
    %p65 = por %p63, %p64
    %p66 = scmp.ne.s32.totalorder %s55, %s58
    %p67 = scmp.eq.s32.totalorder %s24, 1
    %p68 = por %p66, %p67
    %p69 = scmp.ne.s32.totalorder %s58, %s59
    %p70 = scmp.eq.s32.totalorder %s24, 0
    %p71 = por %p69, %p70
    %p72 = scmp.ne.s32.totalorder %s58, %s59
    %p73 = scmp.eq.s32.totalorder %s25, 1
    %p74 = por %p72, %p73
    %p76 = scmp.ne.s32.totalorder %s59, %s75
    %p77 = scmp.eq.s32.totalorder %s25, 0
    %p78 = por %p76, %p77
    %s80 = sadd.s32 %s79, 1
    %p83 = scmp.eq.s32.totalorder %s19, 1
    %p84 = scmp.ne.s32.totalorder %s79, %s81
    %p85 = scmp.eq.s32.totalorder %s19, 0
    %p86 = por %p84, %p85
    %p87 = scmp.ne.s32.totalorder %s79, %s81
    %p88 = scmp.eq.s32.totalorder %s24, 1
    %p89 = por %p87, %p88
    %p90 = scmp.ne.s32.totalorder %s81, %s82
    %p91 = scmp.eq.s32.totalorder %s24, 0
    %p92 = por %p90, %p91
    %p93 = scmp.ne.s32.totalorder %s81, %s82
    %p94 = scmp.eq.s32.totalorder %s25, 1
    %p95 = por %p93, %p94
    %p97 = scmp.ne.s32.totalorder %s82, %s96
    %p98 = scmp.eq.s32.totalorder %s25, 0
    %p99 = por %p97, %p98
    %s101 = sadd.s32 %s100, 1
    %p104 = scmp.eq.s32.totalorder %s19, 1
    %p105 = scmp.ne.s32.totalorder %s100, %s102
    %p106 = scmp.eq.s32.totalorder %s19, 0
    %p107 = por %p105, %p106
    %p108 = scmp.ne.s32.totalorder %s100, %s102
    %p109 = scmp.eq.s32.totalorder %s24, 1
    %p110 = por %p108, %p109
    %p111 = scmp.ne.s32.totalorder %s102, %s103
    %p112 = scmp.eq.s32.totalorder %s24, 0
    %p113 = por %p111, %p112
    %p114 = scmp.ne.s32.totalorder %s102, %s103
    %p115 = scmp.eq.s32.totalorder %s25, 1
    %p116 = por %p114, %p115
    %p118 = scmp.ne.s32.totalorder %s103, %s117
    %p119 = scmp.eq.s32.totalorder %s25, 0
    %p120 = por %p118, %p119
    %s122 = sadd.s32 %s121, 1
    %p125 = scmp.eq.s32.totalorder %s19, 1
    %p126 = scmp.ne.s32.totalorder %s121, %s123
    %p127 = scmp.eq.s32.totalorder %s19, 0
    %p128 = por %p126, %p127
    %p129 = scmp.ne.s32.totalorder %s121, %s123
    %p130 = scmp.eq.s32.totalorder %s24, 1
    %p131 = por %p129, %p130
    %p132 = scmp.ne.s32.totalorder %s123, %s124
    %p133 = scmp.eq.s32.totalorder %s24, 0
    %p134 = por %p132, %p133
    %p135 = scmp.ne.s32.totalorder %s123, %s124
    %p136 = scmp.eq.s32.totalorder %s25, 1
    %p137 = por %p135, %p136
    %p139 = scmp.ne.s32.totalorder %s124, %s138
    %p140 = scmp.eq.s32.totalorder %s25, 0
    %p141 = por %p139, %p140
    %s143 = sadd.s32 %s142, 1
    %p146 = scmp.eq.s32.totalorder %s19, 1
    %p147 = scmp.ne.s32.totalorder %s142, %s144
    %p148 = scmp.eq.s32.totalorder %s19, 0
    %p149 = por %p147, %p148
    %p150 = scmp.ne.s32.totalorder %s142, %s144
    %p151 = scmp.eq.s32.totalorder %s24, 1
    %p152 = por %p150, %p151
    %p153 = scmp.ne.s32.totalorder %s144, %s145
    %p154 = scmp.eq.s32.totalorder %s24, 0
    %p155 = por %p153, %p154
    %p156 = scmp.ne.s32.totalorder %s144, %s145
    %p157 = scmp.eq.s32.totalorder %s25, 1
    %p158 = por %p156, %p157
    %p160 = scmp.ne.s32.totalorder %s145, %s159
    %p161 = scmp.eq.s32.totalorder %s25, 0
    %p162 = por %p160, %p161
    %s164 = sadd.s32 %s163, 1
    %p167 = scmp.eq.s32.totalorder %s19, 1
    %p168 = scmp.ne.s32.totalorder %s163, %s165
    %p169 = scmp.eq.s32.totalorder %s19, 0
    %p170 = por %p168, %p169
    %p171 = scmp.ne.s32.totalorder %s163, %s165
    %p172 = scmp.eq.s32.totalorder %s24, 1
    %p173 = por %p171, %p172
    %p174 = scmp.ne.s32.totalorder %s165, %s166
    %p175 = scmp.eq.s32.totalorder %s24, 0
    %p176 = por %p174, %p175
    %p177 = scmp.ne.s32.totalorder %s165, %s166
    %p178 = scmp.eq.s32.totalorder %s25, 1
    %p179 = por %p177, %p178
    %p181 = scmp.ne.s32.totalorder %s166, %s180
    %p182 = scmp.eq.s32.totalorder %s25, 0
    %p183 = por %p181, %p182
    %s185 = sadd.s32 %s184, 1
    %p188 = scmp.eq.s32.totalorder %s19, 1
    %p189 = scmp.ne.s32.totalorder %s184, %s186
    %p190 = scmp.eq.s32.totalorder %s19, 0
    %p191 = por %p189, %p190
    %p192 = scmp.ne.s32.totalorder %s184, %s186
    %p193 = scmp.eq.s32.totalorder %s24, 1
    %p194 = por %p192, %p193
    %p195 = scmp.ne.s32.totalorder %s186, %s187
    %p196 = scmp.eq.s32.totalorder %s24, 0
    %p197 = por %p195, %p196
    %p198 = scmp.ne.s32.totalorder %s186, %s187
    %p199 = scmp.eq.s32.totalorder %s25, 1
    %p200 = por %p198, %p199
    %p202 = scmp.ne.s32.totalorder %s187, %s201
    %p203 = scmp.eq.s32.totalorder %s25, 0
    %p204 = por %p202, %p203
    %s206 = sadd.s32 %s205, 1
    %p209 = scmp.eq.s32.totalorder %s19, 1
    %p210 = scmp.ne.s32.totalorder %s205, %s207
    %p211 = scmp.eq.s32.totalorder %s19, 0
    %p212 = por %p210, %p211
    %p213 = scmp.ne.s32.totalorder %s205, %s207
    %p214 = scmp.eq.s32.totalorder %s24, 1
    %p215 = por %p213, %p214
    %p216 = scmp.ne.s32.totalorder %s207, %s208
    %p217 = scmp.eq.s32.totalorder %s24, 0
    %p218 = por %p216, %p217
    %p219 = scmp.ne.s32.totalorder %s207, %s208
    %p220 = scmp.eq.s32.totalorder %s25, 1
    %p221 = por %p219, %p220
    %p223 = scmp.ne.s32.totalorder %s208, %s222
    %p224 = scmp.eq.s32.totalorder %s25, 0
    %p225 = por %p223, %p224
    %s227 = sadd.s32 %s226, 1
    %p230 = scmp.eq.s32.totalorder %s19, 1
    %p231 = scmp.ne.s32.totalorder %s226, %s228
    %p232 = scmp.eq.s32.totalorder %s19, 0
    %p233 = por %p231, %p232
    %p234 = scmp.ne.s32.totalorder %s226, %s228
    %p235 = scmp.eq.s32.totalorder %s24, 1
    %p236 = por %p234, %p235
    %p237 = scmp.ne.s32.totalorder %s228, %s229
    %p238 = scmp.eq.s32.totalorder %s24, 0
    %p239 = por %p237, %p238
    %p240 = scmp.ne.s32.totalorder %s228, %s229
    %p241 = scmp.eq.s32.totalorder %s25, 1
    %p242 = por %p240, %p241
    %p244 = scmp.ne.s32.totalorder %s229, %s243
    %p245 = scmp.eq.s32.totalorder %s25, 0
    %p246 = por %p244, %p245
    %s248 = sadd.s32 %s247, 1
    %p251 = scmp.eq.s32.totalorder %s19, 1
    %p252 = scmp.ne.s32.totalorder %s247, %s249
    %p253 = scmp.eq.s32.totalorder %s19, 0
    %p254 = por %p252, %p253
    %p255 = scmp.ne.s32.totalorder %s247, %s249
    %p256 = scmp.eq.s32.totalorder %s24, 1
    %p257 = por %p255, %p256
    %p258 = scmp.ne.s32.totalorder %s249, %s250
    %p259 = scmp.eq.s32.totalorder %s24, 0
    %p260 = por %p258, %p259
    %p261 = scmp.ne.s32.totalorder %s249, %s250
    %p262 = scmp.eq.s32.totalorder %s25, 1
    %p263 = por %p261, %p262
    %p265 = scmp.ne.s32.totalorder %s250, %s264
    %p266 = scmp.eq.s32.totalorder %s25, 0
    %p267 = por %p265, %p266
    %s269 = sadd.s32 %s268, 1
    %p272 = scmp.eq.s32.totalorder %s19, 1
    %p273 = scmp.ne.s32.totalorder %s268, %s270
    %p274 = scmp.eq.s32.totalorder %s19, 0
    %p275 = por %p273, %p274
    %p276 = scmp.ne.s32.totalorder %s268, %s270
    %p277 = scmp.eq.s32.totalorder %s24, 1
    %p278 = por %p276, %p277
    %p279 = scmp.ne.s32.totalorder %s270, %s271
    %p280 = scmp.eq.s32.totalorder %s24, 0
    %p281 = por %p279, %p280
    %p282 = scmp.ne.s32.totalorder %s270, %s271
    %p283 = scmp.eq.s32.totalorder %s25, 1
    %p284 = por %p282, %p283
    %p286 = scmp.ne.s32.totalorder %s271, %s285
    %p287 = scmp.eq.s32.totalorder %s25, 0
    %p288 = por %p286, %p287
    %s290 = sadd.s32 %s289, 1
    %p293 = scmp.eq.s32.totalorder %s19, 1
    %p294 = scmp.ne.s32.totalorder %s289, %s291
    %p295 = scmp.eq.s32.totalorder %s19, 0
    %p296 = por %p294, %p295
    %p297 = scmp.ne.s32.totalorder %s289, %s291
    %p298 = scmp.eq.s32.totalorder %s24, 1
    %p299 = por %p297, %p298
    %p300 = scmp.ne.s32.totalorder %s291, %s292
    %p301 = scmp.eq.s32.totalorder %s24, 0
    %p302 = por %p300, %p301
    %p303 = scmp.ne.s32.totalorder %s291, %s292
    %p304 = scmp.eq.s32.totalorder %s25, 1
    %p305 = por %p303, %p304
    %p307 = scmp.ne.s32.totalorder %s292, %s306
    %p308 = scmp.eq.s32.totalorder %s25, 0
    %p309 = por %p307, %p308
    %s310 = ssub.s32 %s19, %s26
    %p311 = scmp.eq.s32.totalorder %s310, 0
    %s313 = sadd.s32 %s312, 1
    %s314 = scalar_select %p311, %s312, %s313
    %p317 = pneg %p311
    %p318 = scmp.eq.s32.totalorder %s19, 1
    %p319 = por %p317, %p318
    %p320 = scmp.ne.s32.totalorder %s312, %s315
    %p321 = scmp.eq.s32.totalorder %s19, 0
    %p322 = por %p320, %p321
    %p323 = scmp.ne.s32.totalorder %s312, %s315
    %p324 = scmp.eq.s32.totalorder %s24, 1
    %p325 = por %p323, %p324
    %p326 = scmp.ne.s32.totalorder %s315, %s316
    %p327 = scmp.eq.s32.totalorder %s24, 0
    %p328 = por %p326, %p327
    %p329 = scmp.ne.s32.totalorder %s315, %s316
    %p330 = scmp.eq.s32.totalorder %s25, 1
    %p331 = por %p329, %p330
    %p333 = scmp.ne.s32.totalorder %s316, %s332
    %p334 = scmp.eq.s32.totalorder %s25, 0
    %p335 = por %p333, %p334
    %p336 = scmp.le.s32.totalorder 1, %s19
    %p337 = scmp.lt.s32.totalorder %s19, 3
    %p338 = pnand %p336, %p337
    %p339 = pneg %p338
    // Predicated region
    $region9: #{am_forward.1} parent=5 // pred_check
      _
    $region10: #{am_forward.1} parent=5 // pred_check_branch
      %341 = sbr.rel (%p338) target = $region12
    $region11: #{am_forward.1} parent=5 // pred_region
      %s342 = ssub.s32 %s19, 1
      // Predicated region
      $region13: #{am_forward.1} parent=11 // pred_check
        %p343 = pneg %p92
      $region14: #{am_forward.1} parent=11 // pred_check_branch
        %345 = sbr.rel (%p343) target = $region16
      $region15: #{am_forward.1} parent=11 // pred_region
        _
      $region16: #{am_forward.1} parent=11 // pred_fallthru
        _
      // Predicated region
      $region17: #{am_forward.1} parent=11 // pred_check
        %p346 = pneg %p113
      $region18: #{am_forward.1} parent=11 // pred_check_branch
        %348 = sbr.rel (%p346) target = $region20
      $region19: #{am_forward.1} parent=11 // pred_region
        _
      $region20: #{am_forward.1} parent=11 // pred_fallthru
        _
      // Predicated region
      $region21: #{am_forward.1} parent=11 // pred_check
        %p349 = pneg %p134
      $region22: #{am_forward.1} parent=11 // pred_check_branch
        %351 = sbr.rel (%p349) target = $region24
      $region23: #{am_forward.1} parent=11 // pred_region
        _
      $region24: #{am_forward.1} parent=11 // pred_fallthru
        _
      // Predicated region
      $region25: #{am_forward.1} parent=11 // pred_check
        %p352 = pneg %p155
      $region26: #{am_forward.1} parent=11 // pred_check_branch
        %354 = sbr.rel (%p352) target = $region28
      $region27: #{am_forward.1} parent=11 // pred_region
        _
      $region28: #{am_forward.1} parent=11 // pred_fallthru
        _
      // Predicated region
      $region29: #{am_forward.1} parent=11 // pred_check
        %p355 = pneg %p176
      $region30: #{am_forward.1} parent=11 // pred_check_branch
        %357 = sbr.rel (%p355) target = $region32
      $region31: #{am_forward.1} parent=11 // pred_region
        _
      $region32: #{am_forward.1} parent=11 // pred_fallthru
        _
      // Predicated region
      $region33: #{am_forward.1} parent=11 // pred_check
        %p358 = pneg %p197
      $region34: #{am_forward.1} parent=11 // pred_check_branch
        %360 = sbr.rel (%p358) target = $region36
      $region35: #{am_forward.1} parent=11 // pred_region
        _
      $region36: #{am_forward.1} parent=11 // pred_fallthru
        _
      // Predicated region
      $region37: #{am_forward.1} parent=11 // pred_check
        %p361 = pneg %p218
      $region38: #{am_forward.1} parent=11 // pred_check_branch
        %363 = sbr.rel (%p361) target = $region40
      $region39: #{am_forward.1} parent=11 // pred_region
        _
      $region40: #{am_forward.1} parent=11 // pred_fallthru
        _
      // Predicated region
      $region41: #{am_forward.1} parent=11 // pred_check
        %p364 = pneg %p239
      $region42: #{am_forward.1} parent=11 // pred_check_branch
        %366 = sbr.rel (%p364) target = $region44
      $region43: #{am_forward.1} parent=11 // pred_region
        _
      $region44: #{am_forward.1} parent=11 // pred_fallthru
        _
      // Predicated region
      $region45: #{am_forward.1} parent=11 // pred_check
        %p367 = pneg %p260
      $region46: #{am_forward.1} parent=11 // pred_check_branch
        %369 = sbr.rel (%p367) target = $region48
      $region47: #{am_forward.1} parent=11 // pred_region
        _
      $region48: #{am_forward.1} parent=11 // pred_fallthru
        _
      // Predicated region
      $region49: #{am_forward.1} parent=11 // pred_check
        %p370 = pneg %p281
      $region50: #{am_forward.1} parent=11 // pred_check_branch
        %372 = sbr.rel (%p370) target = $region52
      $region51: #{am_forward.1} parent=11 // pred_region
        _
      $region52: #{am_forward.1} parent=11 // pred_fallthru
        _
      // Predicated region
      $region53: #{am_forward.1} parent=11 // pred_check
        %p373 = pneg %p302
      $region54: #{am_forward.1} parent=11 // pred_check_branch
        %375 = sbr.rel (%p373) target = $region56
      $region55: #{am_forward.1} parent=11 // pred_region
        _
      $region56: #{am_forward.1} parent=11 // pred_fallthru
        _
    $region12: #{am_forward.1} parent=5 // pred_fallthru
      _
    %p376 = scmp.lt.s32.totalorder %s19, 2
    // Predicated region
    $region57: #{am_forward.1} parent=5 // pred_check
      %p377 = pneg %p376
    $region58: #{am_forward.1} parent=5 // pred_check_branch
      %379 = sbr.rel (%p377) target = $region60
    $region59: #{am_forward.1} parent=5 // pred_region
      // Predicated region
      $region61: #{am_forward.1} parent=59 // pred_check
        %p380 = pneg %p39
      $region62: #{am_forward.1} parent=59 // pred_check_branch
        %382 = sbr.rel (%p380) target = $region64
      $region63: #{am_forward.1} parent=59 // pred_region
        %p383 = scmp.lt.s32.totalorder %s19, 1
        %s384 = scalar_select %p383, %s19, 1
        %s385 = smul.addr %s384, 2
        %s386 = smul.addr %s385, 8
        %s387 = scalar_lea.vmem %s0, %s386
      $region64: #{am_forward.1} parent=59 // pred_fallthru
        _
      // Predicated region
      $region65: #{am_forward.1} parent=59 // pred_check
        %p388 = pneg %p65
      $region66: #{am_forward.1} parent=59 // pred_check_branch
        %390 = sbr.rel (%p388) target = $region68
      $region67: #{am_forward.1} parent=59 // pred_region
        %p391 = scmp.lt.s32.totalorder %s19, 1
        %s392 = scalar_select %p391, %s19, 1
        %s393 = smul.addr %s392, 2
        %s394 = smul.addr %s393, 8
        %s395 = scalar_lea.vmem %s1, %s394
      $region68: #{am_forward.1} parent=59 // pred_fallthru
        _
    $region60: #{am_forward.1} parent=5 // pred_fallthru
      _
    %p396 = scmp.le.s32.totalorder 1, %s19
    %p397 = scmp.lt.s32.totalorder %s19, 3
    %p398 = pnand %p396, %p397
    %p399 = pneg %p398
    // Predicated region
    $region69: #{am_forward.1} parent=5 // pred_check
      _
    $region70: #{am_forward.1} parent=5 // pred_check_branch
      %401 = sbr.rel (%p398) target = $region72
    $region71: #{am_forward.1} parent=5 // pred_region
      %s402 = ssub.s32 %s19, 1
      %p403 = scmp.lt.s32.totalorder %s24, 1
      %s404 = scalar_select %p403, %s24, 1
      %s405 = smul.addr %s404, 2
      %s406 = smul.addr %s405, 8
      %s407 = scalar_lea.vmem %s0, %s406
      %p408 = pneg %p45
      %p409 = pneg %p42
      %p410 = scmp.lt.s32.totalorder %s24, 1
      %s411 = scalar_select %p410, %s24, 1
      %s412 = smul.addr %s411, 2
      %s413 = smul.addr %s412, 8
      %s414 = scalar_lea.vmem %s1, %s413
      %p415 = pneg %p71
      %p416 = pneg %p68
      %p417 = pneg %p92
      %p418 = pneg %p89
      %p419 = pneg %p113
      %p420 = pneg %p110
      %p421 = pneg %p134
      %p422 = pneg %p131
      %p423 = pneg %p155
      %p424 = pneg %p152
      %p425 = pneg %p176
      %p426 = pneg %p173
      %p427 = pneg %p197
      %p428 = pneg %p194
      %p429 = pneg %p218
      %p430 = pneg %p215
      %p431 = pneg %p239
      %p432 = pneg %p236
      %p433 = pneg %p260
      %p434 = pneg %p257
      %p435 = pneg %p281
      %p436 = pneg %p278
      %p437 = pneg %p302
      %p438 = pneg %p299
      %p439 = pneg %p328
      %p440 = pneg %p325
      %p441 = scmp.lt.s32.totalorder %s24, 1
      %s442 = scalar_select %p441, %s24, 1
      %s443 = smul.addr %s442, 4
      %s444 = smul.addr %s443, 8
      %s445 = scalar_lea.vmem %s13, %s444
      %p446 = scmp.lt.s32.totalorder %s24, 1
      %s447 = scalar_select %p446, %s24, 1
      %s448 = smul.addr %s447, 2
      %s449 = smul.addr %s448, 8
      %s450 = scalar_lea.vmem %s0, %s449
      %p451 = scmp.lt.s32.totalorder %s24, 1
      %s452 = scalar_select %p451, %s24, 1
      %s453 = smul.addr %s452, 2
      %s454 = smul.addr %s453, 8
      %s455 = scalar_lea.vmem %s1, %s454
      %p456 = scmp.lt.s32.totalorder %s24, 1
      %s457 = scalar_select %p456, %s24, 1
      %s458 = smul.addr %s457, 4
      %s459 = smul.addr %s458, 8
      %s460 = scalar_lea.vmem %s13, %s459
      %v461 = vld [vmem:[%s3] sm:$0xff]
      %v462 = vld [vmem:[%s3 + $0x8] sm:$0xff]
      %v463 = vld [vmem:[%s4] sm:$0xff]
      %v464 = vld [vmem:[%s4 + $0x8] sm:$0xff]
      %v465 = vld [vmem:[%s5] sm:$0xff]
      %v466 = vld [vmem:[%s5 + $0x8] sm:$0xff]
      %v467 = vld [vmem:[%s6] sm:$0xff]
      %v468 = vld [vmem:[%s6 + $0x8] sm:$0xff]
      %v469 = vld [vmem:[%s7] sm:$0xff]
      %v470 = vld [vmem:[%s7 + $0x8] sm:$0xff]
      %v471 = vld [vmem:[%s7 + $0x10] sm:$0xff]
      %v472 = vld [vmem:[%s7 + $0x18] sm:$0xff]
      %v473 = vld [vmem:[%s8] sm:$0xff]
      %v474 = vld [vmem:[%s8 + $0x8] sm:$0xff]
      %v475 = vld [vmem:[%s9] sm:$0xff]
      %v476 = vld [vmem:[%s9 + $0x8] sm:$0xff]
      %v477 = vld [vmem:[%s10] sm:$0xff]
      %v478 = vld [vmem:[%s10 + $0x8] sm:$0xff]
      %v479 = vld [vmem:[%s11] sm:$0xff]
      %v480 = vld [vmem:[%s11 + $0x8] sm:$0xff]
      %v481 = vld [vmem:[%s12] sm:$0xff]
      %v482 = vld [vmem:[%s12 + $0x8] sm:$0xff]
      %v483 = vld [vmem:[%s450] sm:$0xff]
      %v484 = vld [vmem:[%s450 + $0x8] sm:$0xff]
      %v485 = vld [vmem:[%s455] sm:$0xff]
      %v486 = vld [vmem:[%s455 + $0x8] sm:$0xff]
      %488 = vset.pattern.permute.xlu0 0
      %489 = vperm.xlu0 %488, %v463
      %v490 = vpop.permute.xlu0 %489
      %493 = vset.pattern.permute.xlu0 0
      %494 = vperm.xlu0 %493, %v464
      %v495 = vpop.permute.xlu0 %494
      %vm497 = vcmask 130048
      %v499 = vsel %vm497, %v461, 0
      %v502 = vsel %vm497, %v462, 0
      %504 = vmatprep.subr.mxu0 0.0
      %505 = vmatpush1.msra.mxu0 0.0
      %506 = vmatprep.subr.mxu0 0.0
      %507 = vmatpush1.msra.mxu0 0.0
      %508 = vmatprep.subr.mxu0 0.0
      %509 = vmatpush1.msra.mxu0 0.0
      %510 = vmatprep.subr.mxu0 0.0
      %511 = vmatpush1.msra.mxu0 0.0
      %512 = vmatprep.subr.mxu0 0.0
      %513 = vmatpush1.msra.mxu0 0.0
      %514 = vmatprep.subr.mxu0 0.0
      %515 = vmatpush1.msra.mxu0 0.0
      %516 = vmatprep.subr.mxu0 0.0
      %517 = vmatpush1.msra.mxu0 0.0
      %518 = vmatprep.subr.mxu0 0.0
      %519 = vmatpush1.msra.mxu0 0.0
      %520 = vmatprep.subr.mxu0 0.0
      %521 = vmatpush1.msra.mxu0 0.0
      %522 = vmatprep.subr.mxu0 0.0
      %523 = vmatpush1.msra.mxu0 0.0
      %524 = vmatprep.subr.mxu0 0.0
      %525 = vmatpush1.msra.mxu0 0.0
      %526 = vmatprep.subr.mxu0 0.0
      %527 = vmatpush1.msra.mxu0 0.0
      %528 = vmatprep.subr.mxu0 0.0
      %529 = vmatpush1.msra.mxu0 0.0
      %530 = vmatprep.subr.mxu0 0.0
      %531 = vmatpush1.msra.mxu0 0.0
      %v532 = vand.u32 %v486, 4294901760
      %533 = vmatprep.subr.mxu0 %v532
      %v534 = vand.u32 %v485, 4294901760
      %535 = vmatpush1.msra.mxu0 %v534
      %v536 = vand.u32 %v484, 4294901760
      %537 = vmatprep.subr.mxu0 %v536
      %v538 = vand.u32 %v483, 4294901760
      %539 = vmatpush1.msra.mxu0 %v538
      %540 = vmatprep.subr.mxu0 0.0
      %541 = vmatpush2.msra.mxu0 0.0
      %542 = vmatprep.subr.mxu0 0.0
      %543 = vmatpush2.msra.mxu0 0.0
      %544 = vmatprep.subr.mxu0 0.0
      %545 = vmatpush2.msra.mxu0 0.0
      %546 = vmatprep.subr.mxu0 0.0
      %547 = vmatpush2.msra.mxu0 0.0
      %548 = vmatprep.subr.mxu0 0.0
      %549 = vmatpush2.msra.mxu0 0.0
      %550 = vmatprep.subr.mxu0 0.0
      %551 = vmatpush2.msra.mxu0 0.0
      %552 = vmatprep.subr.mxu0 0.0
      %553 = vmatpush2.msra.mxu0 0.0
      %554 = vmatprep.subr.mxu0 0.0
      %555 = vmatpush2.msra.mxu0 0.0
      %556 = vmatprep.subr.mxu0 0.0
      %557 = vmatpush2.msra.mxu0 0.0
      %558 = vmatprep.subr.mxu0 0.0
      %559 = vmatpush2.msra.mxu0 0.0
      %560 = vmatprep.subr.mxu0 0.0
      %561 = vmatpush2.msra.mxu0 0.0
      %562 = vmatprep.subr.mxu0 0.0
      %563 = vmatpush2.msra.mxu0 0.0
      %564 = vmatprep.subr.mxu0 0.0
      %565 = vmatpush2.msra.mxu0 0.0
      %566 = vmatprep.subr.mxu0 0.0
      %567 = vmatpush2.msra.mxu0 0.0
      %568 = vmatprep.subr.mxu0 0.0
      %569 = vmatpush2.msra.mxu0 0.0
      %570 = vmatprep.subr.mxu0 0.0
      %571 = vmatpush2.msra.mxu0 0.0
      %572 = vmatprep.mubr.f32.mxu0 0.0
      %v573 = vand.u32 %v499, 4294901760
      %v574 = vsub.f32 %v499, %v573
      %v575 = vand.u32 %v574, 4294901760
      %v576 = vsub.f32 %v574, %v575
      %v577 = vand.u32 %v576, 4294901760
      %578 = vmatmul.mubr.f32.gmra.mxu0 %v577
      %v579 = vpop.f32.mrf.mxu0
      %v580 = vadd.f32 %v490, %v579
      %v581 = vpop.f32.mrf.mxu0
      %v582 = vadd.f32 %v490, %v581
      %583 = vmatprep.mubr.f32.mxu0 0.0
      %v584 = vand.u32 %v502, 4294901760
      %v585 = vsub.f32 %v502, %v584
      %v586 = vand.u32 %v585, 4294901760
      %v587 = vsub.f32 %v585, %v586
      %v588 = vand.u32 %v587, 4294901760
      %589 = vmatmul.mubr.f32.gmra.mxu0 %v588
      %v590 = vpop.f32.mrf.mxu0
      %v591 = vadd.f32 %v495, %v590
      %v592 = vpop.f32.mrf.mxu0
      %v593 = vadd.f32 %v495, %v592
      %594 = vdwg.mxu0
      %595 = vmatprep.subr.mxu0 0.0
      %596 = vmatpush1.msra.mxu0 0.0
      %597 = vmatprep.subr.mxu0 0.0
      %598 = vmatpush1.msra.mxu0 0.0
      %599 = vmatprep.subr.mxu0 0.0
      %600 = vmatpush1.msra.mxu0 0.0
      %601 = vmatprep.subr.mxu0 0.0
      %602 = vmatpush1.msra.mxu0 0.0
      %603 = vmatprep.subr.mxu0 0.0
      %604 = vmatpush1.msra.mxu0 0.0
      %605 = vmatprep.subr.mxu0 0.0
      %606 = vmatpush1.msra.mxu0 0.0
      %607 = vmatprep.subr.mxu0 0.0
      %608 = vmatpush1.msra.mxu0 0.0
      %609 = vmatprep.subr.mxu0 0.0
      %610 = vmatpush1.msra.mxu0 0.0
      %611 = vmatprep.subr.mxu0 0.0
      %612 = vmatpush1.msra.mxu0 0.0
      %613 = vmatprep.subr.mxu0 0.0
      %614 = vmatpush1.msra.mxu0 0.0
      %615 = vmatprep.subr.mxu0 0.0
      %616 = vmatpush1.msra.mxu0 0.0
      %617 = vmatprep.subr.mxu0 0.0
      %618 = vmatpush1.msra.mxu0 0.0
      %619 = vmatprep.subr.mxu0 0.0
      %620 = vmatpush1.msra.mxu0 0.0
      %621 = vmatprep.subr.mxu0 0.0
      %622 = vmatpush1.msra.mxu0 0.0
      %v623 = vand.u32 %v486, 4294901760
      %v624 = vsub.f32 %v486, %v623
      %v625 = vand.u32 %v624, 4294901760
      %v626 = vsub.f32 %v624, %v625
      %v627 = vand.u32 %v626, 4294901760
      %628 = vmatprep.subr.mxu0 %v627
      %v629 = vand.u32 %v485, 4294901760
      %v630 = vsub.f32 %v485, %v629
      %v631 = vand.u32 %v630, 4294901760
      %v632 = vsub.f32 %v630, %v631
      %v633 = vand.u32 %v632, 4294901760
      %634 = vmatpush1.msra.mxu0 %v633
      %v635 = vand.u32 %v484, 4294901760
      %v636 = vsub.f32 %v484, %v635
      %v637 = vand.u32 %v636, 4294901760
      %v638 = vsub.f32 %v636, %v637
      %v639 = vand.u32 %v638, 4294901760
      %640 = vmatprep.subr.mxu0 %v639
      %v641 = vand.u32 %v483, 4294901760
      %v642 = vsub.f32 %v483, %v641
      %v643 = vand.u32 %v642, 4294901760
      %v644 = vsub.f32 %v642, %v643
      %v645 = vand.u32 %v644, 4294901760
      %646 = vmatpush1.msra.mxu0 %v645
      %647 = vmatprep.subr.mxu0 0.0
      %648 = vmatpush2.msra.mxu0 0.0
      %649 = vmatprep.subr.mxu0 0.0
      %650 = vmatpush2.msra.mxu0 0.0
      %651 = vmatprep.subr.mxu0 0.0
      %652 = vmatpush2.msra.mxu0 0.0
      %653 = vmatprep.subr.mxu0 0.0
      %654 = vmatpush2.msra.mxu0 0.0
      %655 = vmatprep.subr.mxu0 0.0
      %656 = vmatpush2.msra.mxu0 0.0
      %657 = vmatprep.subr.mxu0 0.0
      %658 = vmatpush2.msra.mxu0 0.0
      %659 = vmatprep.subr.mxu0 0.0
      %660 = vmatpush2.msra.mxu0 0.0
      %661 = vmatprep.subr.mxu0 0.0
      %662 = vmatpush2.msra.mxu0 0.0
      %663 = vmatprep.subr.mxu0 0.0
      %664 = vmatpush2.msra.mxu0 0.0
      %665 = vmatprep.subr.mxu0 0.0
      %666 = vmatpush2.msra.mxu0 0.0
      %667 = vmatprep.subr.mxu0 0.0
      %668 = vmatpush2.msra.mxu0 0.0
      %669 = vmatprep.subr.mxu0 0.0
      %670 = vmatpush2.msra.mxu0 0.0
      %671 = vmatprep.subr.mxu0 0.0
      %672 = vmatpush2.msra.mxu0 0.0
      %673 = vmatprep.subr.mxu0 0.0
      %674 = vmatpush2.msra.mxu0 0.0
      %675 = vmatprep.subr.mxu0 0.0
      %676 = vmatpush2.msra.mxu0 0.0
      %677 = vmatprep.subr.mxu0 0.0
      %678 = vmatpush2.msra.mxu0 0.0
      %679 = vmatprep.mubr.f32.mxu0 0.0
      %v680 = vand.u32 %v499, 4294901760
      %681 = vmatmul.mubr.f32.gmra.mxu0 %v680
      %v682 = vpop.f32.mrf.mxu0
      %v683 = vadd.f32 %v580, %v682
      %v684 = vpop.f32.mrf.mxu0
      %v685 = vadd.f32 %v582, %v684
      %686 = vmatprep.mubr.f32.mxu0 0.0
      %v687 = vand.u32 %v502, 4294901760
      %688 = vmatmul.mubr.f32.gmra.mxu0 %v687
      %v689 = vpop.f32.mrf.mxu0
      %v690 = vadd.f32 %v591, %v689
      %v691 = vpop.f32.mrf.mxu0
      %v692 = vadd.f32 %v593, %v691
      %693 = vdwg.mxu0
      %694 = vmatprep.subr.mxu0 0.0
      %695 = vmatpush1.msra.mxu0 0.0
      %696 = vmatprep.subr.mxu0 0.0
      %697 = vmatpush1.msra.mxu0 0.0
      %698 = vmatprep.subr.mxu0 0.0
      %699 = vmatpush1.msra.mxu0 0.0
      %700 = vmatprep.subr.mxu0 0.0
      %701 = vmatpush1.msra.mxu0 0.0
      %702 = vmatprep.subr.mxu0 0.0
      %703 = vmatpush1.msra.mxu0 0.0
      %704 = vmatprep.subr.mxu0 0.0
      %705 = vmatpush1.msra.mxu0 0.0
      %706 = vmatprep.subr.mxu0 0.0
      %707 = vmatpush1.msra.mxu0 0.0
      %708 = vmatprep.subr.mxu0 0.0
      %709 = vmatpush1.msra.mxu0 0.0
      %710 = vmatprep.subr.mxu0 0.0
      %711 = vmatpush1.msra.mxu0 0.0
      %712 = vmatprep.subr.mxu0 0.0
      %713 = vmatpush1.msra.mxu0 0.0
      %714 = vmatprep.subr.mxu0 0.0
      %715 = vmatpush1.msra.mxu0 0.0
      %716 = vmatprep.subr.mxu0 0.0
      %717 = vmatpush1.msra.mxu0 0.0
      %718 = vmatprep.subr.mxu0 0.0
      %719 = vmatpush1.msra.mxu0 0.0
      %720 = vmatprep.subr.mxu0 0.0
      %721 = vmatpush1.msra.mxu0 0.0
      %v722 = vand.u32 %v486, 4294901760
      %v723 = vsub.f32 %v486, %v722
      %724 = vmatprep.subr.mxu0 %v723
      %v725 = vand.u32 %v485, 4294901760
      %v726 = vsub.f32 %v485, %v725
      %727 = vmatpush1.msra.mxu0 %v726
      %v728 = vand.u32 %v484, 4294901760
      %v729 = vsub.f32 %v484, %v728
      %730 = vmatprep.subr.mxu0 %v729
      %v731 = vand.u32 %v483, 4294901760
      %v732 = vsub.f32 %v483, %v731
      %733 = vmatpush1.msra.mxu0 %v732
      %734 = vmatprep.subr.mxu0 0.0
      %735 = vmatpush2.msra.mxu0 0.0
      %736 = vmatprep.subr.mxu0 0.0
      %737 = vmatpush2.msra.mxu0 0.0
      %738 = vmatprep.subr.mxu0 0.0
      %739 = vmatpush2.msra.mxu0 0.0
      %740 = vmatprep.subr.mxu0 0.0
      %741 = vmatpush2.msra.mxu0 0.0
      %742 = vmatprep.subr.mxu0 0.0
      %743 = vmatpush2.msra.mxu0 0.0
      %744 = vmatprep.subr.mxu0 0.0
      %745 = vmatpush2.msra.mxu0 0.0
      %746 = vmatprep.subr.mxu0 0.0
      %747 = vmatpush2.msra.mxu0 0.0
      %748 = vmatprep.subr.mxu0 0.0
      %749 = vmatpush2.msra.mxu0 0.0
      %750 = vmatprep.subr.mxu0 0.0
      %751 = vmatpush2.msra.mxu0 0.0
      %752 = vmatprep.subr.mxu0 0.0
      %753 = vmatpush2.msra.mxu0 0.0
      %754 = vmatprep.subr.mxu0 0.0
      %755 = vmatpush2.msra.mxu0 0.0
      %756 = vmatprep.subr.mxu0 0.0
      %757 = vmatpush2.msra.mxu0 0.0
      %758 = vmatprep.subr.mxu0 0.0
      %759 = vmatpush2.msra.mxu0 0.0
      %760 = vmatprep.subr.mxu0 0.0
      %761 = vmatpush2.msra.mxu0 0.0
      %762 = vmatprep.subr.mxu0 0.0
      %763 = vmatpush2.msra.mxu0 0.0
      %764 = vmatprep.subr.mxu0 0.0
      %765 = vmatpush2.msra.mxu0 0.0
      %766 = vmatprep.mubr.f32.mxu0 0.0
      %v767 = vand.u32 %v499, 4294901760
      %v768 = vsub.f32 %v499, %v767
      %769 = vmatmul.mubr.f32.gmra.mxu0 %v768
      %v770 = vpop.f32.mrf.mxu0
      %v771 = vadd.f32 %v683, %v770
      %v772 = vpop.f32.mrf.mxu0
      %v773 = vadd.f32 %v685, %v772
      %774 = vmatprep.mubr.f32.mxu0 0.0
      %v775 = vand.u32 %v502, 4294901760
      %v776 = vsub.f32 %v502, %v775
      %777 = vmatmul.mubr.f32.gmra.mxu0 %v776
      %v778 = vpop.f32.mrf.mxu0
      %v779 = vadd.f32 %v690, %v778
      %v780 = vpop.f32.mrf.mxu0
      %v781 = vadd.f32 %v692, %v780
      %782 = vdwg.mxu0
      %783 = vmatprep.subr.mxu0 0.0
      %784 = vmatpush1.msra.mxu0 0.0
      %785 = vmatprep.subr.mxu0 0.0
      %786 = vmatpush1.msra.mxu0 0.0
      %787 = vmatprep.subr.mxu0 0.0
      %788 = vmatpush1.msra.mxu0 0.0
      %789 = vmatprep.subr.mxu0 0.0
      %790 = vmatpush1.msra.mxu0 0.0
      %791 = vmatprep.subr.mxu0 0.0
      %792 = vmatpush1.msra.mxu0 0.0
      %793 = vmatprep.subr.mxu0 0.0
      %794 = vmatpush1.msra.mxu0 0.0
      %795 = vmatprep.subr.mxu0 0.0
      %796 = vmatpush1.msra.mxu0 0.0
      %797 = vmatprep.subr.mxu0 0.0
      %798 = vmatpush1.msra.mxu0 0.0
      %799 = vmatprep.subr.mxu0 0.0
      %800 = vmatpush1.msra.mxu0 0.0
      %801 = vmatprep.subr.mxu0 0.0
      %802 = vmatpush1.msra.mxu0 0.0
      %803 = vmatprep.subr.mxu0 0.0
      %804 = vmatpush1.msra.mxu0 0.0
      %805 = vmatprep.subr.mxu0 0.0
      %806 = vmatpush1.msra.mxu0 0.0
      %807 = vmatprep.subr.mxu0 0.0
      %808 = vmatpush1.msra.mxu0 0.0
      %809 = vmatprep.subr.mxu0 0.0
      %810 = vmatpush1.msra.mxu0 0.0
      %v811 = vand.u32 %v486, 4294901760
      %812 = vmatprep.subr.mxu0 %v811
      %v813 = vand.u32 %v485, 4294901760
      %814 = vmatpush1.msra.mxu0 %v813
      %v815 = vand.u32 %v484, 4294901760
      %816 = vmatprep.subr.mxu0 %v815
      %v817 = vand.u32 %v483, 4294901760
      %818 = vmatpush1.msra.mxu0 %v817
      %819 = vmatprep.subr.mxu0 0.0
      %820 = vmatpush2.msra.mxu0 0.0
      %821 = vmatprep.subr.mxu0 0.0
      %822 = vmatpush2.msra.mxu0 0.0
      %823 = vmatprep.subr.mxu0 0.0
      %824 = vmatpush2.msra.mxu0 0.0
      %825 = vmatprep.subr.mxu0 0.0
      %826 = vmatpush2.msra.mxu0 0.0
      %827 = vmatprep.subr.mxu0 0.0
      %828 = vmatpush2.msra.mxu0 0.0
      %829 = vmatprep.subr.mxu0 0.0
      %830 = vmatpush2.msra.mxu0 0.0
      %831 = vmatprep.subr.mxu0 0.0
      %832 = vmatpush2.msra.mxu0 0.0
      %833 = vmatprep.subr.mxu0 0.0
      %834 = vmatpush2.msra.mxu0 0.0
      %835 = vmatprep.subr.mxu0 0.0
      %836 = vmatpush2.msra.mxu0 0.0
      %837 = vmatprep.subr.mxu0 0.0
      %838 = vmatpush2.msra.mxu0 0.0
      %839 = vmatprep.subr.mxu0 0.0
      %840 = vmatpush2.msra.mxu0 0.0
      %841 = vmatprep.subr.mxu0 0.0
      %842 = vmatpush2.msra.mxu0 0.0
      %843 = vmatprep.subr.mxu0 0.0
      %844 = vmatpush2.msra.mxu0 0.0
      %845 = vmatprep.subr.mxu0 0.0
      %846 = vmatpush2.msra.mxu0 0.0
      %847 = vmatprep.subr.mxu0 0.0
      %848 = vmatpush2.msra.mxu0 0.0
      %849 = vmatprep.subr.mxu0 0.0
      %850 = vmatpush2.msra.mxu0 0.0
      %851 = vmatprep.mubr.f32.mxu0 0.0
      %v852 = vand.u32 %v499, 4294901760
      %v853 = vsub.f32 %v499, %v852
      %v854 = vand.u32 %v853, 4294901760
      %855 = vmatmul.mubr.f32.gmra.mxu0 %v854
      %v856 = vpop.f32.mrf.mxu0
      %v857 = vadd.f32 %v771, %v856
      %v858 = vpop.f32.mrf.mxu0
      %v859 = vadd.f32 %v773, %v858
      %860 = vmatprep.mubr.f32.mxu0 0.0
      %v861 = vand.u32 %v502, 4294901760
      %v862 = vsub.f32 %v502, %v861
      %v863 = vand.u32 %v862, 4294901760
      %864 = vmatmul.mubr.f32.gmra.mxu0 %v863
      %v865 = vpop.f32.mrf.mxu0
      %v866 = vadd.f32 %v779, %v865
      %v867 = vpop.f32.mrf.mxu0
      %v868 = vadd.f32 %v781, %v867
      %869 = vdwg.mxu0
      %870 = vmatprep.subr.mxu0 0.0
      %871 = vmatpush1.msra.mxu0 0.0
      %872 = vmatprep.subr.mxu0 0.0
      %873 = vmatpush1.msra.mxu0 0.0
      %874 = vmatprep.subr.mxu0 0.0
      %875 = vmatpush1.msra.mxu0 0.0
      %876 = vmatprep.subr.mxu0 0.0
      %877 = vmatpush1.msra.mxu0 0.0
      %878 = vmatprep.subr.mxu0 0.0
      %879 = vmatpush1.msra.mxu0 0.0
      %880 = vmatprep.subr.mxu0 0.0
      %881 = vmatpush1.msra.mxu0 0.0
      %882 = vmatprep.subr.mxu0 0.0
      %883 = vmatpush1.msra.mxu0 0.0
      %884 = vmatprep.subr.mxu0 0.0
      %885 = vmatpush1.msra.mxu0 0.0
      %886 = vmatprep.subr.mxu0 0.0
      %887 = vmatpush1.msra.mxu0 0.0
      %888 = vmatprep.subr.mxu0 0.0
      %889 = vmatpush1.msra.mxu0 0.0
      %890 = vmatprep.subr.mxu0 0.0
      %891 = vmatpush1.msra.mxu0 0.0
      %892 = vmatprep.subr.mxu0 0.0
      %893 = vmatpush1.msra.mxu0 0.0
      %894 = vmatprep.subr.mxu0 0.0
      %895 = vmatpush1.msra.mxu0 0.0
      %896 = vmatprep.subr.mxu0 0.0
      %897 = vmatpush1.msra.mxu0 0.0
      %v898 = vand.u32 %v486, 4294901760
      %v899 = vsub.f32 %v486, %v898
      %v900 = vand.u32 %v899, 4294901760
      %901 = vmatprep.subr.mxu0 %v900
      %v902 = vand.u32 %v485, 4294901760
      %v903 = vsub.f32 %v485, %v902
      %v904 = vand.u32 %v903, 4294901760
      %905 = vmatpush1.msra.mxu0 %v904
      %v906 = vand.u32 %v484, 4294901760
      %v907 = vsub.f32 %v484, %v906
      %v908 = vand.u32 %v907, 4294901760
      %909 = vmatprep.subr.mxu0 %v908
      %v910 = vand.u32 %v483, 4294901760
      %v911 = vsub.f32 %v483, %v910
      %v912 = vand.u32 %v911, 4294901760
      %913 = vmatpush1.msra.mxu0 %v912
      %914 = vmatprep.subr.mxu0 0.0
      %915 = vmatpush2.msra.mxu0 0.0
      %916 = vmatprep.subr.mxu0 0.0
      %917 = vmatpush2.msra.mxu0 0.0
      %918 = vmatprep.subr.mxu0 0.0
      %919 = vmatpush2.msra.mxu0 0.0
      %920 = vmatprep.subr.mxu0 0.0
      %921 = vmatpush2.msra.mxu0 0.0
      %922 = vmatprep.subr.mxu0 0.0
      %923 = vmatpush2.msra.mxu0 0.0
      %924 = vmatprep.subr.mxu0 0.0
      %925 = vmatpush2.msra.mxu0 0.0
      %926 = vmatprep.subr.mxu0 0.0
      %927 = vmatpush2.msra.mxu0 0.0
      %928 = vmatprep.subr.mxu0 0.0
      %929 = vmatpush2.msra.mxu0 0.0
      %930 = vmatprep.subr.mxu0 0.0
      %931 = vmatpush2.msra.mxu0 0.0
      %932 = vmatprep.subr.mxu0 0.0
      %933 = vmatpush2.msra.mxu0 0.0
      %934 = vmatprep.subr.mxu0 0.0
      %935 = vmatpush2.msra.mxu0 0.0
      %936 = vmatprep.subr.mxu0 0.0
      %937 = vmatpush2.msra.mxu0 0.0
      %938 = vmatprep.subr.mxu0 0.0
      %939 = vmatpush2.msra.mxu0 0.0
      %940 = vmatprep.subr.mxu0 0.0
      %941 = vmatpush2.msra.mxu0 0.0
      %942 = vmatprep.subr.mxu0 0.0
      %943 = vmatpush2.msra.mxu0 0.0
      %944 = vmatprep.subr.mxu0 0.0
      %945 = vmatpush2.msra.mxu0 0.0
      %946 = vmatprep.mubr.f32.mxu0 0.0
      %v947 = vand.u32 %v499, 4294901760
      %948 = vmatmul.mubr.f32.gmra.mxu0 %v947
      %v949 = vpop.f32.mrf.mxu0
      %v950 = vadd.f32 %v857, %v949
      %v951 = vpop.f32.mrf.mxu0
      %v952 = vadd.f32 %v859, %v951
      %953 = vmatprep.mubr.f32.mxu0 0.0
      %v954 = vand.u32 %v502, 4294901760
      %955 = vmatmul.mubr.f32.gmra.mxu0 %v954
      %v956 = vpop.f32.mrf.mxu0
      %v957 = vadd.f32 %v866, %v956
      %v958 = vpop.f32.mrf.mxu0
      %v959 = vadd.f32 %v868, %v958
      %960 = vdwg.mxu0
      %961 = vmatprep.subr.mxu0 0.0
      %962 = vmatpush1.msra.mxu0 0.0
      %963 = vmatprep.subr.mxu0 0.0
      %964 = vmatpush1.msra.mxu0 0.0
      %965 = vmatprep.subr.mxu0 0.0
      %966 = vmatpush1.msra.mxu0 0.0
      %967 = vmatprep.subr.mxu0 0.0
      %968 = vmatpush1.msra.mxu0 0.0
      %969 = vmatprep.subr.mxu0 0.0
      %970 = vmatpush1.msra.mxu0 0.0
      %971 = vmatprep.subr.mxu0 0.0
      %972 = vmatpush1.msra.mxu0 0.0
      %973 = vmatprep.subr.mxu0 0.0
      %974 = vmatpush1.msra.mxu0 0.0
      %975 = vmatprep.subr.mxu0 0.0
      %976 = vmatpush1.msra.mxu0 0.0
      %977 = vmatprep.subr.mxu0 0.0
      %978 = vmatpush1.msra.mxu0 0.0
      %979 = vmatprep.subr.mxu0 0.0
      %980 = vmatpush1.msra.mxu0 0.0
      %981 = vmatprep.subr.mxu0 0.0
      %982 = vmatpush1.msra.mxu0 0.0
      %983 = vmatprep.subr.mxu0 0.0
      %984 = vmatpush1.msra.mxu0 0.0
      %985 = vmatprep.subr.mxu0 0.0
      %986 = vmatpush1.msra.mxu0 0.0
      %987 = vmatprep.subr.mxu0 0.0
      %988 = vmatpush1.msra.mxu0 0.0
      %v989 = vand.u32 %v486, 4294901760
      %990 = vmatprep.subr.mxu0 %v989
      %v991 = vand.u32 %v485, 4294901760
      %992 = vmatpush1.msra.mxu0 %v991
      %v993 = vand.u32 %v484, 4294901760
      %994 = vmatprep.subr.mxu0 %v993
      %v995 = vand.u32 %v483, 4294901760
      %996 = vmatpush1.msra.mxu0 %v995
      %997 = vmatprep.subr.mxu0 0.0
      %998 = vmatpush2.msra.mxu0 0.0
      %999 = vmatprep.subr.mxu0 0.0
      %1000 = vmatpush2.msra.mxu0 0.0
      %1001 = vmatprep.subr.mxu0 0.0
      %1002 = vmatpush2.msra.mxu0 0.0
      %1003 = vmatprep.subr.mxu0 0.0
      %1004 = vmatpush2.msra.mxu0 0.0
      %1005 = vmatprep.subr.mxu0 0.0
      %1006 = vmatpush2.msra.mxu0 0.0
      %1007 = vmatprep.subr.mxu0 0.0
      %1008 = vmatpush2.msra.mxu0 0.0
      %1009 = vmatprep.subr.mxu0 0.0
      %1010 = vmatpush2.msra.mxu0 0.0
      %1011 = vmatprep.subr.mxu0 0.0
      %1012 = vmatpush2.msra.mxu0 0.0
      %1013 = vmatprep.subr.mxu0 0.0
      %1014 = vmatpush2.msra.mxu0 0.0
      %1015 = vmatprep.subr.mxu0 0.0
      %1016 = vmatpush2.msra.mxu0 0.0
      %1017 = vmatprep.subr.mxu0 0.0
      %1018 = vmatpush2.msra.mxu0 0.0
      %1019 = vmatprep.subr.mxu0 0.0
      %1020 = vmatpush2.msra.mxu0 0.0
      %1021 = vmatprep.subr.mxu0 0.0
      %1022 = vmatpush2.msra.mxu0 0.0
      %1023 = vmatprep.subr.mxu0 0.0
      %1024 = vmatpush2.msra.mxu0 0.0
      %1025 = vmatprep.subr.mxu0 0.0
      %1026 = vmatpush2.msra.mxu0 0.0
      %1027 = vmatprep.subr.mxu0 0.0
      %1028 = vmatpush2.msra.mxu0 0.0
      %1029 = vmatprep.mubr.f32.mxu0 0.0
      %v1030 = vand.u32 %v499, 4294901760
      %1031 = vmatmul.mubr.f32.gmra.mxu0 %v1030
      %v1032 = vpop.f32.mrf.mxu0
      %v1033 = vadd.f32 %v950, %v1032
      %v1034 = vpop.f32.mrf.mxu0
      %v1035 = vadd.f32 %v952, %v1034
      %1036 = vmatprep.mubr.f32.mxu0 0.0
      %v1037 = vand.u32 %v502, 4294901760
      %1038 = vmatmul.mubr.f32.gmra.mxu0 %v1037
      %v1039 = vpop.f32.mrf.mxu0
      %v1040 = vadd.f32 %v957, %v1039
      %v1041 = vpop.f32.mrf.mxu0
      %v1042 = vadd.f32 %v959, %v1041
      %1043 = vdwg.mxu0
      %v1044 = vmul.f32 %v1033, 0.5
      %v1045 = vmul.f32 %v1035, 0.5
      %v1046 = vmul.f32 %v1040, 0.5
      %v1047 = vmul.f32 %v1042, 0.5
      %v1048 = vmul.f32 %v1033, 0.70710677
      %v1049 = vmul.f32 %v1035, 0.70710677
      %v1050 = vmul.f32 %v1040, 0.70710677
      %v1051 = vmul.f32 %v1042, 0.70710677
      %vm1052 = vcmp.ge.f32.partialorder %v1048, 0.0
      %vm1053 = vcmp.ge.f32.partialorder %v1049, 0.0
      %vm1054 = vcmp.ge.f32.partialorder %v1050, 0.0
      %vm1055 = vcmp.ge.f32.partialorder %v1051, 0.0
      %v1056 = vsel %vm1052, 1.0, -1.0
      %v1057 = vsel %vm1053, 1.0, -1.0
      %v1058 = vsel %vm1054, 1.0, -1.0
      %v1059 = vsel %vm1055, 1.0, -1.0
      %v1060 = vand.u32 2147483647, %v1048
      %v1061 = vand.u32 2147483647, %v1049
      %v1062 = vand.u32 2147483647, %v1050
      %v1063 = vand.u32 2147483647, %v1051
      %v1064 = vmul.f32 %v1060, 0.3275911
      %v1065 = vmul.f32 %v1061, 0.3275911
      %v1066 = vmul.f32 %v1062, 0.3275911
      %v1067 = vmul.f32 %v1063, 0.3275911
      %v1068 = vadd.f32 %v1064, 1.0
      %v1069 = vadd.f32 %v1065, 1.0
      %v1070 = vadd.f32 %v1066, 1.0
      %v1071 = vadd.f32 %v1067, 1.0
      %v1072 = vrcp.pop %v1068
      %v1073 = vmul.f32 1.0, %v1072
      %v1074 = vrcp.pop %v1069
      %v1075 = vmul.f32 1.0, %v1074
      %v1076 = vrcp.pop %v1070
      %v1077 = vmul.f32 1.0, %v1076
      %v1078 = vrcp.pop %v1071
      %v1079 = vmul.f32 1.0, %v1078
      %v1080 = vmul.f32 %v1073, 1.0614054
      %v1081 = vmul.f32 %v1075, 1.0614054
      %v1082 = vmul.f32 %v1077, 1.0614054
      %v1083 = vmul.f32 %v1079, 1.0614054
      %v1084 = vadd.f32 %v1080, -1.4531521
      %v1085 = vadd.f32 %v1081, -1.4531521
      %v1086 = vadd.f32 %v1082, -1.4531521
      %v1087 = vadd.f32 %v1083, -1.4531521
      %v1088 = vmul.f32 %v1084, %v1073
      %v1089 = vmul.f32 %v1085, %v1075
      %v1090 = vmul.f32 %v1086, %v1077
      %v1091 = vmul.f32 %v1087, %v1079
      %v1092 = vadd.f32 %v1088, 1.4214138
      %v1093 = vadd.f32 %v1089, 1.4214138
      %v1094 = vadd.f32 %v1090, 1.4214138
      %v1095 = vadd.f32 %v1091, 1.4214138
      %v1096 = vmul.f32 %v1092, %v1073
      %v1097 = vmul.f32 %v1093, %v1075
      %v1098 = vmul.f32 %v1094, %v1077
      %v1099 = vmul.f32 %v1095, %v1079
      %v1100 = vadd.f32 %v1096, -0.28449672
      %v1101 = vadd.f32 %v1097, -0.28449672
      %v1102 = vadd.f32 %v1098, -0.28449672
      %v1103 = vadd.f32 %v1099, -0.28449672
      %v1104 = vmul.f32 %v1100, %v1073
      %v1105 = vmul.f32 %v1101, %v1075
      %v1106 = vmul.f32 %v1102, %v1077
      %v1107 = vmul.f32 %v1103, %v1079
      %v1108 = vadd.f32 %v1104, 0.2548296
      %v1109 = vadd.f32 %v1105, 0.2548296
      %v1110 = vadd.f32 %v1106, 0.2548296
      %v1111 = vadd.f32 %v1107, 0.2548296
      %v1112 = vmul.f32 %v1108, %v1073
      %v1113 = vmul.f32 %v1109, %v1075
      %v1114 = vmul.f32 %v1110, %v1077
      %v1115 = vmul.f32 %v1111, %v1079
      %v1116 = vsub.f32 0.0, %v1060
      %v1117 = vsub.f32 0.0, %v1061
      %v1118 = vsub.f32 0.0, %v1062
      %v1119 = vsub.f32 0.0, %v1063
      %v1120 = vmul.f32 %v1116, %v1060
      %v1121 = vmul.f32 %v1117, %v1061
      %v1122 = vmul.f32 %v1118, %v1062
      %v1123 = vmul.f32 %v1119, %v1063
      %v1124 = vmul.f32 %v1120, 1.442695
      %v1125 = vpow.pop %v1124
      %v1126 = vmul.f32 %v1121, 1.442695
      %v1127 = vpow.pop %v1126
      %v1128 = vmul.f32 %v1122, 1.442695
      %v1129 = vpow.pop %v1128
      %v1130 = vmul.f32 %v1123, 1.442695
      %v1131 = vpow.pop %v1130
      %v1132 = vmul.f32 %v1112, %v1125
      %v1133 = vmul.f32 %v1113, %v1127
      %v1134 = vmul.f32 %v1114, %v1129
      %v1135 = vmul.f32 %v1115, %v1131
      %v1136 = vsub.f32 1.0, %v1132
      %v1137 = vsub.f32 1.0, %v1133
      %v1138 = vsub.f32 1.0, %v1134
      %v1139 = vsub.f32 1.0, %v1135
      %v1140 = vmul.f32 %v1056, %v1136
      %v1141 = vmul.f32 %v1057, %v1137
      %v1142 = vmul.f32 %v1058, %v1138
      %v1143 = vmul.f32 %v1059, %v1139
      %v1144 = vadd.f32 %v1140, 1.0
      %v1145 = vadd.f32 %v1141, 1.0
      %v1146 = vadd.f32 %v1142, 1.0
      %v1147 = vadd.f32 %v1143, 1.0
      %v1148 = vmul.f32 %v1044, %v1144
      %v1149 = vmul.f32 %v1045, %v1145
      %v1150 = vmul.f32 %v1046, %v1146
      %v1151 = vmul.f32 %v1047, %v1147
      %1153 = vset.pattern.permute.xlu0 0
      %1154 = vperm.xlu0 %1153, %v467
      %v1155 = vpop.permute.xlu0 %1154
      %1158 = vset.pattern.permute.xlu0 0
      %1159 = vperm.xlu0 %1158, %v468
      %v1160 = vpop.permute.xlu0 %1159
      %v1163 = vsel %vm497, %v465, 0
      %v1166 = vsel %vm497, %v466, 0
      %1168 = vmatprep.subr.mxu0 0.0
      %1169 = vmatpush1.msra.mxu0 0.0
      %1170 = vmatprep.subr.mxu0 0.0
      %1171 = vmatpush1.msra.mxu0 0.0
      %1172 = vmatprep.subr.mxu0 0.0
      %1173 = vmatpush1.msra.mxu0 0.0
      %1174 = vmatprep.subr.mxu0 0.0
      %1175 = vmatpush1.msra.mxu0 0.0
      %1176 = vmatprep.subr.mxu0 0.0
      %1177 = vmatpush1.msra.mxu0 0.0
      %1178 = vmatprep.subr.mxu0 0.0
      %1179 = vmatpush1.msra.mxu0 0.0
      %1180 = vmatprep.subr.mxu0 0.0
      %1181 = vmatpush1.msra.mxu0 0.0
      %1182 = vmatprep.subr.mxu0 0.0
      %1183 = vmatpush1.msra.mxu0 0.0
      %1184 = vmatprep.subr.mxu0 0.0
      %1185 = vmatpush1.msra.mxu0 0.0
      %1186 = vmatprep.subr.mxu0 0.0
      %1187 = vmatpush1.msra.mxu0 0.0
      %1188 = vmatprep.subr.mxu0 0.0
      %1189 = vmatpush1.msra.mxu0 0.0
      %1190 = vmatprep.subr.mxu0 0.0
      %1191 = vmatpush1.msra.mxu0 0.0
      %1192 = vmatprep.subr.mxu0 0.0
      %1193 = vmatpush1.msra.mxu0 0.0
      %1194 = vmatprep.subr.mxu0 0.0
      %1195 = vmatpush1.msra.mxu0 0.0
      %v1196 = vand.u32 %v1151, 4294901760
      %1197 = vmatprep.subr.mxu0 %v1196
      %v1198 = vand.u32 %v1150, 4294901760
      %1199 = vmatpush1.msra.mxu0 %v1198
      %v1200 = vand.u32 %v1149, 4294901760
      %1201 = vmatprep.subr.mxu0 %v1200
      %v1202 = vand.u32 %v1148, 4294901760
      %1203 = vmatpush1.msra.mxu0 %v1202
      %1204 = vmatprep.subr.mxu0 0.0
      %1205 = vmatpush2.msra.mxu0 0.0
      %1206 = vmatprep.subr.mxu0 0.0
      %1207 = vmatpush2.msra.mxu0 0.0
      %1208 = vmatprep.subr.mxu0 0.0
      %1209 = vmatpush2.msra.mxu0 0.0
      %1210 = vmatprep.subr.mxu0 0.0
      %1211 = vmatpush2.msra.mxu0 0.0
      %1212 = vmatprep.subr.mxu0 0.0
      %1213 = vmatpush2.msra.mxu0 0.0
      %1214 = vmatprep.subr.mxu0 0.0
      %1215 = vmatpush2.msra.mxu0 0.0
      %1216 = vmatprep.subr.mxu0 0.0
      %1217 = vmatpush2.msra.mxu0 0.0
      %1218 = vmatprep.subr.mxu0 0.0
      %1219 = vmatpush2.msra.mxu0 0.0
      %1220 = vmatprep.subr.mxu0 0.0
      %1221 = vmatpush2.msra.mxu0 0.0
      %1222 = vmatprep.subr.mxu0 0.0
      %1223 = vmatpush2.msra.mxu0 0.0
      %1224 = vmatprep.subr.mxu0 0.0
      %1225 = vmatpush2.msra.mxu0 0.0
      %1226 = vmatprep.subr.mxu0 0.0
      %1227 = vmatpush2.msra.mxu0 0.0
      %1228 = vmatprep.subr.mxu0 0.0
      %1229 = vmatpush2.msra.mxu0 0.0
      %1230 = vmatprep.subr.mxu0 0.0
      %1231 = vmatpush2.msra.mxu0 0.0
      %1232 = vmatprep.subr.mxu0 0.0
      %1233 = vmatpush2.msra.mxu0 0.0
      %1234 = vmatprep.subr.mxu0 0.0
      %1235 = vmatpush2.msra.mxu0 0.0
      %1236 = vmatprep.mubr.f32.mxu0 0.0
      %v1237 = vand.u32 %v1163, 4294901760
      %v1238 = vsub.f32 %v1163, %v1237
      %v1239 = vand.u32 %v1238, 4294901760
      %v1240 = vsub.f32 %v1238, %v1239
      %v1241 = vand.u32 %v1240, 4294901760
      %1242 = vmatmul.mubr.f32.gmra.mxu0 %v1241
      %v1243 = vpop.f32.mrf.mxu0
      %v1244 = vadd.f32 %v1155, %v1243
      %v1245 = vpop.f32.mrf.mxu0
      %v1246 = vadd.f32 %v1155, %v1245
      %1247 = vmatprep.mubr.f32.mxu0 0.0
      %v1248 = vand.u32 %v1166, 4294901760
      %v1249 = vsub.f32 %v1166, %v1248
      %v1250 = vand.u32 %v1249, 4294901760
      %v1251 = vsub.f32 %v1249, %v1250
      %v1252 = vand.u32 %v1251, 4294901760
      %1253 = vmatmul.mubr.f32.gmra.mxu0 %v1252
      %v1254 = vpop.f32.mrf.mxu0
      %v1255 = vadd.f32 %v1160, %v1254
      %v1256 = vpop.f32.mrf.mxu0
      %v1257 = vadd.f32 %v1160, %v1256
      %1258 = vdwg.mxu0
      %1259 = vmatprep.subr.mxu0 0.0
      %1260 = vmatpush1.msra.mxu0 0.0
      %1261 = vmatprep.subr.mxu0 0.0
      %1262 = vmatpush1.msra.mxu0 0.0
      %1263 = vmatprep.subr.mxu0 0.0
      %1264 = vmatpush1.msra.mxu0 0.0
      %1265 = vmatprep.subr.mxu0 0.0
      %1266 = vmatpush1.msra.mxu0 0.0
      %1267 = vmatprep.subr.mxu0 0.0
      %1268 = vmatpush1.msra.mxu0 0.0
      %1269 = vmatprep.subr.mxu0 0.0
      %1270 = vmatpush1.msra.mxu0 0.0
      %1271 = vmatprep.subr.mxu0 0.0
      %1272 = vmatpush1.msra.mxu0 0.0
      %1273 = vmatprep.subr.mxu0 0.0
      %1274 = vmatpush1.msra.mxu0 0.0
      %1275 = vmatprep.subr.mxu0 0.0
      %1276 = vmatpush1.msra.mxu0 0.0
      %1277 = vmatprep.subr.mxu0 0.0
      %1278 = vmatpush1.msra.mxu0 0.0
      %1279 = vmatprep.subr.mxu0 0.0
      %1280 = vmatpush1.msra.mxu0 0.0
      %1281 = vmatprep.subr.mxu0 0.0
      %1282 = vmatpush1.msra.mxu0 0.0
      %1283 = vmatprep.subr.mxu0 0.0
      %1284 = vmatpush1.msra.mxu0 0.0
      %1285 = vmatprep.subr.mxu0 0.0
      %1286 = vmatpush1.msra.mxu0 0.0
      %v1287 = vand.u32 %v1151, 4294901760
      %v1288 = vsub.f32 %v1151, %v1287
      %v1289 = vand.u32 %v1288, 4294901760
      %v1290 = vsub.f32 %v1288, %v1289
      %v1291 = vand.u32 %v1290, 4294901760
      %1292 = vmatprep.subr.mxu0 %v1291
      %v1293 = vand.u32 %v1150, 4294901760
      %v1294 = vsub.f32 %v1150, %v1293
      %v1295 = vand.u32 %v1294, 4294901760
      %v1296 = vsub.f32 %v1294, %v1295
      %v1297 = vand.u32 %v1296, 4294901760
      %1298 = vmatpush1.msra.mxu0 %v1297
      %v1299 = vand.u32 %v1149, 4294901760
      %v1300 = vsub.f32 %v1149, %v1299
      %v1301 = vand.u32 %v1300, 4294901760
      %v1302 = vsub.f32 %v1300, %v1301
      %v1303 = vand.u32 %v1302, 4294901760
      %1304 = vmatprep.subr.mxu0 %v1303
      %v1305 = vand.u32 %v1148, 4294901760
      %v1306 = vsub.f32 %v1148, %v1305
      %v1307 = vand.u32 %v1306, 4294901760
      %v1308 = vsub.f32 %v1306, %v1307
      %v1309 = vand.u32 %v1308, 4294901760
      %1310 = vmatpush1.msra.mxu0 %v1309
      %1311 = vmatprep.subr.mxu0 0.0
      %1312 = vmatpush2.msra.mxu0 0.0
      %1313 = vmatprep.subr.mxu0 0.0
      %1314 = vmatpush2.msra.mxu0 0.0
      %1315 = vmatprep.subr.mxu0 0.0
      %1316 = vmatpush2.msra.mxu0 0.0
      %1317 = vmatprep.subr.mxu0 0.0
      %1318 = vmatpush2.msra.mxu0 0.0
      %1319 = vmatprep.subr.mxu0 0.0
      %1320 = vmatpush2.msra.mxu0 0.0
      %1321 = vmatprep.subr.mxu0 0.0
      %1322 = vmatpush2.msra.mxu0 0.0
      %1323 = vmatprep.subr.mxu0 0.0
      %1324 = vmatpush2.msra.mxu0 0.0
      %1325 = vmatprep.subr.mxu0 0.0
      %1326 = vmatpush2.msra.mxu0 0.0
      %1327 = vmatprep.subr.mxu0 0.0
      %1328 = vmatpush2.msra.mxu0 0.0
      %1329 = vmatprep.subr.mxu0 0.0
      %1330 = vmatpush2.msra.mxu0 0.0
      %1331 = vmatprep.subr.mxu0 0.0
      %1332 = vmatpush2.msra.mxu0 0.0
      %1333 = vmatprep.subr.mxu0 0.0
      %1334 = vmatpush2.msra.mxu0 0.0
      %1335 = vmatprep.subr.mxu0 0.0
      %1336 = vmatpush2.msra.mxu0 0.0
      %1337 = vmatprep.subr.mxu0 0.0
      %1338 = vmatpush2.msra.mxu0 0.0
      %1339 = vmatprep.subr.mxu0 0.0
      %1340 = vmatpush2.msra.mxu0 0.0
      %1341 = vmatprep.subr.mxu0 0.0
      %1342 = vmatpush2.msra.mxu0 0.0
      %1343 = vmatprep.mubr.f32.mxu0 0.0
      %v1344 = vand.u32 %v1163, 4294901760
      %1345 = vmatmul.mubr.f32.gmra.mxu0 %v1344
      %v1346 = vpop.f32.mrf.mxu0
      %v1347 = vadd.f32 %v1244, %v1346
      %v1348 = vpop.f32.mrf.mxu0
      %v1349 = vadd.f32 %v1246, %v1348
      %1350 = vmatprep.mubr.f32.mxu0 0.0
      %v1351 = vand.u32 %v1166, 4294901760
      %1352 = vmatmul.mubr.f32.gmra.mxu0 %v1351
      %v1353 = vpop.f32.mrf.mxu0
      %v1354 = vadd.f32 %v1255, %v1353
      %v1355 = vpop.f32.mrf.mxu0
      %v1356 = vadd.f32 %v1257, %v1355
      %1357 = vdwg.mxu0
      %1358 = vmatprep.subr.mxu0 0.0
      %1359 = vmatpush1.msra.mxu0 0.0
      %1360 = vmatprep.subr.mxu0 0.0
      %1361 = vmatpush1.msra.mxu0 0.0
      %1362 = vmatprep.subr.mxu0 0.0
      %1363 = vmatpush1.msra.mxu0 0.0
      %1364 = vmatprep.subr.mxu0 0.0
      %1365 = vmatpush1.msra.mxu0 0.0
      %1366 = vmatprep.subr.mxu0 0.0
      %1367 = vmatpush1.msra.mxu0 0.0
      %1368 = vmatprep.subr.mxu0 0.0
      %1369 = vmatpush1.msra.mxu0 0.0
      %1370 = vmatprep.subr.mxu0 0.0
      %1371 = vmatpush1.msra.mxu0 0.0
      %1372 = vmatprep.subr.mxu0 0.0
      %1373 = vmatpush1.msra.mxu0 0.0
      %1374 = vmatprep.subr.mxu0 0.0
      %1375 = vmatpush1.msra.mxu0 0.0
      %1376 = vmatprep.subr.mxu0 0.0
      %1377 = vmatpush1.msra.mxu0 0.0
      %1378 = vmatprep.subr.mxu0 0.0
      %1379 = vmatpush1.msra.mxu0 0.0
      %1380 = vmatprep.subr.mxu0 0.0
      %1381 = vmatpush1.msra.mxu0 0.0
      %1382 = vmatprep.subr.mxu0 0.0
      %1383 = vmatpush1.msra.mxu0 0.0
      %1384 = vmatprep.subr.mxu0 0.0
      %1385 = vmatpush1.msra.mxu0 0.0
      %v1386 = vand.u32 %v1151, 4294901760
      %v1387 = vsub.f32 %v1151, %v1386
      %1388 = vmatprep.subr.mxu0 %v1387
      %v1389 = vand.u32 %v1150, 4294901760
      %v1390 = vsub.f32 %v1150, %v1389
      %1391 = vmatpush1.msra.mxu0 %v1390
      %v1392 = vand.u32 %v1149, 4294901760
      %v1393 = vsub.f32 %v1149, %v1392
      %1394 = vmatprep.subr.mxu0 %v1393
      %v1395 = vand.u32 %v1148, 4294901760
      %v1396 = vsub.f32 %v1148, %v1395
      %1397 = vmatpush1.msra.mxu0 %v1396
      %1398 = vmatprep.subr.mxu0 0.0
      %1399 = vmatpush2.msra.mxu0 0.0
      %1400 = vmatprep.subr.mxu0 0.0
      %1401 = vmatpush2.msra.mxu0 0.0
      %1402 = vmatprep.subr.mxu0 0.0
      %1403 = vmatpush2.msra.mxu0 0.0
      %1404 = vmatprep.subr.mxu0 0.0
      %1405 = vmatpush2.msra.mxu0 0.0
      %1406 = vmatprep.subr.mxu0 0.0
      %1407 = vmatpush2.msra.mxu0 0.0
      %1408 = vmatprep.subr.mxu0 0.0
      %1409 = vmatpush2.msra.mxu0 0.0
      %1410 = vmatprep.subr.mxu0 0.0
      %1411 = vmatpush2.msra.mxu0 0.0
      %1412 = vmatprep.subr.mxu0 0.0
      %1413 = vmatpush2.msra.mxu0 0.0
      %1414 = vmatprep.subr.mxu0 0.0
      %1415 = vmatpush2.msra.mxu0 0.0
      %1416 = vmatprep.subr.mxu0 0.0
      %1417 = vmatpush2.msra.mxu0 0.0
      %1418 = vmatprep.subr.mxu0 0.0
      %1419 = vmatpush2.msra.mxu0 0.0
      %1420 = vmatprep.subr.mxu0 0.0
      %1421 = vmatpush2.msra.mxu0 0.0
      %1422 = vmatprep.subr.mxu0 0.0
      %1423 = vmatpush2.msra.mxu0 0.0
      %1424 = vmatprep.subr.mxu0 0.0
      %1425 = vmatpush2.msra.mxu0 0.0
      %1426 = vmatprep.subr.mxu0 0.0
      %1427 = vmatpush2.msra.mxu0 0.0
      %1428 = vmatprep.subr.mxu0 0.0
      %1429 = vmatpush2.msra.mxu0 0.0
      %1430 = vmatprep.mubr.f32.mxu0 0.0
      %v1431 = vand.u32 %v1163, 4294901760
      %v1432 = vsub.f32 %v1163, %v1431
      %1433 = vmatmul.mubr.f32.gmra.mxu0 %v1432
      %v1434 = vpop.f32.mrf.mxu0
      %v1435 = vadd.f32 %v1347, %v1434
      %v1436 = vpop.f32.mrf.mxu0
      %v1437 = vadd.f32 %v1349, %v1436
      %1438 = vmatprep.mubr.f32.mxu0 0.0
      %v1439 = vand.u32 %v1166, 4294901760
      %v1440 = vsub.f32 %v1166, %v1439
      %1441 = vmatmul.mubr.f32.gmra.mxu0 %v1440
      %v1442 = vpop.f32.mrf.mxu0
      %v1443 = vadd.f32 %v1354, %v1442
      %v1444 = vpop.f32.mrf.mxu0
      %v1445 = vadd.f32 %v1356, %v1444
      %1446 = vdwg.mxu0
      %1447 = vmatprep.subr.mxu0 0.0
      %1448 = vmatpush1.msra.mxu0 0.0
      %1449 = vmatprep.subr.mxu0 0.0
      %1450 = vmatpush1.msra.mxu0 0.0
      %1451 = vmatprep.subr.mxu0 0.0
      %1452 = vmatpush1.msra.mxu0 0.0
      %1453 = vmatprep.subr.mxu0 0.0
      %1454 = vmatpush1.msra.mxu0 0.0
      %1455 = vmatprep.subr.mxu0 0.0
      %1456 = vmatpush1.msra.mxu0 0.0
      %1457 = vmatprep.subr.mxu0 0.0
      %1458 = vmatpush1.msra.mxu0 0.0
      %1459 = vmatprep.subr.mxu0 0.0
      %1460 = vmatpush1.msra.mxu0 0.0
      %1461 = vmatprep.subr.mxu0 0.0
      %1462 = vmatpush1.msra.mxu0 0.0
      %1463 = vmatprep.subr.mxu0 0.0
      %1464 = vmatpush1.msra.mxu0 0.0
      %1465 = vmatprep.subr.mxu0 0.0
      %1466 = vmatpush1.msra.mxu0 0.0
      %1467 = vmatprep.subr.mxu0 0.0
      %1468 = vmatpush1.msra.mxu0 0.0
      %1469 = vmatprep.subr.mxu0 0.0
      %1470 = vmatpush1.msra.mxu0 0.0
      %1471 = vmatprep.subr.mxu0 0.0
      %1472 = vmatpush1.msra.mxu0 0.0
      %1473 = vmatprep.subr.mxu0 0.0
      %1474 = vmatpush1.msra.mxu0 0.0
      %v1475 = vand.u32 %v1151, 4294901760
      %1476 = vmatprep.subr.mxu0 %v1475
      %v1477 = vand.u32 %v1150, 4294901760
      %1478 = vmatpush1.msra.mxu0 %v1477
      %v1479 = vand.u32 %v1149, 4294901760
      %1480 = vmatprep.subr.mxu0 %v1479
      %v1481 = vand.u32 %v1148, 4294901760
      %1482 = vmatpush1.msra.mxu0 %v1481
      %1483 = vmatprep.subr.mxu0 0.0
      %1484 = vmatpush2.msra.mxu0 0.0
      %1485 = vmatprep.subr.mxu0 0.0
      %1486 = vmatpush2.msra.mxu0 0.0
      %1487 = vmatprep.subr.mxu0 0.0
      %1488 = vmatpush2.msra.mxu0 0.0
      %1489 = vmatprep.subr.mxu0 0.0
      %1490 = vmatpush2.msra.mxu0 0.0
      %1491 = vmatprep.subr.mxu0 0.0
      %1492 = vmatpush2.msra.mxu0 0.0
      %1493 = vmatprep.subr.mxu0 0.0
      %1494 = vmatpush2.msra.mxu0 0.0
      %1495 = vmatprep.subr.mxu0 0.0
      %1496 = vmatpush2.msra.mxu0 0.0
      %1497 = vmatprep.subr.mxu0 0.0
      %1498 = vmatpush2.msra.mxu0 0.0
      %1499 = vmatprep.subr.mxu0 0.0
      %1500 = vmatpush2.msra.mxu0 0.0
      %1501 = vmatprep.subr.mxu0 0.0
      %1502 = vmatpush2.msra.mxu0 0.0
      %1503 = vmatprep.subr.mxu0 0.0
      %1504 = vmatpush2.msra.mxu0 0.0
      %1505 = vmatprep.subr.mxu0 0.0
      %1506 = vmatpush2.msra.mxu0 0.0
      %1507 = vmatprep.subr.mxu0 0.0
      %1508 = vmatpush2.msra.mxu0 0.0
      %1509 = vmatprep.subr.mxu0 0.0
      %1510 = vmatpush2.msra.mxu0 0.0
      %1511 = vmatprep.subr.mxu0 0.0
      %1512 = vmatpush2.msra.mxu0 0.0
      %1513 = vmatprep.subr.mxu0 0.0
      %1514 = vmatpush2.msra.mxu0 0.0
      %1515 = vmatprep.mubr.f32.mxu0 0.0
      %v1516 = vand.u32 %v1163, 4294901760
      %v1517 = vsub.f32 %v1163, %v1516
      %v1518 = vand.u32 %v1517, 4294901760
      %1519 = vmatmul.mubr.f32.gmra.mxu0 %v1518
      %v1520 = vpop.f32.mrf.mxu0
      %v1521 = vadd.f32 %v1435, %v1520
      %v1522 = vpop.f32.mrf.mxu0
      %v1523 = vadd.f32 %v1437, %v1522
      %1524 = vmatprep.mubr.f32.mxu0 0.0
      %v1525 = vand.u32 %v1166, 4294901760
      %v1526 = vsub.f32 %v1166, %v1525
      %v1527 = vand.u32 %v1526, 4294901760
      %1528 = vmatmul.mubr.f32.gmra.mxu0 %v1527
      %v1529 = vpop.f32.mrf.mxu0
      %v1530 = vadd.f32 %v1443, %v1529
      %v1531 = vpop.f32.mrf.mxu0
      %v1532 = vadd.f32 %v1445, %v1531
      %1533 = vdwg.mxu0
      %1534 = vmatprep.subr.mxu0 0.0
      %1535 = vmatpush1.msra.mxu0 0.0
      %1536 = vmatprep.subr.mxu0 0.0
      %1537 = vmatpush1.msra.mxu0 0.0
      %1538 = vmatprep.subr.mxu0 0.0
      %1539 = vmatpush1.msra.mxu0 0.0
      %1540 = vmatprep.subr.mxu0 0.0
      %1541 = vmatpush1.msra.mxu0 0.0
      %1542 = vmatprep.subr.mxu0 0.0
      %1543 = vmatpush1.msra.mxu0 0.0
      %1544 = vmatprep.subr.mxu0 0.0
      %1545 = vmatpush1.msra.mxu0 0.0
      %1546 = vmatprep.subr.mxu0 0.0
      %1547 = vmatpush1.msra.mxu0 0.0
      %1548 = vmatprep.subr.mxu0 0.0
      %1549 = vmatpush1.msra.mxu0 0.0
      %1550 = vmatprep.subr.mxu0 0.0
      %1551 = vmatpush1.msra.mxu0 0.0
      %1552 = vmatprep.subr.mxu0 0.0
      %1553 = vmatpush1.msra.mxu0 0.0
      %1554 = vmatprep.subr.mxu0 0.0
      %1555 = vmatpush1.msra.mxu0 0.0
      %1556 = vmatprep.subr.mxu0 0.0
      %1557 = vmatpush1.msra.mxu0 0.0
      %1558 = vmatprep.subr.mxu0 0.0
      %1559 = vmatpush1.msra.mxu0 0.0
      %1560 = vmatprep.subr.mxu0 0.0
      %1561 = vmatpush1.msra.mxu0 0.0
      %v1562 = vand.u32 %v1151, 4294901760
      %v1563 = vsub.f32 %v1151, %v1562
      %v1564 = vand.u32 %v1563, 4294901760
      %1565 = vmatprep.subr.mxu0 %v1564
      %v1566 = vand.u32 %v1150, 4294901760
      %v1567 = vsub.f32 %v1150, %v1566
      %v1568 = vand.u32 %v1567, 4294901760
      %1569 = vmatpush1.msra.mxu0 %v1568
      %v1570 = vand.u32 %v1149, 4294901760
      %v1571 = vsub.f32 %v1149, %v1570
      %v1572 = vand.u32 %v1571, 4294901760
      %1573 = vmatprep.subr.mxu0 %v1572
      %v1574 = vand.u32 %v1148, 4294901760
      %v1575 = vsub.f32 %v1148, %v1574
      %v1576 = vand.u32 %v1575, 4294901760
      %1577 = vmatpush1.msra.mxu0 %v1576
      %1578 = vmatprep.subr.mxu0 0.0
      %1579 = vmatpush2.msra.mxu0 0.0
      %1580 = vmatprep.subr.mxu0 0.0
      %1581 = vmatpush2.msra.mxu0 0.0
      %1582 = vmatprep.subr.mxu0 0.0
      %1583 = vmatpush2.msra.mxu0 0.0
      %1584 = vmatprep.subr.mxu0 0.0
      %1585 = vmatpush2.msra.mxu0 0.0
      %1586 = vmatprep.subr.mxu0 0.0
      %1587 = vmatpush2.msra.mxu0 0.0
      %1588 = vmatprep.subr.mxu0 0.0
      %1589 = vmatpush2.msra.mxu0 0.0
      %1590 = vmatprep.subr.mxu0 0.0
      %1591 = vmatpush2.msra.mxu0 0.0
      %1592 = vmatprep.subr.mxu0 0.0
      %1593 = vmatpush2.msra.mxu0 0.0
      %1594 = vmatprep.subr.mxu0 0.0
      %1595 = vmatpush2.msra.mxu0 0.0
      %1596 = vmatprep.subr.mxu0 0.0
      %1597 = vmatpush2.msra.mxu0 0.0
      %1598 = vmatprep.subr.mxu0 0.0
      %1599 = vmatpush2.msra.mxu0 0.0
      %1600 = vmatprep.subr.mxu0 0.0
      %1601 = vmatpush2.msra.mxu0 0.0
      %1602 = vmatprep.subr.mxu0 0.0
      %1603 = vmatpush2.msra.mxu0 0.0
      %1604 = vmatprep.subr.mxu0 0.0
      %1605 = vmatpush2.msra.mxu0 0.0
      %1606 = vmatprep.subr.mxu0 0.0
      %1607 = vmatpush2.msra.mxu0 0.0
      %1608 = vmatprep.subr.mxu0 0.0
      %1609 = vmatpush2.msra.mxu0 0.0
      %1610 = vmatprep.mubr.f32.mxu0 0.0
      %v1611 = vand.u32 %v1163, 4294901760
      %1612 = vmatmul.mubr.f32.gmra.mxu0 %v1611
      %v1613 = vpop.f32.mrf.mxu0
      %v1614 = vadd.f32 %v1521, %v1613
      %v1615 = vpop.f32.mrf.mxu0
      %v1616 = vadd.f32 %v1523, %v1615
      %1617 = vmatprep.mubr.f32.mxu0 0.0
      %v1618 = vand.u32 %v1166, 4294901760
      %1619 = vmatmul.mubr.f32.gmra.mxu0 %v1618
      %v1620 = vpop.f32.mrf.mxu0
      %v1621 = vadd.f32 %v1530, %v1620
      %v1622 = vpop.f32.mrf.mxu0
      %v1623 = vadd.f32 %v1532, %v1622
      %1624 = vdwg.mxu0
      %1625 = vmatprep.subr.mxu0 0.0
      %1626 = vmatpush1.msra.mxu0 0.0
      %1627 = vmatprep.subr.mxu0 0.0
      %1628 = vmatpush1.msra.mxu0 0.0
      %1629 = vmatprep.subr.mxu0 0.0
      %1630 = vmatpush1.msra.mxu0 0.0
      %1631 = vmatprep.subr.mxu0 0.0
      %1632 = vmatpush1.msra.mxu0 0.0
      %1633 = vmatprep.subr.mxu0 0.0
      %1634 = vmatpush1.msra.mxu0 0.0
      %1635 = vmatprep.subr.mxu0 0.0
      %1636 = vmatpush1.msra.mxu0 0.0
      %1637 = vmatprep.subr.mxu0 0.0
      %1638 = vmatpush1.msra.mxu0 0.0
      %1639 = vmatprep.subr.mxu0 0.0
      %1640 = vmatpush1.msra.mxu0 0.0
      %1641 = vmatprep.subr.mxu0 0.0
      %1642 = vmatpush1.msra.mxu0 0.0
      %1643 = vmatprep.subr.mxu0 0.0
      %1644 = vmatpush1.msra.mxu0 0.0
      %1645 = vmatprep.subr.mxu0 0.0
      %1646 = vmatpush1.msra.mxu0 0.0
      %1647 = vmatprep.subr.mxu0 0.0
      %1648 = vmatpush1.msra.mxu0 0.0
      %1649 = vmatprep.subr.mxu0 0.0
      %1650 = vmatpush1.msra.mxu0 0.0
      %1651 = vmatprep.subr.mxu0 0.0
      %1652 = vmatpush1.msra.mxu0 0.0
      %v1653 = vand.u32 %v1151, 4294901760
      %1654 = vmatprep.subr.mxu0 %v1653
      %v1655 = vand.u32 %v1150, 4294901760
      %1656 = vmatpush1.msra.mxu0 %v1655
      %v1657 = vand.u32 %v1149, 4294901760
      %1658 = vmatprep.subr.mxu0 %v1657
      %v1659 = vand.u32 %v1148, 4294901760
      %1660 = vmatpush1.msra.mxu0 %v1659
      %1661 = vmatprep.subr.mxu0 0.0
      %1662 = vmatpush2.msra.mxu0 0.0
      %1663 = vmatprep.subr.mxu0 0.0
      %1664 = vmatpush2.msra.mxu0 0.0
      %1665 = vmatprep.subr.mxu0 0.0
      %1666 = vmatpush2.msra.mxu0 0.0
      %1667 = vmatprep.subr.mxu0 0.0
      %1668 = vmatpush2.msra.mxu0 0.0
      %1669 = vmatprep.subr.mxu0 0.0
      %1670 = vmatpush2.msra.mxu0 0.0
      %1671 = vmatprep.subr.mxu0 0.0
      %1672 = vmatpush2.msra.mxu0 0.0
      %1673 = vmatprep.subr.mxu0 0.0
      %1674 = vmatpush2.msra.mxu0 0.0
      %1675 = vmatprep.subr.mxu0 0.0
      %1676 = vmatpush2.msra.mxu0 0.0
      %1677 = vmatprep.subr.mxu0 0.0
      %1678 = vmatpush2.msra.mxu0 0.0
      %1679 = vmatprep.subr.mxu0 0.0
      %1680 = vmatpush2.msra.mxu0 0.0
      %1681 = vmatprep.subr.mxu0 0.0
      %1682 = vmatpush2.msra.mxu0 0.0
      %1683 = vmatprep.subr.mxu0 0.0
      %1684 = vmatpush2.msra.mxu0 0.0
      %1685 = vmatprep.subr.mxu0 0.0
      %1686 = vmatpush2.msra.mxu0 0.0
      %1687 = vmatprep.subr.mxu0 0.0
      %1688 = vmatpush2.msra.mxu0 0.0
      %1689 = vmatprep.subr.mxu0 0.0
      %1690 = vmatpush2.msra.mxu0 0.0
      %1691 = vmatprep.subr.mxu0 0.0
      %1692 = vmatpush2.msra.mxu0 0.0
      %1693 = vmatprep.mubr.f32.mxu0 0.0
      %v1694 = vand.u32 %v1163, 4294901760
      %1695 = vmatmul.mubr.f32.gmra.mxu0 %v1694
      %v1696 = vpop.f32.mrf.mxu0
      %v1697 = vadd.f32 %v1614, %v1696
      %v1698 = vpop.f32.mrf.mxu0
      %v1699 = vadd.f32 %v1616, %v1698
      %1700 = vmatprep.mubr.f32.mxu0 0.0
      %v1701 = vand.u32 %v1166, 4294901760
      %1702 = vmatmul.mubr.f32.gmra.mxu0 %v1701
      %v1703 = vpop.f32.mrf.mxu0
      %v1704 = vadd.f32 %v1621, %v1703
      %v1705 = vpop.f32.mrf.mxu0
      %v1706 = vadd.f32 %v1623, %v1705
      %1707 = vdwg.mxu0
      %v1708 = vsub.f32 0.0, %v1697
      %v1709 = vsub.f32 0.0, %v1699
      %v1710 = vsub.f32 0.0, %v1704
      %v1711 = vsub.f32 0.0, %v1706
      %v1712 = vmul.f32 %v1708, 1.442695
      %v1713 = vpow.pop %v1712
      %v1714 = vmul.f32 %v1709, 1.442695
      %v1715 = vpow.pop %v1714
      %v1716 = vmul.f32 %v1710, 1.442695
      %v1717 = vpow.pop %v1716
      %v1718 = vmul.f32 %v1711, 1.442695
      %v1719 = vpow.pop %v1718
      %v1720 = vadd.f32 %v1713, 1.0
      %v1721 = vadd.f32 %v1715, 1.0
      %v1722 = vadd.f32 %v1717, 1.0
      %v1723 = vadd.f32 %v1719, 1.0
      %v1724 = vrcp.pop %v1720
      %v1725 = vmul.f32 1.0, %v1724
      %v1726 = vrcp.pop %v1721
      %v1727 = vmul.f32 1.0, %v1726
      %v1728 = vrcp.pop %v1722
      %v1729 = vmul.f32 1.0, %v1728
      %v1730 = vrcp.pop %v1723
      %v1731 = vmul.f32 1.0, %v1730
      %v1732 = vmul.f32 %v483, %v1725
      %v1733 = vmul.f32 %v484, %v1727
      %v1734 = vmul.f32 %v485, %v1729
      %v1735 = vmul.f32 %v486, %v1731
      %1736 = vrot.lane.b32.xlu0 %v1732, 17
      %v1737 = vpop.permute.xlu0 %1736
      %1738 = vrot.lane.b32.xlu0 %v1734, 17
      %v1739 = vpop.permute.xlu0 %1738
      %1740 = vrot.lane.b32.xlu0 %v1733, 17
      %v1741 = vpop.permute.xlu0 %1740
      %1742 = vrot.lane.b32.xlu0 %v1735, 17
      %v1743 = vpop.permute.xlu0 %1742
      %v1744 = vlaneseq
      %v1745 = vand.u32 %v1744, 127
      %vm1746 = vcmp.lt.s32.totalorder %v1745, 17
      %v1747 = vsel %vm1746, %v1737, %v1741
      %v1748 = vsel %vm1746, %v1739, %v1743
      %v1749 = vsel %vm1746, %v1741, %v1737
      %v1750 = vsel %vm1746, %v1743, %v1739
      %v1751 = vld [vmem:[%s2] sm:$0x3]
      %v1753 = vlaneseq
      %v1754 = vshrl.u32 %v1753, 7
      %v1755 = vsub.s32 0, %v1754
      %v1756 = vrot.slane %v1751, %v1755
      %v1757 = vlaneseq
      %v1758 = vshrl.u32 %v1757, 7
      %v1759 = vsub.s32 1, %v1758
      %v1760 = vrot.slane %v1751, %v1759
      %v1763 = vmul.f32 %v1749, %v1756
      %v1764 = vmul.f32 %v1747, %v1760
      %v1765 = vmul.f32 %v1750, %v1756
      %v1766 = vmul.f32 %v1748, %v1760
      %1767 = vrot.lane.b32.xlu0 %v1732, 16
      %v1768 = vpop.permute.xlu0 %1767
      %1769 = vrot.lane.b32.xlu0 %v1734, 16
      %v1770 = vpop.permute.xlu0 %1769
      %1771 = vrot.lane.b32.xlu0 %v1733, 16
      %v1772 = vpop.permute.xlu0 %1771
      %1773 = vrot.lane.b32.xlu0 %v1735, 16
      %v1774 = vpop.permute.xlu0 %1773
      %vm1775 = vcmp.lt.s32.totalorder %v1745, 16
      %v1776 = vsel %vm1775, %v1768, %v1772
      %v1777 = vsel %vm1775, %v1770, %v1774
      %v1778 = vsel %vm1775, %v1772, %v1768
      %v1779 = vsel %vm1775, %v1774, %v1770
      %s1780 = scalar_lea.vmem %s2, 2
      %v1781 = vld [vmem:[%s1780] sm:$0x3]
      %v1783 = vlaneseq
      %v1784 = vshrl.u32 %v1783, 7
      %v1785 = vsub.s32 0, %v1784
      %v1786 = vrot.slane %v1781, %v1785
      %v1787 = vlaneseq
      %v1788 = vshrl.u32 %v1787, 7
      %v1789 = vsub.s32 1, %v1788
      %v1790 = vrot.slane %v1781, %v1789
      %v1793 = vmul.f32 %v1778, %v1786
      %v1794 = vmul.f32 %v1776, %v1790
      %v1795 = vmul.f32 %v1779, %v1786
      %v1796 = vmul.f32 %v1777, %v1790
      %1797 = vrot.lane.b32.xlu0 %v1732, 15
      %v1798 = vpop.permute.xlu0 %1797
      %1799 = vrot.lane.b32.xlu0 %v1734, 15
      %v1800 = vpop.permute.xlu0 %1799
      %1801 = vrot.lane.b32.xlu0 %v1733, 15
      %v1802 = vpop.permute.xlu0 %1801
      %1803 = vrot.lane.b32.xlu0 %v1735, 15
      %v1804 = vpop.permute.xlu0 %1803
      %vm1805 = vcmp.lt.s32.totalorder %v1745, 15
      %v1806 = vsel %vm1805, %v1798, %v1802
      %v1807 = vsel %vm1805, %v1800, %v1804
      %v1808 = vsel %vm1805, %v1802, %v1798
      %v1809 = vsel %vm1805, %v1804, %v1800
      %s1810 = scalar_lea.vmem %s2, 4
      %v1811 = vld [vmem:[%s1810] sm:$0x3]
      %v1813 = vlaneseq
      %v1814 = vshrl.u32 %v1813, 7
      %v1815 = vsub.s32 0, %v1814
      %v1816 = vrot.slane %v1811, %v1815
      %v1817 = vlaneseq
      %v1818 = vshrl.u32 %v1817, 7
      %v1819 = vsub.s32 1, %v1818
      %v1820 = vrot.slane %v1811, %v1819
      %v1823 = vmul.f32 %v1808, %v1816
      %v1824 = vmul.f32 %v1806, %v1820
      %v1825 = vmul.f32 %v1809, %v1816
      %v1826 = vmul.f32 %v1807, %v1820
      %1827 = vrot.lane.b32.xlu0 %v1732, 1
      %v1828 = vpop.permute.xlu0 %1827
      %1829 = vrot.lane.b32.xlu0 %v1734, 1
      %v1830 = vpop.permute.xlu0 %1829
      %1831 = vrot.lane.b32.xlu0 %v1733, 1
      %v1832 = vpop.permute.xlu0 %1831
      %1833 = vrot.lane.b32.xlu0 %v1735, 1
      %v1834 = vpop.permute.xlu0 %1833
      %vm1835 = vcmp.lt.s32.totalorder %v1745, 1
      %v1836 = vsel %vm1835, %v1828, %v1832
      %v1837 = vsel %vm1835, %v1830, %v1834
      %v1838 = vsel %vm1835, %v1832, %v1828
      %v1839 = vsel %vm1835, %v1834, %v1830
      %s1840 = scalar_lea.vmem %s2, 6
      %v1841 = vld [vmem:[%s1840] sm:$0x3]
      %v1843 = vlaneseq
      %v1844 = vshrl.u32 %v1843, 7
      %v1845 = vsub.s32 0, %v1844
      %v1846 = vrot.slane %v1841, %v1845
      %v1847 = vlaneseq
      %v1848 = vshrl.u32 %v1847, 7
      %v1849 = vsub.s32 1, %v1848
      %v1850 = vrot.slane %v1841, %v1849
      %v1853 = vmul.f32 %v1838, %v1846
      %v1854 = vmul.f32 %v1836, %v1850
      %v1855 = vmul.f32 %v1839, %v1846
      %v1856 = vmul.f32 %v1837, %v1850
      %1857 = vrot.lane.b32.xlu0 %v1732, 127
      %v1858 = vpop.permute.xlu0 %1857
      %1859 = vrot.lane.b32.xlu0 %v1734, 127
      %v1860 = vpop.permute.xlu0 %1859
      %1861 = vrot.lane.b32.xlu0 %v1733, 127
      %v1862 = vpop.permute.xlu0 %1861
      %1863 = vrot.lane.b32.xlu0 %v1735, 127
      %v1864 = vpop.permute.xlu0 %1863
      %vm1865 = vcmp.lt.s32.totalorder %v1745, 127
      %v1866 = vsel %vm1865, %v1858, %v1862
      %v1867 = vsel %vm1865, %v1860, %v1864
      %v1868 = vsel %vm1865, %v1862, %v1858
      %v1869 = vsel %vm1865, %v1864, %v1860
      %s1870 = scalar_lea.vmem %s2, 10
      %v1871 = vld [vmem:[%s1870] sm:$0x3]
      %v1873 = vlaneseq
      %v1874 = vshrl.u32 %v1873, 7
      %v1875 = vsub.s32 0, %v1874
      %v1876 = vrot.slane %v1871, %v1875
      %v1877 = vlaneseq
      %v1878 = vshrl.u32 %v1877, 7
      %v1879 = vsub.s32 1, %v1878
      %v1880 = vrot.slane %v1871, %v1879
      %v1883 = vmul.f32 %v1866, %v1876
      %v1884 = vmul.f32 %v1868, %v1880
      %v1885 = vmul.f32 %v1867, %v1876
      %v1886 = vmul.f32 %v1869, %v1880
      %1887 = vrot.lane.b32.xlu0 %v1732, 113
      %v1888 = vpop.permute.xlu0 %1887
      %1889 = vrot.lane.b32.xlu0 %v1734, 113
      %v1890 = vpop.permute.xlu0 %1889
      %1891 = vrot.lane.b32.xlu0 %v1733, 113
      %v1892 = vpop.permute.xlu0 %1891
      %1893 = vrot.lane.b32.xlu0 %v1735, 113
      %v1894 = vpop.permute.xlu0 %1893
      %vm1895 = vcmp.lt.s32.totalorder %v1745, 113
      %v1896 = vsel %vm1895, %v1888, %v1892
      %v1897 = vsel %vm1895, %v1890, %v1894
      %v1898 = vsel %vm1895, %v1892, %v1888
      %v1899 = vsel %vm1895, %v1894, %v1890
      %s1900 = scalar_lea.vmem %s2, 12
      %v1901 = vld [vmem:[%s1900] sm:$0x3]
      %v1903 = vlaneseq
      %v1904 = vshrl.u32 %v1903, 7
      %v1905 = vsub.s32 0, %v1904
      %v1906 = vrot.slane %v1901, %v1905
      %v1907 = vlaneseq
      %v1908 = vshrl.u32 %v1907, 7
      %v1909 = vsub.s32 1, %v1908
      %v1910 = vrot.slane %v1901, %v1909
      %v1913 = vmul.f32 %v1896, %v1906
      %v1914 = vmul.f32 %v1898, %v1910
      %v1915 = vmul.f32 %v1897, %v1906
      %v1916 = vmul.f32 %v1899, %v1910
      %1917 = vrot.lane.b32.xlu0 %v1732, 112
      %v1918 = vpop.permute.xlu0 %1917
      %1919 = vrot.lane.b32.xlu0 %v1734, 112
      %v1920 = vpop.permute.xlu0 %1919
      %1921 = vrot.lane.b32.xlu0 %v1733, 112
      %v1922 = vpop.permute.xlu0 %1921
      %1923 = vrot.lane.b32.xlu0 %v1735, 112
      %v1924 = vpop.permute.xlu0 %1923
      %vm1925 = vcmp.lt.s32.totalorder %v1745, 112
      %v1926 = vsel %vm1925, %v1918, %v1922
      %v1927 = vsel %vm1925, %v1920, %v1924
      %v1928 = vsel %vm1925, %v1922, %v1918
      %v1929 = vsel %vm1925, %v1924, %v1920
      %s1930 = scalar_lea.vmem %s2, 14
      %v1931 = vld [vmem:[%s1930] sm:$0x3]
      %v1933 = vlaneseq
      %v1934 = vshrl.u32 %v1933, 7
      %v1935 = vsub.s32 0, %v1934
      %v1936 = vrot.slane %v1931, %v1935
      %v1937 = vlaneseq
      %v1938 = vshrl.u32 %v1937, 7
      %v1939 = vsub.s32 1, %v1938
      %v1940 = vrot.slane %v1931, %v1939
      %v1943 = vmul.f32 %v1926, %v1936
      %v1944 = vmul.f32 %v1928, %v1940
      %v1945 = vmul.f32 %v1927, %v1936
      %v1946 = vmul.f32 %v1929, %v1940
      %1947 = vrot.lane.b32.xlu0 %v1732, 111
      %v1948 = vpop.permute.xlu0 %1947
      %1949 = vrot.lane.b32.xlu0 %v1734, 111
      %v1950 = vpop.permute.xlu0 %1949
      %1951 = vrot.lane.b32.xlu0 %v1733, 111
      %v1952 = vpop.permute.xlu0 %1951
      %1953 = vrot.lane.b32.xlu0 %v1735, 111
      %v1954 = vpop.permute.xlu0 %1953
      %vm1955 = vcmp.lt.s32.totalorder %v1745, 111
      %v1956 = vsel %vm1955, %v1948, %v1952
      %v1957 = vsel %vm1955, %v1950, %v1954
      %v1958 = vsel %vm1955, %v1952, %v1948
      %v1959 = vsel %vm1955, %v1954, %v1950
      %s1960 = scalar_lea.vmem %s2, 16
      %v1961 = vld [vmem:[%s1960] sm:$0x3]
      %v1963 = vlaneseq
      %v1964 = vshrl.u32 %v1963, 7
      %v1965 = vsub.s32 0, %v1964
      %v1966 = vrot.slane %v1961, %v1965
      %v1967 = vlaneseq
      %v1968 = vshrl.u32 %v1967, 7
      %v1969 = vsub.s32 1, %v1968
      %v1970 = vrot.slane %v1961, %v1969
      %v1973 = vmul.f32 %v1956, %v1966
      %v1974 = vmul.f32 %v1958, %v1970
      %v1975 = vmul.f32 %v1957, %v1966
      %v1976 = vmul.f32 %v1959, %v1970
      %1978 = vset.pattern.permute.xlu0 0
      %1979 = vperm.xlu0 %1978, %v473
      %v1980 = vpop.permute.xlu0 %1979
      %1983 = vset.pattern.permute.xlu0 0
      %1984 = vperm.xlu0 %1983, %v474
      %v1985 = vpop.permute.xlu0 %1984
      %v1988 = vsel %vm497, %v470, 0
      %v1991 = vsel %vm497, %v472, 0
      %v1993 = vand.u32 %v1946, 4294901760
      %1994 = vmatprep.subr.mxu0 %v1993
      %v1995 = vand.u32 %v1945, 4294901760
      %1996 = vmatpush1.msra.mxu0 %v1995
      %v1997 = vand.u32 %v1944, 4294901760
      %1998 = vmatprep.subr.mxu0 %v1997
      %v1999 = vand.u32 %v1943, 4294901760
      %2000 = vmatpush1.msra.mxu0 %v1999
      %v2001 = vand.u32 %v1916, 4294901760
      %2002 = vmatprep.subr.mxu0 %v2001
      %v2003 = vand.u32 %v1915, 4294901760
      %2004 = vmatpush1.msra.mxu0 %v2003
      %v2005 = vand.u32 %v1914, 4294901760
      %2006 = vmatprep.subr.mxu0 %v2005
      %v2007 = vand.u32 %v1913, 4294901760
      %2008 = vmatpush1.msra.mxu0 %v2007
      %v2009 = vand.u32 %v1886, 4294901760
      %2010 = vmatprep.subr.mxu0 %v2009
      %v2011 = vand.u32 %v1885, 4294901760
      %2012 = vmatpush1.msra.mxu0 %v2011
      %v2013 = vand.u32 %v1884, 4294901760
      %2014 = vmatprep.subr.mxu0 %v2013
      %v2015 = vand.u32 %v1883, 4294901760
      %2016 = vmatpush1.msra.mxu0 %v2015
      %v2017 = vand.u32 %v1735, 4294901760
      %2018 = vmatprep.subr.mxu0 %v2017
      %v2019 = vand.u32 %v1734, 4294901760
      %2020 = vmatpush1.msra.mxu0 %v2019
      %v2021 = vand.u32 %v1733, 4294901760
      %2022 = vmatprep.subr.mxu0 %v2021
      %v2023 = vand.u32 %v1732, 4294901760
      %2024 = vmatpush1.msra.mxu0 %v2023
      %v2025 = vand.u32 %v1856, 4294901760
      %2026 = vmatprep.subr.mxu0 %v2025
      %v2027 = vand.u32 %v1855, 4294901760
      %2028 = vmatpush1.msra.mxu0 %v2027
      %v2029 = vand.u32 %v1854, 4294901760
      %2030 = vmatprep.subr.mxu0 %v2029
      %v2031 = vand.u32 %v1853, 4294901760
      %2032 = vmatpush1.msra.mxu0 %v2031
      %v2033 = vand.u32 %v1826, 4294901760
      %2034 = vmatprep.subr.mxu0 %v2033
      %v2035 = vand.u32 %v1825, 4294901760
      %2036 = vmatpush1.msra.mxu0 %v2035
      %v2037 = vand.u32 %v1824, 4294901760
      %2038 = vmatprep.subr.mxu0 %v2037
      %v2039 = vand.u32 %v1823, 4294901760
      %2040 = vmatpush1.msra.mxu0 %v2039
      %v2041 = vand.u32 %v1796, 4294901760
      %2042 = vmatprep.subr.mxu0 %v2041
      %v2043 = vand.u32 %v1795, 4294901760
      %2044 = vmatpush1.msra.mxu0 %v2043
      %v2045 = vand.u32 %v1794, 4294901760
      %2046 = vmatprep.subr.mxu0 %v2045
      %v2047 = vand.u32 %v1793, 4294901760
      %2048 = vmatpush1.msra.mxu0 %v2047
      %v2049 = vand.u32 %v1766, 4294901760
      %2050 = vmatprep.subr.mxu0 %v2049
      %v2051 = vand.u32 %v1765, 4294901760
      %2052 = vmatpush1.msra.mxu0 %v2051
      %v2053 = vand.u32 %v1764, 4294901760
      %2054 = vmatprep.subr.mxu0 %v2053
      %v2055 = vand.u32 %v1763, 4294901760
      %2056 = vmatpush1.msra.mxu0 %v2055
      %2057 = vmatprep.subr.mxu0 0.0
      %2058 = vmatpush2.msra.mxu0 0.0
      %2059 = vmatprep.subr.mxu0 0.0
      %2060 = vmatpush2.msra.mxu0 0.0
      %2061 = vmatprep.subr.mxu0 0.0
      %2062 = vmatpush2.msra.mxu0 0.0
      %2063 = vmatprep.subr.mxu0 0.0
      %2064 = vmatpush2.msra.mxu0 0.0
      %2065 = vmatprep.subr.mxu0 0.0
      %2066 = vmatpush2.msra.mxu0 0.0
      %2067 = vmatprep.subr.mxu0 0.0
      %2068 = vmatpush2.msra.mxu0 0.0
      %2069 = vmatprep.subr.mxu0 0.0
      %2070 = vmatpush2.msra.mxu0 0.0
      %2071 = vmatprep.subr.mxu0 0.0
      %2072 = vmatpush2.msra.mxu0 0.0
      %2073 = vmatprep.subr.mxu0 0.0
      %2074 = vmatpush2.msra.mxu0 0.0
      %2075 = vmatprep.subr.mxu0 0.0
      %2076 = vmatpush2.msra.mxu0 0.0
      %2077 = vmatprep.subr.mxu0 0.0
      %2078 = vmatpush2.msra.mxu0 0.0
      %2079 = vmatprep.subr.mxu0 0.0
      %2080 = vmatpush2.msra.mxu0 0.0
      %2081 = vmatprep.subr.mxu0 0.0
      %2082 = vmatpush2.msra.mxu0 0.0
      %2083 = vmatprep.subr.mxu0 0.0
      %2084 = vmatpush2.msra.mxu0 0.0
      %v2085 = vand.u32 %v1976, 4294901760
      %2086 = vmatprep.subr.mxu0 %v2085
      %v2087 = vand.u32 %v1975, 4294901760
      %2088 = vmatpush2.msra.mxu0 %v2087
      %v2089 = vand.u32 %v1974, 4294901760
      %2090 = vmatprep.subr.mxu0 %v2089
      %v2091 = vand.u32 %v1973, 4294901760
      %2092 = vmatpush2.msra.mxu0 %v2091
      %v2093 = vand.u32 %v1988, 4294901760
      %v2094 = vsub.f32 %v1988, %v2093
      %v2095 = vand.u32 %v2094, 4294901760
      %v2096 = vsub.f32 %v2094, %v2095
      %v2097 = vand.u32 %v2096, 4294901760
      %2098 = vmatprep.mubr.f32.mxu0 %v2097
      %v2099 = vand.u32 %v469, 4294901760
      %v2100 = vsub.f32 %v469, %v2099
      %v2101 = vand.u32 %v2100, 4294901760
      %v2102 = vsub.f32 %v2100, %v2101
      %v2103 = vand.u32 %v2102, 4294901760
      %2104 = vmatmul.mubr.f32.gmra.mxu0 %v2103
      %v2105 = vpop.f32.mrf.mxu0
      %v2106 = vadd.f32 %v1980, %v2105
      %v2107 = vpop.f32.mrf.mxu0
      %v2108 = vadd.f32 %v1980, %v2107
      %v2109 = vand.u32 %v1991, 4294901760
      %v2110 = vsub.f32 %v1991, %v2109
      %v2111 = vand.u32 %v2110, 4294901760
      %v2112 = vsub.f32 %v2110, %v2111
      %v2113 = vand.u32 %v2112, 4294901760
      %2114 = vmatprep.mubr.f32.mxu0 %v2113
      %v2115 = vand.u32 %v471, 4294901760
      %v2116 = vsub.f32 %v471, %v2115
      %v2117 = vand.u32 %v2116, 4294901760
      %v2118 = vsub.f32 %v2116, %v2117
      %v2119 = vand.u32 %v2118, 4294901760
      %2120 = vmatmul.mubr.f32.gmra.mxu0 %v2119
      %v2121 = vpop.f32.mrf.mxu0
      %v2122 = vadd.f32 %v1985, %v2121
      %v2123 = vpop.f32.mrf.mxu0
      %v2124 = vadd.f32 %v1985, %v2123
      %2125 = vdwg.mxu0
      %v2126 = vand.u32 %v1946, 4294901760
      %v2127 = vsub.f32 %v1946, %v2126
      %v2128 = vand.u32 %v2127, 4294901760
      %v2129 = vsub.f32 %v2127, %v2128
      %v2130 = vand.u32 %v2129, 4294901760
      %2131 = vmatprep.subr.mxu0 %v2130
      %v2132 = vand.u32 %v1945, 4294901760
      %v2133 = vsub.f32 %v1945, %v2132
      %v2134 = vand.u32 %v2133, 4294901760
      %v2135 = vsub.f32 %v2133, %v2134
      %v2136 = vand.u32 %v2135, 4294901760
      %2137 = vmatpush1.msra.mxu0 %v2136
      %v2138 = vand.u32 %v1944, 4294901760
      %v2139 = vsub.f32 %v1944, %v2138
      %v2140 = vand.u32 %v2139, 4294901760
      %v2141 = vsub.f32 %v2139, %v2140
      %v2142 = vand.u32 %v2141, 4294901760
      %2143 = vmatprep.subr.mxu0 %v2142
      %v2144 = vand.u32 %v1943, 4294901760
      %v2145 = vsub.f32 %v1943, %v2144
      %v2146 = vand.u32 %v2145, 4294901760
      %v2147 = vsub.f32 %v2145, %v2146
      %v2148 = vand.u32 %v2147, 4294901760
      %2149 = vmatpush1.msra.mxu0 %v2148
      %v2150 = vand.u32 %v1916, 4294901760
      %v2151 = vsub.f32 %v1916, %v2150
      %v2152 = vand.u32 %v2151, 4294901760
      %v2153 = vsub.f32 %v2151, %v2152
      %v2154 = vand.u32 %v2153, 4294901760
      %2155 = vmatprep.subr.mxu0 %v2154
      %v2156 = vand.u32 %v1915, 4294901760
      %v2157 = vsub.f32 %v1915, %v2156
      %v2158 = vand.u32 %v2157, 4294901760
      %v2159 = vsub.f32 %v2157, %v2158
      %v2160 = vand.u32 %v2159, 4294901760
      %2161 = vmatpush1.msra.mxu0 %v2160
      %v2162 = vand.u32 %v1914, 4294901760
      %v2163 = vsub.f32 %v1914, %v2162
      %v2164 = vand.u32 %v2163, 4294901760
      %v2165 = vsub.f32 %v2163, %v2164
      %v2166 = vand.u32 %v2165, 4294901760
      %2167 = vmatprep.subr.mxu0 %v2166
      %v2168 = vand.u32 %v1913, 4294901760
      %v2169 = vsub.f32 %v1913, %v2168
      %v2170 = vand.u32 %v2169, 4294901760
      %v2171 = vsub.f32 %v2169, %v2170
      %v2172 = vand.u32 %v2171, 4294901760
      %2173 = vmatpush1.msra.mxu0 %v2172
      %v2174 = vand.u32 %v1886, 4294901760
      %v2175 = vsub.f32 %v1886, %v2174
      %v2176 = vand.u32 %v2175, 4294901760
      %v2177 = vsub.f32 %v2175, %v2176
      %v2178 = vand.u32 %v2177, 4294901760
      %2179 = vmatprep.subr.mxu0 %v2178
      %v2180 = vand.u32 %v1885, 4294901760
      %v2181 = vsub.f32 %v1885, %v2180
      %v2182 = vand.u32 %v2181, 4294901760
      %v2183 = vsub.f32 %v2181, %v2182
      %v2184 = vand.u32 %v2183, 4294901760
      %2185 = vmatpush1.msra.mxu0 %v2184
      %v2186 = vand.u32 %v1884, 4294901760
      %v2187 = vsub.f32 %v1884, %v2186
      %v2188 = vand.u32 %v2187, 4294901760
      %v2189 = vsub.f32 %v2187, %v2188
      %v2190 = vand.u32 %v2189, 4294901760
      %2191 = vmatprep.subr.mxu0 %v2190
      %v2192 = vand.u32 %v1883, 4294901760
      %v2193 = vsub.f32 %v1883, %v2192
      %v2194 = vand.u32 %v2193, 4294901760
      %v2195 = vsub.f32 %v2193, %v2194
      %v2196 = vand.u32 %v2195, 4294901760
      %2197 = vmatpush1.msra.mxu0 %v2196
      %v2198 = vand.u32 %v1735, 4294901760
      %v2199 = vsub.f32 %v1735, %v2198
      %v2200 = vand.u32 %v2199, 4294901760
      %v2201 = vsub.f32 %v2199, %v2200
      %v2202 = vand.u32 %v2201, 4294901760
      %2203 = vmatprep.subr.mxu0 %v2202
      %v2204 = vand.u32 %v1734, 4294901760
      %v2205 = vsub.f32 %v1734, %v2204
      %v2206 = vand.u32 %v2205, 4294901760
      %v2207 = vsub.f32 %v2205, %v2206
      %v2208 = vand.u32 %v2207, 4294901760
      %2209 = vmatpush1.msra.mxu0 %v2208
      %v2210 = vand.u32 %v1733, 4294901760
      %v2211 = vsub.f32 %v1733, %v2210
      %v2212 = vand.u32 %v2211, 4294901760
      %v2213 = vsub.f32 %v2211, %v2212
      %v2214 = vand.u32 %v2213, 4294901760
      %2215 = vmatprep.subr.mxu0 %v2214
      %v2216 = vand.u32 %v1732, 4294901760
      %v2217 = vsub.f32 %v1732, %v2216
      %v2218 = vand.u32 %v2217, 4294901760
      %v2219 = vsub.f32 %v2217, %v2218
      %v2220 = vand.u32 %v2219, 4294901760
      %2221 = vmatpush1.msra.mxu0 %v2220
      %v2222 = vand.u32 %v1856, 4294901760
      %v2223 = vsub.f32 %v1856, %v2222
      %v2224 = vand.u32 %v2223, 4294901760
      %v2225 = vsub.f32 %v2223, %v2224
      %v2226 = vand.u32 %v2225, 4294901760
      %2227 = vmatprep.subr.mxu0 %v2226
      %v2228 = vand.u32 %v1855, 4294901760
      %v2229 = vsub.f32 %v1855, %v2228
      %v2230 = vand.u32 %v2229, 4294901760
      %v2231 = vsub.f32 %v2229, %v2230
      %v2232 = vand.u32 %v2231, 4294901760
      %2233 = vmatpush1.msra.mxu0 %v2232
      %v2234 = vand.u32 %v1854, 4294901760
      %v2235 = vsub.f32 %v1854, %v2234
      %v2236 = vand.u32 %v2235, 4294901760
      %v2237 = vsub.f32 %v2235, %v2236
      %v2238 = vand.u32 %v2237, 4294901760
      %2239 = vmatprep.subr.mxu0 %v2238
      %v2240 = vand.u32 %v1853, 4294901760
      %v2241 = vsub.f32 %v1853, %v2240
      %v2242 = vand.u32 %v2241, 4294901760
      %v2243 = vsub.f32 %v2241, %v2242
      %v2244 = vand.u32 %v2243, 4294901760
      %2245 = vmatpush1.msra.mxu0 %v2244
      %v2246 = vand.u32 %v1826, 4294901760
      %v2247 = vsub.f32 %v1826, %v2246
      %v2248 = vand.u32 %v2247, 4294901760
      %v2249 = vsub.f32 %v2247, %v2248
      %v2250 = vand.u32 %v2249, 4294901760
      %2251 = vmatprep.subr.mxu0 %v2250
      %v2252 = vand.u32 %v1825, 4294901760
      %v2253 = vsub.f32 %v1825, %v2252
      %v2254 = vand.u32 %v2253, 4294901760
      %v2255 = vsub.f32 %v2253, %v2254
      %v2256 = vand.u32 %v2255, 4294901760
      %2257 = vmatpush1.msra.mxu0 %v2256
      %v2258 = vand.u32 %v1824, 4294901760
      %v2259 = vsub.f32 %v1824, %v2258
      %v2260 = vand.u32 %v2259, 4294901760
      %v2261 = vsub.f32 %v2259, %v2260
      %v2262 = vand.u32 %v2261, 4294901760
      %2263 = vmatprep.subr.mxu0 %v2262
      %v2264 = vand.u32 %v1823, 4294901760
      %v2265 = vsub.f32 %v1823, %v2264
      %v2266 = vand.u32 %v2265, 4294901760
      %v2267 = vsub.f32 %v2265, %v2266
      %v2268 = vand.u32 %v2267, 4294901760
      %2269 = vmatpush1.msra.mxu0 %v2268
      %v2270 = vand.u32 %v1796, 4294901760
      %v2271 = vsub.f32 %v1796, %v2270
      %v2272 = vand.u32 %v2271, 4294901760
      %v2273 = vsub.f32 %v2271, %v2272
      %v2274 = vand.u32 %v2273, 4294901760
      %2275 = vmatprep.subr.mxu0 %v2274
      %v2276 = vand.u32 %v1795, 4294901760
      %v2277 = vsub.f32 %v1795, %v2276
      %v2278 = vand.u32 %v2277, 4294901760
      %v2279 = vsub.f32 %v2277, %v2278
      %v2280 = vand.u32 %v2279, 4294901760
      %2281 = vmatpush1.msra.mxu0 %v2280
      %v2282 = vand.u32 %v1794, 4294901760
      %v2283 = vsub.f32 %v1794, %v2282
      %v2284 = vand.u32 %v2283, 4294901760
      %v2285 = vsub.f32 %v2283, %v2284
      %v2286 = vand.u32 %v2285, 4294901760
      %2287 = vmatprep.subr.mxu0 %v2286
      %v2288 = vand.u32 %v1793, 4294901760
      %v2289 = vsub.f32 %v1793, %v2288
      %v2290 = vand.u32 %v2289, 4294901760
      %v2291 = vsub.f32 %v2289, %v2290
      %v2292 = vand.u32 %v2291, 4294901760
      %2293 = vmatpush1.msra.mxu0 %v2292
      %v2294 = vand.u32 %v1766, 4294901760
      %v2295 = vsub.f32 %v1766, %v2294
      %v2296 = vand.u32 %v2295, 4294901760
      %v2297 = vsub.f32 %v2295, %v2296
      %v2298 = vand.u32 %v2297, 4294901760
      %2299 = vmatprep.subr.mxu0 %v2298
      %v2300 = vand.u32 %v1765, 4294901760
      %v2301 = vsub.f32 %v1765, %v2300
      %v2302 = vand.u32 %v2301, 4294901760
      %v2303 = vsub.f32 %v2301, %v2302
      %v2304 = vand.u32 %v2303, 4294901760
      %2305 = vmatpush1.msra.mxu0 %v2304
      %v2306 = vand.u32 %v1764, 4294901760
      %v2307 = vsub.f32 %v1764, %v2306
      %v2308 = vand.u32 %v2307, 4294901760
      %v2309 = vsub.f32 %v2307, %v2308
      %v2310 = vand.u32 %v2309, 4294901760
      %2311 = vmatprep.subr.mxu0 %v2310
      %v2312 = vand.u32 %v1763, 4294901760
      %v2313 = vsub.f32 %v1763, %v2312
      %v2314 = vand.u32 %v2313, 4294901760
      %v2315 = vsub.f32 %v2313, %v2314
      %v2316 = vand.u32 %v2315, 4294901760
      %2317 = vmatpush1.msra.mxu0 %v2316
      %2318 = vmatprep.subr.mxu0 0.0
      %2319 = vmatpush2.msra.mxu0 0.0
      %2320 = vmatprep.subr.mxu0 0.0
      %2321 = vmatpush2.msra.mxu0 0.0
      %2322 = vmatprep.subr.mxu0 0.0
      %2323 = vmatpush2.msra.mxu0 0.0
      %2324 = vmatprep.subr.mxu0 0.0
      %2325 = vmatpush2.msra.mxu0 0.0
      %2326 = vmatprep.subr.mxu0 0.0
      %2327 = vmatpush2.msra.mxu0 0.0
      %2328 = vmatprep.subr.mxu0 0.0
      %2329 = vmatpush2.msra.mxu0 0.0
      %2330 = vmatprep.subr.mxu0 0.0
      %2331 = vmatpush2.msra.mxu0 0.0
      %2332 = vmatprep.subr.mxu0 0.0
      %2333 = vmatpush2.msra.mxu0 0.0
      %2334 = vmatprep.subr.mxu0 0.0
      %2335 = vmatpush2.msra.mxu0 0.0
      %2336 = vmatprep.subr.mxu0 0.0
      %2337 = vmatpush2.msra.mxu0 0.0
      %2338 = vmatprep.subr.mxu0 0.0
      %2339 = vmatpush2.msra.mxu0 0.0
      %2340 = vmatprep.subr.mxu0 0.0
      %2341 = vmatpush2.msra.mxu0 0.0
      %2342 = vmatprep.subr.mxu0 0.0
      %2343 = vmatpush2.msra.mxu0 0.0
      %2344 = vmatprep.subr.mxu0 0.0
      %2345 = vmatpush2.msra.mxu0 0.0
      %v2346 = vand.u32 %v1976, 4294901760
      %v2347 = vsub.f32 %v1976, %v2346
      %v2348 = vand.u32 %v2347, 4294901760
      %v2349 = vsub.f32 %v2347, %v2348
      %v2350 = vand.u32 %v2349, 4294901760
      %2351 = vmatprep.subr.mxu0 %v2350
      %v2352 = vand.u32 %v1975, 4294901760
      %v2353 = vsub.f32 %v1975, %v2352
      %v2354 = vand.u32 %v2353, 4294901760
      %v2355 = vsub.f32 %v2353, %v2354
      %v2356 = vand.u32 %v2355, 4294901760
      %2357 = vmatpush2.msra.mxu0 %v2356
      %v2358 = vand.u32 %v1974, 4294901760
      %v2359 = vsub.f32 %v1974, %v2358
      %v2360 = vand.u32 %v2359, 4294901760
      %v2361 = vsub.f32 %v2359, %v2360
      %v2362 = vand.u32 %v2361, 4294901760
      %2363 = vmatprep.subr.mxu0 %v2362
      %v2364 = vand.u32 %v1973, 4294901760
      %v2365 = vsub.f32 %v1973, %v2364
      %v2366 = vand.u32 %v2365, 4294901760
      %v2367 = vsub.f32 %v2365, %v2366
      %v2368 = vand.u32 %v2367, 4294901760
      %2369 = vmatpush2.msra.mxu0 %v2368
      %v2370 = vand.u32 %v1988, 4294901760
      %2371 = vmatprep.mubr.f32.mxu0 %v2370
      %v2372 = vand.u32 %v469, 4294901760
      %2373 = vmatmul.mubr.f32.gmra.mxu0 %v2372
      %v2374 = vpop.f32.mrf.mxu0
      %v2375 = vadd.f32 %v2106, %v2374
      %v2376 = vpop.f32.mrf.mxu0
      %v2377 = vadd.f32 %v2108, %v2376
      %v2378 = vand.u32 %v1991, 4294901760
      %2379 = vmatprep.mubr.f32.mxu0 %v2378
      %v2380 = vand.u32 %v471, 4294901760
      %2381 = vmatmul.mubr.f32.gmra.mxu0 %v2380
      %v2382 = vpop.f32.mrf.mxu0
      %v2383 = vadd.f32 %v2122, %v2382
      %v2384 = vpop.f32.mrf.mxu0
      %v2385 = vadd.f32 %v2124, %v2384
      %2386 = vdwg.mxu0
      %v2387 = vand.u32 %v1946, 4294901760
      %v2388 = vsub.f32 %v1946, %v2387
      %2389 = vmatprep.subr.mxu0 %v2388
      %v2390 = vand.u32 %v1945, 4294901760
      %v2391 = vsub.f32 %v1945, %v2390
      %2392 = vmatpush1.msra.mxu0 %v2391
      %v2393 = vand.u32 %v1944, 4294901760
      %v2394 = vsub.f32 %v1944, %v2393
      %2395 = vmatprep.subr.mxu0 %v2394
      %v2396 = vand.u32 %v1943, 4294901760
      %v2397 = vsub.f32 %v1943, %v2396
      %2398 = vmatpush1.msra.mxu0 %v2397
      %v2399 = vand.u32 %v1916, 4294901760
      %v2400 = vsub.f32 %v1916, %v2399
      %2401 = vmatprep.subr.mxu0 %v2400
      %v2402 = vand.u32 %v1915, 4294901760
      %v2403 = vsub.f32 %v1915, %v2402
      %2404 = vmatpush1.msra.mxu0 %v2403
      %v2405 = vand.u32 %v1914, 4294901760
      %v2406 = vsub.f32 %v1914, %v2405
      %2407 = vmatprep.subr.mxu0 %v2406
      %v2408 = vand.u32 %v1913, 4294901760
      %v2409 = vsub.f32 %v1913, %v2408
      %2410 = vmatpush1.msra.mxu0 %v2409
      %v2411 = vand.u32 %v1886, 4294901760
      %v2412 = vsub.f32 %v1886, %v2411
      %2413 = vmatprep.subr.mxu0 %v2412
      %v2414 = vand.u32 %v1885, 4294901760
      %v2415 = vsub.f32 %v1885, %v2414
      %2416 = vmatpush1.msra.mxu0 %v2415
      %v2417 = vand.u32 %v1884, 4294901760
      %v2418 = vsub.f32 %v1884, %v2417
      %2419 = vmatprep.subr.mxu0 %v2418
      %v2420 = vand.u32 %v1883, 4294901760
      %v2421 = vsub.f32 %v1883, %v2420
      %2422 = vmatpush1.msra.mxu0 %v2421
      %v2423 = vand.u32 %v1735, 4294901760
      %v2424 = vsub.f32 %v1735, %v2423
      %2425 = vmatprep.subr.mxu0 %v2424
      %v2426 = vand.u32 %v1734, 4294901760
      %v2427 = vsub.f32 %v1734, %v2426
      %2428 = vmatpush1.msra.mxu0 %v2427
      %v2429 = vand.u32 %v1733, 4294901760
      %v2430 = vsub.f32 %v1733, %v2429
      %2431 = vmatprep.subr.mxu0 %v2430
      %v2432 = vand.u32 %v1732, 4294901760
      %v2433 = vsub.f32 %v1732, %v2432
      %2434 = vmatpush1.msra.mxu0 %v2433
      %v2435 = vand.u32 %v1856, 4294901760
      %v2436 = vsub.f32 %v1856, %v2435
      %2437 = vmatprep.subr.mxu0 %v2436
      %v2438 = vand.u32 %v1855, 4294901760
      %v2439 = vsub.f32 %v1855, %v2438
      %2440 = vmatpush1.msra.mxu0 %v2439
      %v2441 = vand.u32 %v1854, 4294901760
      %v2442 = vsub.f32 %v1854, %v2441
      %2443 = vmatprep.subr.mxu0 %v2442
      %v2444 = vand.u32 %v1853, 4294901760
      %v2445 = vsub.f32 %v1853, %v2444
      %2446 = vmatpush1.msra.mxu0 %v2445
      %v2447 = vand.u32 %v1826, 4294901760
      %v2448 = vsub.f32 %v1826, %v2447
      %2449 = vmatprep.subr.mxu0 %v2448
      %v2450 = vand.u32 %v1825, 4294901760
      %v2451 = vsub.f32 %v1825, %v2450
      %2452 = vmatpush1.msra.mxu0 %v2451
      %v2453 = vand.u32 %v1824, 4294901760
      %v2454 = vsub.f32 %v1824, %v2453
      %2455 = vmatprep.subr.mxu0 %v2454
      %v2456 = vand.u32 %v1823, 4294901760
      %v2457 = vsub.f32 %v1823, %v2456
      %2458 = vmatpush1.msra.mxu0 %v2457
      %v2459 = vand.u32 %v1796, 4294901760
      %v2460 = vsub.f32 %v1796, %v2459
      %2461 = vmatprep.subr.mxu0 %v2460
      %v2462 = vand.u32 %v1795, 4294901760
      %v2463 = vsub.f32 %v1795, %v2462
      %2464 = vmatpush1.msra.mxu0 %v2463
      %v2465 = vand.u32 %v1794, 4294901760
      %v2466 = vsub.f32 %v1794, %v2465
      %2467 = vmatprep.subr.mxu0 %v2466
      %v2468 = vand.u32 %v1793, 4294901760
      %v2469 = vsub.f32 %v1793, %v2468
      %2470 = vmatpush1.msra.mxu0 %v2469
      %v2471 = vand.u32 %v1766, 4294901760
      %v2472 = vsub.f32 %v1766, %v2471
      %2473 = vmatprep.subr.mxu0 %v2472
      %v2474 = vand.u32 %v1765, 4294901760
      %v2475 = vsub.f32 %v1765, %v2474
      %2476 = vmatpush1.msra.mxu0 %v2475
      %v2477 = vand.u32 %v1764, 4294901760
      %v2478 = vsub.f32 %v1764, %v2477
      %2479 = vmatprep.subr.mxu0 %v2478
      %v2480 = vand.u32 %v1763, 4294901760
      %v2481 = vsub.f32 %v1763, %v2480
      %2482 = vmatpush1.msra.mxu0 %v2481
      %2483 = vmatprep.subr.mxu0 0.0
      %2484 = vmatpush2.msra.mxu0 0.0
      %2485 = vmatprep.subr.mxu0 0.0
      %2486 = vmatpush2.msra.mxu0 0.0
      %2487 = vmatprep.subr.mxu0 0.0
      %2488 = vmatpush2.msra.mxu0 0.0
      %2489 = vmatprep.subr.mxu0 0.0
      %2490 = vmatpush2.msra.mxu0 0.0
      %2491 = vmatprep.subr.mxu0 0.0
      %2492 = vmatpush2.msra.mxu0 0.0
      %2493 = vmatprep.subr.mxu0 0.0
      %2494 = vmatpush2.msra.mxu0 0.0
      %2495 = vmatprep.subr.mxu0 0.0
      %2496 = vmatpush2.msra.mxu0 0.0
      %2497 = vmatprep.subr.mxu0 0.0
      %2498 = vmatpush2.msra.mxu0 0.0
      %2499 = vmatprep.subr.mxu0 0.0
      %2500 = vmatpush2.msra.mxu0 0.0
      %2501 = vmatprep.subr.mxu0 0.0
      %2502 = vmatpush2.msra.mxu0 0.0
      %2503 = vmatprep.subr.mxu0 0.0
      %2504 = vmatpush2.msra.mxu0 0.0
      %2505 = vmatprep.subr.mxu0 0.0
      %2506 = vmatpush2.msra.mxu0 0.0
      %2507 = vmatprep.subr.mxu0 0.0
      %2508 = vmatpush2.msra.mxu0 0.0
      %2509 = vmatprep.subr.mxu0 0.0
      %2510 = vmatpush2.msra.mxu0 0.0
      %v2511 = vand.u32 %v1976, 4294901760
      %v2512 = vsub.f32 %v1976, %v2511
      %2513 = vmatprep.subr.mxu0 %v2512
      %v2514 = vand.u32 %v1975, 4294901760
      %v2515 = vsub.f32 %v1975, %v2514
      %2516 = vmatpush2.msra.mxu0 %v2515
      %v2517 = vand.u32 %v1974, 4294901760
      %v2518 = vsub.f32 %v1974, %v2517
      %2519 = vmatprep.subr.mxu0 %v2518
      %v2520 = vand.u32 %v1973, 4294901760
      %v2521 = vsub.f32 %v1973, %v2520
      %2522 = vmatpush2.msra.mxu0 %v2521
      %v2523 = vand.u32 %v1988, 4294901760
      %v2524 = vsub.f32 %v1988, %v2523
      %2525 = vmatprep.mubr.f32.mxu0 %v2524
      %v2526 = vand.u32 %v469, 4294901760
      %v2527 = vsub.f32 %v469, %v2526
      %2528 = vmatmul.mubr.f32.gmra.mxu0 %v2527
      %v2529 = vpop.f32.mrf.mxu0
      %v2530 = vadd.f32 %v2375, %v2529
      %v2531 = vpop.f32.mrf.mxu0
      %v2532 = vadd.f32 %v2377, %v2531
      %v2533 = vand.u32 %v1991, 4294901760
      %v2534 = vsub.f32 %v1991, %v2533
      %2535 = vmatprep.mubr.f32.mxu0 %v2534
      %v2536 = vand.u32 %v471, 4294901760
      %v2537 = vsub.f32 %v471, %v2536
      %2538 = vmatmul.mubr.f32.gmra.mxu0 %v2537
      %v2539 = vpop.f32.mrf.mxu0
      %v2540 = vadd.f32 %v2383, %v2539
      %v2541 = vpop.f32.mrf.mxu0
      %v2542 = vadd.f32 %v2385, %v2541
      %2543 = vdwg.mxu0
      %v2544 = vand.u32 %v1946, 4294901760
      %2545 = vmatprep.subr.mxu0 %v2544
      %v2546 = vand.u32 %v1945, 4294901760
      %2547 = vmatpush1.msra.mxu0 %v2546
      %v2548 = vand.u32 %v1944, 4294901760
      %2549 = vmatprep.subr.mxu0 %v2548
      %v2550 = vand.u32 %v1943, 4294901760
      %2551 = vmatpush1.msra.mxu0 %v2550
      %v2552 = vand.u32 %v1916, 4294901760
      %2553 = vmatprep.subr.mxu0 %v2552
      %v2554 = vand.u32 %v1915, 4294901760
      %2555 = vmatpush1.msra.mxu0 %v2554
      %v2556 = vand.u32 %v1914, 4294901760
      %2557 = vmatprep.subr.mxu0 %v2556
      %v2558 = vand.u32 %v1913, 4294901760
      %2559 = vmatpush1.msra.mxu0 %v2558
      %v2560 = vand.u32 %v1886, 4294901760
      %2561 = vmatprep.subr.mxu0 %v2560
      %v2562 = vand.u32 %v1885, 4294901760
      %2563 = vmatpush1.msra.mxu0 %v2562
      %v2564 = vand.u32 %v1884, 4294901760
      %2565 = vmatprep.subr.mxu0 %v2564
      %v2566 = vand.u32 %v1883, 4294901760
      %2567 = vmatpush1.msra.mxu0 %v2566
      %v2568 = vand.u32 %v1735, 4294901760
      %2569 = vmatprep.subr.mxu0 %v2568
      %v2570 = vand.u32 %v1734, 4294901760
      %2571 = vmatpush1.msra.mxu0 %v2570
      %v2572 = vand.u32 %v1733, 4294901760
      %2573 = vmatprep.subr.mxu0 %v2572
      %v2574 = vand.u32 %v1732, 4294901760
      %2575 = vmatpush1.msra.mxu0 %v2574
      %v2576 = vand.u32 %v1856, 4294901760
      %2577 = vmatprep.subr.mxu0 %v2576
      %v2578 = vand.u32 %v1855, 4294901760
      %2579 = vmatpush1.msra.mxu0 %v2578
      %v2580 = vand.u32 %v1854, 4294901760
      %2581 = vmatprep.subr.mxu0 %v2580
      %v2582 = vand.u32 %v1853, 4294901760
      %2583 = vmatpush1.msra.mxu0 %v2582
      %v2584 = vand.u32 %v1826, 4294901760
      %2585 = vmatprep.subr.mxu0 %v2584
      %v2586 = vand.u32 %v1825, 4294901760
      %2587 = vmatpush1.msra.mxu0 %v2586
      %v2588 = vand.u32 %v1824, 4294901760
      %2589 = vmatprep.subr.mxu0 %v2588
      %v2590 = vand.u32 %v1823, 4294901760
      %2591 = vmatpush1.msra.mxu0 %v2590
      %v2592 = vand.u32 %v1796, 4294901760
      %2593 = vmatprep.subr.mxu0 %v2592
      %v2594 = vand.u32 %v1795, 4294901760
      %2595 = vmatpush1.msra.mxu0 %v2594
      %v2596 = vand.u32 %v1794, 4294901760
      %2597 = vmatprep.subr.mxu0 %v2596
      %v2598 = vand.u32 %v1793, 4294901760
      %2599 = vmatpush1.msra.mxu0 %v2598
      %v2600 = vand.u32 %v1766, 4294901760
      %2601 = vmatprep.subr.mxu0 %v2600
      %v2602 = vand.u32 %v1765, 4294901760
      %2603 = vmatpush1.msra.mxu0 %v2602
      %v2604 = vand.u32 %v1764, 4294901760
      %2605 = vmatprep.subr.mxu0 %v2604
      %v2606 = vand.u32 %v1763, 4294901760
      %2607 = vmatpush1.msra.mxu0 %v2606
      %2608 = vmatprep.subr.mxu0 0.0
      %2609 = vmatpush2.msra.mxu0 0.0
      %2610 = vmatprep.subr.mxu0 0.0
      %2611 = vmatpush2.msra.mxu0 0.0
      %2612 = vmatprep.subr.mxu0 0.0
      %2613 = vmatpush2.msra.mxu0 0.0
      %2614 = vmatprep.subr.mxu0 0.0
      %2615 = vmatpush2.msra.mxu0 0.0
      %2616 = vmatprep.subr.mxu0 0.0
      %2617 = vmatpush2.msra.mxu0 0.0
      %2618 = vmatprep.subr.mxu0 0.0
      %2619 = vmatpush2.msra.mxu0 0.0
      %2620 = vmatprep.subr.mxu0 0.0
      %2621 = vmatpush2.msra.mxu0 0.0
      %2622 = vmatprep.subr.mxu0 0.0
      %2623 = vmatpush2.msra.mxu0 0.0
      %2624 = vmatprep.subr.mxu0 0.0
      %2625 = vmatpush2.msra.mxu0 0.0
      %2626 = vmatprep.subr.mxu0 0.0
      %2627 = vmatpush2.msra.mxu0 0.0
      %2628 = vmatprep.subr.mxu0 0.0
      %2629 = vmatpush2.msra.mxu0 0.0
      %2630 = vmatprep.subr.mxu0 0.0
      %2631 = vmatpush2.msra.mxu0 0.0
      %2632 = vmatprep.subr.mxu0 0.0
      %2633 = vmatpush2.msra.mxu0 0.0
      %2634 = vmatprep.subr.mxu0 0.0
      %2635 = vmatpush2.msra.mxu0 0.0
      %v2636 = vand.u32 %v1976, 4294901760
      %2637 = vmatprep.subr.mxu0 %v2636
      %v2638 = vand.u32 %v1975, 4294901760
      %2639 = vmatpush2.msra.mxu0 %v2638
      %v2640 = vand.u32 %v1974, 4294901760
      %2641 = vmatprep.subr.mxu0 %v2640
      %v2642 = vand.u32 %v1973, 4294901760
      %2643 = vmatpush2.msra.mxu0 %v2642
      %v2644 = vand.u32 %v1988, 4294901760
      %v2645 = vsub.f32 %v1988, %v2644
      %v2646 = vand.u32 %v2645, 4294901760
      %2647 = vmatprep.mubr.f32.mxu0 %v2646
      %v2648 = vand.u32 %v469, 4294901760
      %v2649 = vsub.f32 %v469, %v2648
      %v2650 = vand.u32 %v2649, 4294901760
      %2651 = vmatmul.mubr.f32.gmra.mxu0 %v2650
      %v2652 = vpop.f32.mrf.mxu0
      %v2653 = vadd.f32 %v2530, %v2652
      %v2654 = vpop.f32.mrf.mxu0
      %v2655 = vadd.f32 %v2532, %v2654
      %v2656 = vand.u32 %v1991, 4294901760
      %v2657 = vsub.f32 %v1991, %v2656
      %v2658 = vand.u32 %v2657, 4294901760
      %2659 = vmatprep.mubr.f32.mxu0 %v2658
      %v2660 = vand.u32 %v471, 4294901760
      %v2661 = vsub.f32 %v471, %v2660
      %v2662 = vand.u32 %v2661, 4294901760
      %2663 = vmatmul.mubr.f32.gmra.mxu0 %v2662
      %v2664 = vpop.f32.mrf.mxu0
      %v2665 = vadd.f32 %v2540, %v2664
      %v2666 = vpop.f32.mrf.mxu0
      %v2667 = vadd.f32 %v2542, %v2666
      %2668 = vdwg.mxu0
      %v2669 = vand.u32 %v1946, 4294901760
      %v2670 = vsub.f32 %v1946, %v2669
      %v2671 = vand.u32 %v2670, 4294901760
      %2672 = vmatprep.subr.mxu0 %v2671
      %v2673 = vand.u32 %v1945, 4294901760
      %v2674 = vsub.f32 %v1945, %v2673
      %v2675 = vand.u32 %v2674, 4294901760
      %2676 = vmatpush1.msra.mxu0 %v2675
      %v2677 = vand.u32 %v1944, 4294901760
      %v2678 = vsub.f32 %v1944, %v2677
      %v2679 = vand.u32 %v2678, 4294901760
      %2680 = vmatprep.subr.mxu0 %v2679
      %v2681 = vand.u32 %v1943, 4294901760
      %v2682 = vsub.f32 %v1943, %v2681
      %v2683 = vand.u32 %v2682, 4294901760
      %2684 = vmatpush1.msra.mxu0 %v2683
      %v2685 = vand.u32 %v1916, 4294901760
      %v2686 = vsub.f32 %v1916, %v2685
      %v2687 = vand.u32 %v2686, 4294901760
      %2688 = vmatprep.subr.mxu0 %v2687
      %v2689 = vand.u32 %v1915, 4294901760
      %v2690 = vsub.f32 %v1915, %v2689
      %v2691 = vand.u32 %v2690, 4294901760
      %2692 = vmatpush1.msra.mxu0 %v2691
      %v2693 = vand.u32 %v1914, 4294901760
      %v2694 = vsub.f32 %v1914, %v2693
      %v2695 = vand.u32 %v2694, 4294901760
      %2696 = vmatprep.subr.mxu0 %v2695
      %v2697 = vand.u32 %v1913, 4294901760
      %v2698 = vsub.f32 %v1913, %v2697
      %v2699 = vand.u32 %v2698, 4294901760
      %2700 = vmatpush1.msra.mxu0 %v2699
      %v2701 = vand.u32 %v1886, 4294901760
      %v2702 = vsub.f32 %v1886, %v2701
      %v2703 = vand.u32 %v2702, 4294901760
      %2704 = vmatprep.subr.mxu0 %v2703
      %v2705 = vand.u32 %v1885, 4294901760
      %v2706 = vsub.f32 %v1885, %v2705
      %v2707 = vand.u32 %v2706, 4294901760
      %2708 = vmatpush1.msra.mxu0 %v2707
      %v2709 = vand.u32 %v1884, 4294901760
      %v2710 = vsub.f32 %v1884, %v2709
      %v2711 = vand.u32 %v2710, 4294901760
      %2712 = vmatprep.subr.mxu0 %v2711
      %v2713 = vand.u32 %v1883, 4294901760
      %v2714 = vsub.f32 %v1883, %v2713
      %v2715 = vand.u32 %v2714, 4294901760
      %2716 = vmatpush1.msra.mxu0 %v2715
      %v2717 = vand.u32 %v1735, 4294901760
      %v2718 = vsub.f32 %v1735, %v2717
      %v2719 = vand.u32 %v2718, 4294901760
      %2720 = vmatprep.subr.mxu0 %v2719
      %v2721 = vand.u32 %v1734, 4294901760
      %v2722 = vsub.f32 %v1734, %v2721
      %v2723 = vand.u32 %v2722, 4294901760
      %2724 = vmatpush1.msra.mxu0 %v2723
      %v2725 = vand.u32 %v1733, 4294901760
      %v2726 = vsub.f32 %v1733, %v2725
      %v2727 = vand.u32 %v2726, 4294901760
      %2728 = vmatprep.subr.mxu0 %v2727
      %v2729 = vand.u32 %v1732, 4294901760
      %v2730 = vsub.f32 %v1732, %v2729
      %v2731 = vand.u32 %v2730, 4294901760
      %2732 = vmatpush1.msra.mxu0 %v2731
      %v2733 = vand.u32 %v1856, 4294901760
      %v2734 = vsub.f32 %v1856, %v2733
      %v2735 = vand.u32 %v2734, 4294901760
      %2736 = vmatprep.subr.mxu0 %v2735
      %v2737 = vand.u32 %v1855, 4294901760
      %v2738 = vsub.f32 %v1855, %v2737
      %v2739 = vand.u32 %v2738, 4294901760
      %2740 = vmatpush1.msra.mxu0 %v2739
      %v2741 = vand.u32 %v1854, 4294901760
      %v2742 = vsub.f32 %v1854, %v2741
      %v2743 = vand.u32 %v2742, 4294901760
      %2744 = vmatprep.subr.mxu0 %v2743
      %v2745 = vand.u32 %v1853, 4294901760
      %v2746 = vsub.f32 %v1853, %v2745
      %v2747 = vand.u32 %v2746, 4294901760
      %2748 = vmatpush1.msra.mxu0 %v2747
      %v2749 = vand.u32 %v1826, 4294901760
      %v2750 = vsub.f32 %v1826, %v2749
      %v2751 = vand.u32 %v2750, 4294901760
      %2752 = vmatprep.subr.mxu0 %v2751
      %v2753 = vand.u32 %v1825, 4294901760
      %v2754 = vsub.f32 %v1825, %v2753
      %v2755 = vand.u32 %v2754, 4294901760
      %2756 = vmatpush1.msra.mxu0 %v2755
      %v2757 = vand.u32 %v1824, 4294901760
      %v2758 = vsub.f32 %v1824, %v2757
      %v2759 = vand.u32 %v2758, 4294901760
      %2760 = vmatprep.subr.mxu0 %v2759
      %v2761 = vand.u32 %v1823, 4294901760
      %v2762 = vsub.f32 %v1823, %v2761
      %v2763 = vand.u32 %v2762, 4294901760
      %2764 = vmatpush1.msra.mxu0 %v2763
      %v2765 = vand.u32 %v1796, 4294901760
      %v2766 = vsub.f32 %v1796, %v2765
      %v2767 = vand.u32 %v2766, 4294901760
      %2768 = vmatprep.subr.mxu0 %v2767
      %v2769 = vand.u32 %v1795, 4294901760
      %v2770 = vsub.f32 %v1795, %v2769
      %v2771 = vand.u32 %v2770, 4294901760
      %2772 = vmatpush1.msra.mxu0 %v2771
      %v2773 = vand.u32 %v1794, 4294901760
      %v2774 = vsub.f32 %v1794, %v2773
      %v2775 = vand.u32 %v2774, 4294901760
      %2776 = vmatprep.subr.mxu0 %v2775
      %v2777 = vand.u32 %v1793, 4294901760
      %v2778 = vsub.f32 %v1793, %v2777
      %v2779 = vand.u32 %v2778, 4294901760
      %2780 = vmatpush1.msra.mxu0 %v2779
      %v2781 = vand.u32 %v1766, 4294901760
      %v2782 = vsub.f32 %v1766, %v2781
      %v2783 = vand.u32 %v2782, 4294901760
      %2784 = vmatprep.subr.mxu0 %v2783
      %v2785 = vand.u32 %v1765, 4294901760
      %v2786 = vsub.f32 %v1765, %v2785
      %v2787 = vand.u32 %v2786, 4294901760
      %2788 = vmatpush1.msra.mxu0 %v2787
      %v2789 = vand.u32 %v1764, 4294901760
      %v2790 = vsub.f32 %v1764, %v2789
      %v2791 = vand.u32 %v2790, 4294901760
      %2792 = vmatprep.subr.mxu0 %v2791
      %v2793 = vand.u32 %v1763, 4294901760
      %v2794 = vsub.f32 %v1763, %v2793
      %v2795 = vand.u32 %v2794, 4294901760
      %2796 = vmatpush1.msra.mxu0 %v2795
      %2797 = vmatprep.subr.mxu0 0.0
      %2798 = vmatpush2.msra.mxu0 0.0
      %2799 = vmatprep.subr.mxu0 0.0
      %2800 = vmatpush2.msra.mxu0 0.0
      %2801 = vmatprep.subr.mxu0 0.0
      %2802 = vmatpush2.msra.mxu0 0.0
      %2803 = vmatprep.subr.mxu0 0.0
      %2804 = vmatpush2.msra.mxu0 0.0
      %2805 = vmatprep.subr.mxu0 0.0
      %2806 = vmatpush2.msra.mxu0 0.0
      %2807 = vmatprep.subr.mxu0 0.0
      %2808 = vmatpush2.msra.mxu0 0.0
      %2809 = vmatprep.subr.mxu0 0.0
      %2810 = vmatpush2.msra.mxu0 0.0
      %2811 = vmatprep.subr.mxu0 0.0
      %2812 = vmatpush2.msra.mxu0 0.0
      %2813 = vmatprep.subr.mxu0 0.0
      %2814 = vmatpush2.msra.mxu0 0.0
      %2815 = vmatprep.subr.mxu0 0.0
      %2816 = vmatpush2.msra.mxu0 0.0
      %2817 = vmatprep.subr.mxu0 0.0
      %2818 = vmatpush2.msra.mxu0 0.0
      %2819 = vmatprep.subr.mxu0 0.0
      %2820 = vmatpush2.msra.mxu0 0.0
      %2821 = vmatprep.subr.mxu0 0.0
      %2822 = vmatpush2.msra.mxu0 0.0
      %2823 = vmatprep.subr.mxu0 0.0
      %2824 = vmatpush2.msra.mxu0 0.0
      %v2825 = vand.u32 %v1976, 4294901760
      %v2826 = vsub.f32 %v1976, %v2825
      %v2827 = vand.u32 %v2826, 4294901760
      %2828 = vmatprep.subr.mxu0 %v2827
      %v2829 = vand.u32 %v1975, 4294901760
      %v2830 = vsub.f32 %v1975, %v2829
      %v2831 = vand.u32 %v2830, 4294901760
      %2832 = vmatpush2.msra.mxu0 %v2831
      %v2833 = vand.u32 %v1974, 4294901760
      %v2834 = vsub.f32 %v1974, %v2833
      %v2835 = vand.u32 %v2834, 4294901760
      %2836 = vmatprep.subr.mxu0 %v2835
      %v2837 = vand.u32 %v1973, 4294901760
      %v2838 = vsub.f32 %v1973, %v2837
      %v2839 = vand.u32 %v2838, 4294901760
      %2840 = vmatpush2.msra.mxu0 %v2839
      %v2841 = vand.u32 %v1988, 4294901760
      %2842 = vmatprep.mubr.f32.mxu0 %v2841
      %v2843 = vand.u32 %v469, 4294901760
      %2844 = vmatmul.mubr.f32.gmra.mxu0 %v2843
      %v2845 = vpop.f32.mrf.mxu0
      %v2846 = vadd.f32 %v2653, %v2845
      %v2847 = vpop.f32.mrf.mxu0
      %v2848 = vadd.f32 %v2655, %v2847
      %v2849 = vand.u32 %v1991, 4294901760
      %2850 = vmatprep.mubr.f32.mxu0 %v2849
      %v2851 = vand.u32 %v471, 4294901760
      %2852 = vmatmul.mubr.f32.gmra.mxu0 %v2851
      %v2853 = vpop.f32.mrf.mxu0
      %v2854 = vadd.f32 %v2665, %v2853
      %v2855 = vpop.f32.mrf.mxu0
      %v2856 = vadd.f32 %v2667, %v2855
      %2857 = vdwg.mxu0
      %v2858 = vand.u32 %v1946, 4294901760
      %2859 = vmatprep.subr.mxu0 %v2858
      %v2860 = vand.u32 %v1945, 4294901760
      %2861 = vmatpush1.msra.mxu0 %v2860
      %v2862 = vand.u32 %v1944, 4294901760
      %2863 = vmatprep.subr.mxu0 %v2862
      %v2864 = vand.u32 %v1943, 4294901760
      %2865 = vmatpush1.msra.mxu0 %v2864
      %v2866 = vand.u32 %v1916, 4294901760
      %2867 = vmatprep.subr.mxu0 %v2866
      %v2868 = vand.u32 %v1915, 4294901760
      %2869 = vmatpush1.msra.mxu0 %v2868
      %v2870 = vand.u32 %v1914, 4294901760
      %2871 = vmatprep.subr.mxu0 %v2870
      %v2872 = vand.u32 %v1913, 4294901760
      %2873 = vmatpush1.msra.mxu0 %v2872
      %v2874 = vand.u32 %v1886, 4294901760
      %2875 = vmatprep.subr.mxu0 %v2874
      %v2876 = vand.u32 %v1885, 4294901760
      %2877 = vmatpush1.msra.mxu0 %v2876
      %v2878 = vand.u32 %v1884, 4294901760
      %2879 = vmatprep.subr.mxu0 %v2878
      %v2880 = vand.u32 %v1883, 4294901760
      %2881 = vmatpush1.msra.mxu0 %v2880
      %v2882 = vand.u32 %v1735, 4294901760
      %2883 = vmatprep.subr.mxu0 %v2882
      %v2884 = vand.u32 %v1734, 4294901760
      %2885 = vmatpush1.msra.mxu0 %v2884
      %v2886 = vand.u32 %v1733, 4294901760
      %2887 = vmatprep.subr.mxu0 %v2886
      %v2888 = vand.u32 %v1732, 4294901760
      %2889 = vmatpush1.msra.mxu0 %v2888
      %v2890 = vand.u32 %v1856, 4294901760
      %2891 = vmatprep.subr.mxu0 %v2890
      %v2892 = vand.u32 %v1855, 4294901760
      %2893 = vmatpush1.msra.mxu0 %v2892
      %v2894 = vand.u32 %v1854, 4294901760
      %2895 = vmatprep.subr.mxu0 %v2894
      %v2896 = vand.u32 %v1853, 4294901760
      %2897 = vmatpush1.msra.mxu0 %v2896
      %v2898 = vand.u32 %v1826, 4294901760
      %2899 = vmatprep.subr.mxu0 %v2898
      %v2900 = vand.u32 %v1825, 4294901760
      %2901 = vmatpush1.msra.mxu0 %v2900
      %v2902 = vand.u32 %v1824, 4294901760
      %2903 = vmatprep.subr.mxu0 %v2902
      %v2904 = vand.u32 %v1823, 4294901760
      %2905 = vmatpush1.msra.mxu0 %v2904
      %v2906 = vand.u32 %v1796, 4294901760
      %2907 = vmatprep.subr.mxu0 %v2906
      %v2908 = vand.u32 %v1795, 4294901760
      %2909 = vmatpush1.msra.mxu0 %v2908
      %v2910 = vand.u32 %v1794, 4294901760
      %2911 = vmatprep.subr.mxu0 %v2910
      %v2912 = vand.u32 %v1793, 4294901760
      %2913 = vmatpush1.msra.mxu0 %v2912
      %v2914 = vand.u32 %v1766, 4294901760
      %2915 = vmatprep.subr.mxu0 %v2914
      %v2916 = vand.u32 %v1765, 4294901760
      %2917 = vmatpush1.msra.mxu0 %v2916
      %v2918 = vand.u32 %v1764, 4294901760
      %2919 = vmatprep.subr.mxu0 %v2918
      %v2920 = vand.u32 %v1763, 4294901760
      %2921 = vmatpush1.msra.mxu0 %v2920
      %2922 = vmatprep.subr.mxu0 0.0
      %2923 = vmatpush2.msra.mxu0 0.0
      %2924 = vmatprep.subr.mxu0 0.0
      %2925 = vmatpush2.msra.mxu0 0.0
      %2926 = vmatprep.subr.mxu0 0.0
      %2927 = vmatpush2.msra.mxu0 0.0
      %2928 = vmatprep.subr.mxu0 0.0
      %2929 = vmatpush2.msra.mxu0 0.0
      %2930 = vmatprep.subr.mxu0 0.0
      %2931 = vmatpush2.msra.mxu0 0.0
      %2932 = vmatprep.subr.mxu0 0.0
      %2933 = vmatpush2.msra.mxu0 0.0
      %2934 = vmatprep.subr.mxu0 0.0
      %2935 = vmatpush2.msra.mxu0 0.0
      %2936 = vmatprep.subr.mxu0 0.0
      %2937 = vmatpush2.msra.mxu0 0.0
      %2938 = vmatprep.subr.mxu0 0.0
      %2939 = vmatpush2.msra.mxu0 0.0
      %2940 = vmatprep.subr.mxu0 0.0
      %2941 = vmatpush2.msra.mxu0 0.0
      %2942 = vmatprep.subr.mxu0 0.0
      %2943 = vmatpush2.msra.mxu0 0.0
      %2944 = vmatprep.subr.mxu0 0.0
      %2945 = vmatpush2.msra.mxu0 0.0
      %2946 = vmatprep.subr.mxu0 0.0
      %2947 = vmatpush2.msra.mxu0 0.0
      %2948 = vmatprep.subr.mxu0 0.0
      %2949 = vmatpush2.msra.mxu0 0.0
      %v2950 = vand.u32 %v1976, 4294901760
      %2951 = vmatprep.subr.mxu0 %v2950
      %v2952 = vand.u32 %v1975, 4294901760
      %2953 = vmatpush2.msra.mxu0 %v2952
      %v2954 = vand.u32 %v1974, 4294901760
      %2955 = vmatprep.subr.mxu0 %v2954
      %v2956 = vand.u32 %v1973, 4294901760
      %2957 = vmatpush2.msra.mxu0 %v2956
      %v2958 = vand.u32 %v1988, 4294901760
      %2959 = vmatprep.mubr.f32.mxu0 %v2958
      %v2960 = vand.u32 %v469, 4294901760
      %2961 = vmatmul.mubr.f32.gmra.mxu0 %v2960
      %v2962 = vpop.f32.mrf.mxu0
      %v2963 = vadd.f32 %v2846, %v2962
      %v2964 = vpop.f32.mrf.mxu0
      %v2965 = vadd.f32 %v2848, %v2964
      %v2966 = vand.u32 %v1991, 4294901760
      %2967 = vmatprep.mubr.f32.mxu0 %v2966
      %v2968 = vand.u32 %v471, 4294901760
      %2969 = vmatmul.mubr.f32.gmra.mxu0 %v2968
      %v2970 = vpop.f32.mrf.mxu0
      %v2971 = vadd.f32 %v2854, %v2970
      %v2972 = vpop.f32.mrf.mxu0
      %v2973 = vadd.f32 %v2856, %v2972
      %2974 = vdwg.mxu0
      %v2976 = vsel %vm497, %v475, 0
      %v2979 = vsel %vm497, %v476, 0
      %2981 = vmatprep.subr.mxu0 0.0
      %2982 = vmatpush1.msra.mxu0 0.0
      %2983 = vmatprep.subr.mxu0 0.0
      %2984 = vmatpush1.msra.mxu0 0.0
      %2985 = vmatprep.subr.mxu0 0.0
      %2986 = vmatpush1.msra.mxu0 0.0
      %2987 = vmatprep.subr.mxu0 0.0
      %2988 = vmatpush1.msra.mxu0 0.0
      %2989 = vmatprep.subr.mxu0 0.0
      %2990 = vmatpush1.msra.mxu0 0.0
      %2991 = vmatprep.subr.mxu0 0.0
      %2992 = vmatpush1.msra.mxu0 0.0
      %2993 = vmatprep.subr.mxu0 0.0
      %2994 = vmatpush1.msra.mxu0 0.0
      %2995 = vmatprep.subr.mxu0 0.0
      %2996 = vmatpush1.msra.mxu0 0.0
      %2997 = vmatprep.subr.mxu0 0.0
      %2998 = vmatpush1.msra.mxu0 0.0
      %2999 = vmatprep.subr.mxu0 0.0
      %3000 = vmatpush1.msra.mxu0 0.0
      %3001 = vmatprep.subr.mxu0 0.0
      %3002 = vmatpush1.msra.mxu0 0.0
      %3003 = vmatprep.subr.mxu0 0.0
      %3004 = vmatpush1.msra.mxu0 0.0
      %3005 = vmatprep.subr.mxu0 0.0
      %3006 = vmatpush1.msra.mxu0 0.0
      %3007 = vmatprep.subr.mxu0 0.0
      %3008 = vmatpush1.msra.mxu0 0.0
      %v3009 = vand.u32 %v2973, 4294901760
      %3010 = vmatprep.subr.mxu0 %v3009
      %v3011 = vand.u32 %v2971, 4294901760
      %3012 = vmatpush1.msra.mxu0 %v3011
      %v3013 = vand.u32 %v2965, 4294901760
      %3014 = vmatprep.subr.mxu0 %v3013
      %v3015 = vand.u32 %v2963, 4294901760
      %3016 = vmatpush1.msra.mxu0 %v3015
      %3017 = vmatprep.subr.mxu0 0.0
      %3018 = vmatpush2.msra.mxu0 0.0
      %3019 = vmatprep.subr.mxu0 0.0
      %3020 = vmatpush2.msra.mxu0 0.0
      %3021 = vmatprep.subr.mxu0 0.0
      %3022 = vmatpush2.msra.mxu0 0.0
      %3023 = vmatprep.subr.mxu0 0.0
      %3024 = vmatpush2.msra.mxu0 0.0
      %3025 = vmatprep.subr.mxu0 0.0
      %3026 = vmatpush2.msra.mxu0 0.0
      %3027 = vmatprep.subr.mxu0 0.0
      %3028 = vmatpush2.msra.mxu0 0.0
      %3029 = vmatprep.subr.mxu0 0.0
      %3030 = vmatpush2.msra.mxu0 0.0
      %3031 = vmatprep.subr.mxu0 0.0
      %3032 = vmatpush2.msra.mxu0 0.0
      %3033 = vmatprep.subr.mxu0 0.0
      %3034 = vmatpush2.msra.mxu0 0.0
      %3035 = vmatprep.subr.mxu0 0.0
      %3036 = vmatpush2.msra.mxu0 0.0
      %3037 = vmatprep.subr.mxu0 0.0
      %3038 = vmatpush2.msra.mxu0 0.0
      %3039 = vmatprep.subr.mxu0 0.0
      %3040 = vmatpush2.msra.mxu0 0.0
      %3041 = vmatprep.subr.mxu0 0.0
      %3042 = vmatpush2.msra.mxu0 0.0
      %3043 = vmatprep.subr.mxu0 0.0
      %3044 = vmatpush2.msra.mxu0 0.0
      %3045 = vmatprep.subr.mxu0 0.0
      %3046 = vmatpush2.msra.mxu0 0.0
      %3047 = vmatprep.subr.mxu0 0.0
      %3048 = vmatpush2.msra.mxu0 0.0
      %3049 = vmatprep.mubr.f32.mxu0 0.0
      %v3050 = vand.u32 %v2976, 4294901760
      %v3051 = vsub.f32 %v2976, %v3050
      %v3052 = vand.u32 %v3051, 4294901760
      %v3053 = vsub.f32 %v3051, %v3052
      %v3054 = vand.u32 %v3053, 4294901760
      %3055 = vmatmul.mubr.f32.gmra.mxu0 %v3054
      %v3056 = vpop.f32.mrf.mxu0
      %v3057 = vadd.f32 0.0, %v3056
      %v3058 = vpop.f32.mrf.mxu0
      %v3059 = vadd.f32 0.0, %v3058
      %3060 = vmatprep.mubr.f32.mxu0 0.0
      %v3061 = vand.u32 %v2979, 4294901760
      %v3062 = vsub.f32 %v2979, %v3061
      %v3063 = vand.u32 %v3062, 4294901760
      %v3064 = vsub.f32 %v3062, %v3063
      %v3065 = vand.u32 %v3064, 4294901760
      %3066 = vmatmul.mubr.f32.gmra.mxu0 %v3065
      %v3067 = vpop.f32.mrf.mxu0
      %v3068 = vadd.f32 0.0, %v3067
      %v3069 = vpop.f32.mrf.mxu0
      %v3070 = vadd.f32 0.0, %v3069
      %3071 = vdwg.mxu0
      %3072 = vmatprep.subr.mxu0 0.0
      %3073 = vmatpush1.msra.mxu0 0.0
      %3074 = vmatprep.subr.mxu0 0.0
      %3075 = vmatpush1.msra.mxu0 0.0
      %3076 = vmatprep.subr.mxu0 0.0
      %3077 = vmatpush1.msra.mxu0 0.0
      %3078 = vmatprep.subr.mxu0 0.0
      %3079 = vmatpush1.msra.mxu0 0.0
      %3080 = vmatprep.subr.mxu0 0.0
      %3081 = vmatpush1.msra.mxu0 0.0
      %3082 = vmatprep.subr.mxu0 0.0
      %3083 = vmatpush1.msra.mxu0 0.0
      %3084 = vmatprep.subr.mxu0 0.0
      %3085 = vmatpush1.msra.mxu0 0.0
      %3086 = vmatprep.subr.mxu0 0.0
      %3087 = vmatpush1.msra.mxu0 0.0
      %3088 = vmatprep.subr.mxu0 0.0
      %3089 = vmatpush1.msra.mxu0 0.0
      %3090 = vmatprep.subr.mxu0 0.0
      %3091 = vmatpush1.msra.mxu0 0.0
      %3092 = vmatprep.subr.mxu0 0.0
      %3093 = vmatpush1.msra.mxu0 0.0
      %3094 = vmatprep.subr.mxu0 0.0
      %3095 = vmatpush1.msra.mxu0 0.0
      %3096 = vmatprep.subr.mxu0 0.0
      %3097 = vmatpush1.msra.mxu0 0.0
      %3098 = vmatprep.subr.mxu0 0.0
      %3099 = vmatpush1.msra.mxu0 0.0
      %v3100 = vand.u32 %v2973, 4294901760
      %v3101 = vsub.f32 %v2973, %v3100
      %v3102 = vand.u32 %v3101, 4294901760
      %v3103 = vsub.f32 %v3101, %v3102
      %v3104 = vand.u32 %v3103, 4294901760
      %3105 = vmatprep.subr.mxu0 %v3104
      %v3106 = vand.u32 %v2971, 4294901760
      %v3107 = vsub.f32 %v2971, %v3106
      %v3108 = vand.u32 %v3107, 4294901760
      %v3109 = vsub.f32 %v3107, %v3108
      %v3110 = vand.u32 %v3109, 4294901760
      %3111 = vmatpush1.msra.mxu0 %v3110
      %v3112 = vand.u32 %v2965, 4294901760
      %v3113 = vsub.f32 %v2965, %v3112
      %v3114 = vand.u32 %v3113, 4294901760
      %v3115 = vsub.f32 %v3113, %v3114
      %v3116 = vand.u32 %v3115, 4294901760
      %3117 = vmatprep.subr.mxu0 %v3116
      %v3118 = vand.u32 %v2963, 4294901760
      %v3119 = vsub.f32 %v2963, %v3118
      %v3120 = vand.u32 %v3119, 4294901760
      %v3121 = vsub.f32 %v3119, %v3120
      %v3122 = vand.u32 %v3121, 4294901760
      %3123 = vmatpush1.msra.mxu0 %v3122
      %3124 = vmatprep.subr.mxu0 0.0
      %3125 = vmatpush2.msra.mxu0 0.0
      %3126 = vmatprep.subr.mxu0 0.0
      %3127 = vmatpush2.msra.mxu0 0.0
      %3128 = vmatprep.subr.mxu0 0.0
      %3129 = vmatpush2.msra.mxu0 0.0
      %3130 = vmatprep.subr.mxu0 0.0
      %3131 = vmatpush2.msra.mxu0 0.0
      %3132 = vmatprep.subr.mxu0 0.0
      %3133 = vmatpush2.msra.mxu0 0.0
      %3134 = vmatprep.subr.mxu0 0.0
      %3135 = vmatpush2.msra.mxu0 0.0
      %3136 = vmatprep.subr.mxu0 0.0
      %3137 = vmatpush2.msra.mxu0 0.0
      %3138 = vmatprep.subr.mxu0 0.0
      %3139 = vmatpush2.msra.mxu0 0.0
      %3140 = vmatprep.subr.mxu0 0.0
      %3141 = vmatpush2.msra.mxu0 0.0
      %3142 = vmatprep.subr.mxu0 0.0
      %3143 = vmatpush2.msra.mxu0 0.0
      %3144 = vmatprep.subr.mxu0 0.0
      %3145 = vmatpush2.msra.mxu0 0.0
      %3146 = vmatprep.subr.mxu0 0.0
      %3147 = vmatpush2.msra.mxu0 0.0
      %3148 = vmatprep.subr.mxu0 0.0
      %3149 = vmatpush2.msra.mxu0 0.0
      %3150 = vmatprep.subr.mxu0 0.0
      %3151 = vmatpush2.msra.mxu0 0.0
      %3152 = vmatprep.subr.mxu0 0.0
      %3153 = vmatpush2.msra.mxu0 0.0
      %3154 = vmatprep.subr.mxu0 0.0
      %3155 = vmatpush2.msra.mxu0 0.0
      %3156 = vmatprep.mubr.f32.mxu0 0.0
      %v3157 = vand.u32 %v2976, 4294901760
      %3158 = vmatmul.mubr.f32.gmra.mxu0 %v3157
      %v3159 = vpop.f32.mrf.mxu0
      %v3160 = vadd.f32 %v3057, %v3159
      %v3161 = vpop.f32.mrf.mxu0
      %v3162 = vadd.f32 %v3059, %v3161
      %3163 = vmatprep.mubr.f32.mxu0 0.0
      %v3164 = vand.u32 %v2979, 4294901760
      %3165 = vmatmul.mubr.f32.gmra.mxu0 %v3164
      %v3166 = vpop.f32.mrf.mxu0
      %v3167 = vadd.f32 %v3068, %v3166
      %v3168 = vpop.f32.mrf.mxu0
      %v3169 = vadd.f32 %v3070, %v3168
      %3170 = vdwg.mxu0
      %3171 = vmatprep.subr.mxu0 0.0
      %3172 = vmatpush1.msra.mxu0 0.0
      %3173 = vmatprep.subr.mxu0 0.0
      %3174 = vmatpush1.msra.mxu0 0.0
      %3175 = vmatprep.subr.mxu0 0.0
      %3176 = vmatpush1.msra.mxu0 0.0
      %3177 = vmatprep.subr.mxu0 0.0
      %3178 = vmatpush1.msra.mxu0 0.0
      %3179 = vmatprep.subr.mxu0 0.0
      %3180 = vmatpush1.msra.mxu0 0.0
      %3181 = vmatprep.subr.mxu0 0.0
      %3182 = vmatpush1.msra.mxu0 0.0
      %3183 = vmatprep.subr.mxu0 0.0
      %3184 = vmatpush1.msra.mxu0 0.0
      %3185 = vmatprep.subr.mxu0 0.0
      %3186 = vmatpush1.msra.mxu0 0.0
      %3187 = vmatprep.subr.mxu0 0.0
      %3188 = vmatpush1.msra.mxu0 0.0
      %3189 = vmatprep.subr.mxu0 0.0
      %3190 = vmatpush1.msra.mxu0 0.0
      %3191 = vmatprep.subr.mxu0 0.0
      %3192 = vmatpush1.msra.mxu0 0.0
      %3193 = vmatprep.subr.mxu0 0.0
      %3194 = vmatpush1.msra.mxu0 0.0
      %3195 = vmatprep.subr.mxu0 0.0
      %3196 = vmatpush1.msra.mxu0 0.0
      %3197 = vmatprep.subr.mxu0 0.0
      %3198 = vmatpush1.msra.mxu0 0.0
      %v3199 = vand.u32 %v2973, 4294901760
      %v3200 = vsub.f32 %v2973, %v3199
      %3201 = vmatprep.subr.mxu0 %v3200
      %v3202 = vand.u32 %v2971, 4294901760
      %v3203 = vsub.f32 %v2971, %v3202
      %3204 = vmatpush1.msra.mxu0 %v3203
      %v3205 = vand.u32 %v2965, 4294901760
      %v3206 = vsub.f32 %v2965, %v3205
      %3207 = vmatprep.subr.mxu0 %v3206
      %v3208 = vand.u32 %v2963, 4294901760
      %v3209 = vsub.f32 %v2963, %v3208
      %3210 = vmatpush1.msra.mxu0 %v3209
      %3211 = vmatprep.subr.mxu0 0.0
      %3212 = vmatpush2.msra.mxu0 0.0
      %3213 = vmatprep.subr.mxu0 0.0
      %3214 = vmatpush2.msra.mxu0 0.0
      %3215 = vmatprep.subr.mxu0 0.0
      %3216 = vmatpush2.msra.mxu0 0.0
      %3217 = vmatprep.subr.mxu0 0.0
      %3218 = vmatpush2.msra.mxu0 0.0
      %3219 = vmatprep.subr.mxu0 0.0
      %3220 = vmatpush2.msra.mxu0 0.0
      %3221 = vmatprep.subr.mxu0 0.0
      %3222 = vmatpush2.msra.mxu0 0.0
      %3223 = vmatprep.subr.mxu0 0.0
      %3224 = vmatpush2.msra.mxu0 0.0
      %3225 = vmatprep.subr.mxu0 0.0
      %3226 = vmatpush2.msra.mxu0 0.0
      %3227 = vmatprep.subr.mxu0 0.0
      %3228 = vmatpush2.msra.mxu0 0.0
      %3229 = vmatprep.subr.mxu0 0.0
      %3230 = vmatpush2.msra.mxu0 0.0
      %3231 = vmatprep.subr.mxu0 0.0
      %3232 = vmatpush2.msra.mxu0 0.0
      %3233 = vmatprep.subr.mxu0 0.0
      %3234 = vmatpush2.msra.mxu0 0.0
      %3235 = vmatprep.subr.mxu0 0.0
      %3236 = vmatpush2.msra.mxu0 0.0
      %3237 = vmatprep.subr.mxu0 0.0
      %3238 = vmatpush2.msra.mxu0 0.0
      %3239 = vmatprep.subr.mxu0 0.0
      %3240 = vmatpush2.msra.mxu0 0.0
      %3241 = vmatprep.subr.mxu0 0.0
      %3242 = vmatpush2.msra.mxu0 0.0
      %3243 = vmatprep.mubr.f32.mxu0 0.0
      %v3244 = vand.u32 %v2976, 4294901760
      %v3245 = vsub.f32 %v2976, %v3244
      %3246 = vmatmul.mubr.f32.gmra.mxu0 %v3245
      %v3247 = vpop.f32.mrf.mxu0
      %v3248 = vadd.f32 %v3160, %v3247
      %v3249 = vpop.f32.mrf.mxu0
      %v3250 = vadd.f32 %v3162, %v3249
      %3251 = vmatprep.mubr.f32.mxu0 0.0
      %v3252 = vand.u32 %v2979, 4294901760
      %v3253 = vsub.f32 %v2979, %v3252
      %3254 = vmatmul.mubr.f32.gmra.mxu0 %v3253
      %v3255 = vpop.f32.mrf.mxu0
      %v3256 = vadd.f32 %v3167, %v3255
      %v3257 = vpop.f32.mrf.mxu0
      %v3258 = vadd.f32 %v3169, %v3257
      %3259 = vdwg.mxu0
      %3260 = vmatprep.subr.mxu0 0.0
      %3261 = vmatpush1.msra.mxu0 0.0
      %3262 = vmatprep.subr.mxu0 0.0
      %3263 = vmatpush1.msra.mxu0 0.0
      %3264 = vmatprep.subr.mxu0 0.0
      %3265 = vmatpush1.msra.mxu0 0.0
      %3266 = vmatprep.subr.mxu0 0.0
      %3267 = vmatpush1.msra.mxu0 0.0
      %3268 = vmatprep.subr.mxu0 0.0
      %3269 = vmatpush1.msra.mxu0 0.0
      %3270 = vmatprep.subr.mxu0 0.0
      %3271 = vmatpush1.msra.mxu0 0.0
      %3272 = vmatprep.subr.mxu0 0.0
      %3273 = vmatpush1.msra.mxu0 0.0
      %3274 = vmatprep.subr.mxu0 0.0
      %3275 = vmatpush1.msra.mxu0 0.0
      %3276 = vmatprep.subr.mxu0 0.0
      %3277 = vmatpush1.msra.mxu0 0.0
      %3278 = vmatprep.subr.mxu0 0.0
      %3279 = vmatpush1.msra.mxu0 0.0
      %3280 = vmatprep.subr.mxu0 0.0
      %3281 = vmatpush1.msra.mxu0 0.0
      %3282 = vmatprep.subr.mxu0 0.0
      %3283 = vmatpush1.msra.mxu0 0.0
      %3284 = vmatprep.subr.mxu0 0.0
      %3285 = vmatpush1.msra.mxu0 0.0
      %3286 = vmatprep.subr.mxu0 0.0
      %3287 = vmatpush1.msra.mxu0 0.0
      %v3288 = vand.u32 %v2973, 4294901760
      %3289 = vmatprep.subr.mxu0 %v3288
      %v3290 = vand.u32 %v2971, 4294901760
      %3291 = vmatpush1.msra.mxu0 %v3290
      %v3292 = vand.u32 %v2965, 4294901760
      %3293 = vmatprep.subr.mxu0 %v3292
      %v3294 = vand.u32 %v2963, 4294901760
      %3295 = vmatpush1.msra.mxu0 %v3294
      %3296 = vmatprep.subr.mxu0 0.0
      %3297 = vmatpush2.msra.mxu0 0.0
      %3298 = vmatprep.subr.mxu0 0.0
      %3299 = vmatpush2.msra.mxu0 0.0
      %3300 = vmatprep.subr.mxu0 0.0
      %3301 = vmatpush2.msra.mxu0 0.0
      %3302 = vmatprep.subr.mxu0 0.0
      %3303 = vmatpush2.msra.mxu0 0.0
      %3304 = vmatprep.subr.mxu0 0.0
      %3305 = vmatpush2.msra.mxu0 0.0
      %3306 = vmatprep.subr.mxu0 0.0
      %3307 = vmatpush2.msra.mxu0 0.0
      %3308 = vmatprep.subr.mxu0 0.0
      %3309 = vmatpush2.msra.mxu0 0.0
      %3310 = vmatprep.subr.mxu0 0.0
      %3311 = vmatpush2.msra.mxu0 0.0
      %3312 = vmatprep.subr.mxu0 0.0
      %3313 = vmatpush2.msra.mxu0 0.0
      %3314 = vmatprep.subr.mxu0 0.0
      %3315 = vmatpush2.msra.mxu0 0.0
      %3316 = vmatprep.subr.mxu0 0.0
      %3317 = vmatpush2.msra.mxu0 0.0
      %3318 = vmatprep.subr.mxu0 0.0
      %3319 = vmatpush2.msra.mxu0 0.0
      %3320 = vmatprep.subr.mxu0 0.0
      %3321 = vmatpush2.msra.mxu0 0.0
      %3322 = vmatprep.subr.mxu0 0.0
      %3323 = vmatpush2.msra.mxu0 0.0
      %3324 = vmatprep.subr.mxu0 0.0
      %3325 = vmatpush2.msra.mxu0 0.0
      %3326 = vmatprep.subr.mxu0 0.0
      %3327 = vmatpush2.msra.mxu0 0.0
      %3328 = vmatprep.mubr.f32.mxu0 0.0
      %v3329 = vand.u32 %v2976, 4294901760
      %v3330 = vsub.f32 %v2976, %v3329
      %v3331 = vand.u32 %v3330, 4294901760
      %3332 = vmatmul.mubr.f32.gmra.mxu0 %v3331
      %v3333 = vpop.f32.mrf.mxu0
      %v3334 = vadd.f32 %v3248, %v3333
      %v3335 = vpop.f32.mrf.mxu0
      %v3336 = vadd.f32 %v3250, %v3335
      %3337 = vmatprep.mubr.f32.mxu0 0.0
      %v3338 = vand.u32 %v2979, 4294901760
      %v3339 = vsub.f32 %v2979, %v3338
      %v3340 = vand.u32 %v3339, 4294901760
      %3341 = vmatmul.mubr.f32.gmra.mxu0 %v3340
      %v3342 = vpop.f32.mrf.mxu0
      %v3343 = vadd.f32 %v3256, %v3342
      %v3344 = vpop.f32.mrf.mxu0
      %v3345 = vadd.f32 %v3258, %v3344
      %3346 = vdwg.mxu0
      %3347 = vmatprep.subr.mxu0 0.0
      %3348 = vmatpush1.msra.mxu0 0.0
      %3349 = vmatprep.subr.mxu0 0.0
      %3350 = vmatpush1.msra.mxu0 0.0
      %3351 = vmatprep.subr.mxu0 0.0
      %3352 = vmatpush1.msra.mxu0 0.0
      %3353 = vmatprep.subr.mxu0 0.0
      %3354 = vmatpush1.msra.mxu0 0.0
      %3355 = vmatprep.subr.mxu0 0.0
      %3356 = vmatpush1.msra.mxu0 0.0
      %3357 = vmatprep.subr.mxu0 0.0
      %3358 = vmatpush1.msra.mxu0 0.0
      %3359 = vmatprep.subr.mxu0 0.0
      %3360 = vmatpush1.msra.mxu0 0.0
      %3361 = vmatprep.subr.mxu0 0.0
      %3362 = vmatpush1.msra.mxu0 0.0
      %3363 = vmatprep.subr.mxu0 0.0
      %3364 = vmatpush1.msra.mxu0 0.0
      %3365 = vmatprep.subr.mxu0 0.0
      %3366 = vmatpush1.msra.mxu0 0.0
      %3367 = vmatprep.subr.mxu0 0.0
      %3368 = vmatpush1.msra.mxu0 0.0
      %3369 = vmatprep.subr.mxu0 0.0
      %3370 = vmatpush1.msra.mxu0 0.0
      %3371 = vmatprep.subr.mxu0 0.0
      %3372 = vmatpush1.msra.mxu0 0.0
      %3373 = vmatprep.subr.mxu0 0.0
      %3374 = vmatpush1.msra.mxu0 0.0
      %v3375 = vand.u32 %v2973, 4294901760
      %v3376 = vsub.f32 %v2973, %v3375
      %v3377 = vand.u32 %v3376, 4294901760
      %3378 = vmatprep.subr.mxu0 %v3377
      %v3379 = vand.u32 %v2971, 4294901760
      %v3380 = vsub.f32 %v2971, %v3379
      %v3381 = vand.u32 %v3380, 4294901760
      %3382 = vmatpush1.msra.mxu0 %v3381
      %v3383 = vand.u32 %v2965, 4294901760
      %v3384 = vsub.f32 %v2965, %v3383
      %v3385 = vand.u32 %v3384, 4294901760
      %3386 = vmatprep.subr.mxu0 %v3385
      %v3387 = vand.u32 %v2963, 4294901760
      %v3388 = vsub.f32 %v2963, %v3387
      %v3389 = vand.u32 %v3388, 4294901760
      %3390 = vmatpush1.msra.mxu0 %v3389
      %3391 = vmatprep.subr.mxu0 0.0
      %3392 = vmatpush2.msra.mxu0 0.0
      %3393 = vmatprep.subr.mxu0 0.0
      %3394 = vmatpush2.msra.mxu0 0.0
      %3395 = vmatprep.subr.mxu0 0.0
      %3396 = vmatpush2.msra.mxu0 0.0
      %3397 = vmatprep.subr.mxu0 0.0
      %3398 = vmatpush2.msra.mxu0 0.0
      %3399 = vmatprep.subr.mxu0 0.0
      %3400 = vmatpush2.msra.mxu0 0.0
      %3401 = vmatprep.subr.mxu0 0.0
      %3402 = vmatpush2.msra.mxu0 0.0
      %3403 = vmatprep.subr.mxu0 0.0
      %3404 = vmatpush2.msra.mxu0 0.0
      %3405 = vmatprep.subr.mxu0 0.0
      %3406 = vmatpush2.msra.mxu0 0.0
      %3407 = vmatprep.subr.mxu0 0.0
      %3408 = vmatpush2.msra.mxu0 0.0
      %3409 = vmatprep.subr.mxu0 0.0
      %3410 = vmatpush2.msra.mxu0 0.0
      %3411 = vmatprep.subr.mxu0 0.0
      %3412 = vmatpush2.msra.mxu0 0.0
      %3413 = vmatprep.subr.mxu0 0.0
      %3414 = vmatpush2.msra.mxu0 0.0
      %3415 = vmatprep.subr.mxu0 0.0
      %3416 = vmatpush2.msra.mxu0 0.0
      %3417 = vmatprep.subr.mxu0 0.0
      %3418 = vmatpush2.msra.mxu0 0.0
      %3419 = vmatprep.subr.mxu0 0.0
      %3420 = vmatpush2.msra.mxu0 0.0
      %3421 = vmatprep.subr.mxu0 0.0
      %3422 = vmatpush2.msra.mxu0 0.0
      %3423 = vmatprep.mubr.f32.mxu0 0.0
      %v3424 = vand.u32 %v2976, 4294901760
      %3425 = vmatmul.mubr.f32.gmra.mxu0 %v3424
      %v3426 = vpop.f32.mrf.mxu0
      %v3427 = vadd.f32 %v3334, %v3426
      %v3428 = vpop.f32.mrf.mxu0
      %v3429 = vadd.f32 %v3336, %v3428
      %3430 = vmatprep.mubr.f32.mxu0 0.0
      %v3431 = vand.u32 %v2979, 4294901760
      %3432 = vmatmul.mubr.f32.gmra.mxu0 %v3431
      %v3433 = vpop.f32.mrf.mxu0
      %v3434 = vadd.f32 %v3343, %v3433
      %v3435 = vpop.f32.mrf.mxu0
      %v3436 = vadd.f32 %v3345, %v3435
      %3437 = vdwg.mxu0
      %3438 = vmatprep.subr.mxu0 0.0
      %3439 = vmatpush1.msra.mxu0 0.0
      %3440 = vmatprep.subr.mxu0 0.0
      %3441 = vmatpush1.msra.mxu0 0.0
      %3442 = vmatprep.subr.mxu0 0.0
      %3443 = vmatpush1.msra.mxu0 0.0
      %3444 = vmatprep.subr.mxu0 0.0
      %3445 = vmatpush1.msra.mxu0 0.0
      %3446 = vmatprep.subr.mxu0 0.0
      %3447 = vmatpush1.msra.mxu0 0.0
      %3448 = vmatprep.subr.mxu0 0.0
      %3449 = vmatpush1.msra.mxu0 0.0
      %3450 = vmatprep.subr.mxu0 0.0
      %3451 = vmatpush1.msra.mxu0 0.0
      %3452 = vmatprep.subr.mxu0 0.0
      %3453 = vmatpush1.msra.mxu0 0.0
      %3454 = vmatprep.subr.mxu0 0.0
      %3455 = vmatpush1.msra.mxu0 0.0
      %3456 = vmatprep.subr.mxu0 0.0
      %3457 = vmatpush1.msra.mxu0 0.0
      %3458 = vmatprep.subr.mxu0 0.0
      %3459 = vmatpush1.msra.mxu0 0.0
      %3460 = vmatprep.subr.mxu0 0.0
      %3461 = vmatpush1.msra.mxu0 0.0
      %3462 = vmatprep.subr.mxu0 0.0
      %3463 = vmatpush1.msra.mxu0 0.0
      %3464 = vmatprep.subr.mxu0 0.0
      %3465 = vmatpush1.msra.mxu0 0.0
      %v3466 = vand.u32 %v2973, 4294901760
      %3467 = vmatprep.subr.mxu0 %v3466
      %v3468 = vand.u32 %v2971, 4294901760
      %3469 = vmatpush1.msra.mxu0 %v3468
      %v3470 = vand.u32 %v2965, 4294901760
      %3471 = vmatprep.subr.mxu0 %v3470
      %v3472 = vand.u32 %v2963, 4294901760
      %3473 = vmatpush1.msra.mxu0 %v3472
      %3474 = vmatprep.subr.mxu0 0.0
      %3475 = vmatpush2.msra.mxu0 0.0
      %3476 = vmatprep.subr.mxu0 0.0
      %3477 = vmatpush2.msra.mxu0 0.0
      %3478 = vmatprep.subr.mxu0 0.0
      %3479 = vmatpush2.msra.mxu0 0.0
      %3480 = vmatprep.subr.mxu0 0.0
      %3481 = vmatpush2.msra.mxu0 0.0
      %3482 = vmatprep.subr.mxu0 0.0
      %3483 = vmatpush2.msra.mxu0 0.0
      %3484 = vmatprep.subr.mxu0 0.0
      %3485 = vmatpush2.msra.mxu0 0.0
      %3486 = vmatprep.subr.mxu0 0.0
      %3487 = vmatpush2.msra.mxu0 0.0
      %3488 = vmatprep.subr.mxu0 0.0
      %3489 = vmatpush2.msra.mxu0 0.0
      %3490 = vmatprep.subr.mxu0 0.0
      %3491 = vmatpush2.msra.mxu0 0.0
      %3492 = vmatprep.subr.mxu0 0.0
      %3493 = vmatpush2.msra.mxu0 0.0
      %3494 = vmatprep.subr.mxu0 0.0
      %3495 = vmatpush2.msra.mxu0 0.0
      %3496 = vmatprep.subr.mxu0 0.0
      %3497 = vmatpush2.msra.mxu0 0.0
      %3498 = vmatprep.subr.mxu0 0.0
      %3499 = vmatpush2.msra.mxu0 0.0
      %3500 = vmatprep.subr.mxu0 0.0
      %3501 = vmatpush2.msra.mxu0 0.0
      %3502 = vmatprep.subr.mxu0 0.0
      %3503 = vmatpush2.msra.mxu0 0.0
      %3504 = vmatprep.subr.mxu0 0.0
      %3505 = vmatpush2.msra.mxu0 0.0
      %3506 = vmatprep.mubr.f32.mxu0 0.0
      %v3507 = vand.u32 %v2976, 4294901760
      %3508 = vmatmul.mubr.f32.gmra.mxu0 %v3507
      %v3509 = vpop.f32.mrf.mxu0
      %v3510 = vadd.f32 %v3427, %v3509
      %v3511 = vpop.f32.mrf.mxu0
      %v3512 = vadd.f32 %v3429, %v3511
      %3513 = vmatprep.mubr.f32.mxu0 0.0
      %v3514 = vand.u32 %v2979, 4294901760
      %3515 = vmatmul.mubr.f32.gmra.mxu0 %v3514
      %v3516 = vpop.f32.mrf.mxu0
      %v3517 = vadd.f32 %v3434, %v3516
      %v3518 = vpop.f32.mrf.mxu0
      %v3519 = vadd.f32 %v3436, %v3518
      %3520 = vdwg.mxu0
      %v3521 = vadd.f32 %v3510, %v3512
      %3522 = vadd.xlane.f32.xlu0 %v3521
      %v3523 = vpop.xlane.xlu0 %3522
      %v3524 = vadd.f32 %v3517, %v3519
      %3525 = vadd.xlane.f32.xlu0 %v3524
      %v3526 = vpop.xlane.xlu0 %3525
      %v3527 = vmul.f32 %v3523, 0.00390625
      %v3528 = vmul.f32 %v3526, 0.00390625
      %v3529 = vadd.f32 %v3527, %v477
      %v3530 = vadd.f32 %v3528, %v478
      %v3531 = vsub.f32 0.0, %v3529
      %v3532 = vsub.f32 0.0, %v3530
      %v3533 = vmul.f32 %v3531, 1.442695
      %v3534 = vpow.pop %v3533
      %v3535 = vmul.f32 %v3532, 1.442695
      %v3536 = vpow.pop %v3535
      %v3537 = vadd.f32 %v3534, 1.0
      %v3538 = vadd.f32 %v3536, 1.0
      %v3539 = vrcp.pop %v3537
      %v3540 = vmul.f32 1.0, %v3539
      %v3541 = vrcp.pop %v3538
      %v3542 = vmul.f32 1.0, %v3541
      %v3543 = vsub.f32 %v479, %v481
      %v3544 = vsub.f32 %v480, %v482
      %3546 = vset.pattern.permute.xlu0 0
      %3547 = vperm.xlu0 %3546, %v3543
      %v3548 = vpop.permute.xlu0 %3547
      %3551 = vset.pattern.permute.xlu0 0
      %3552 = vperm.xlu0 %3551, %v3544
      %v3553 = vpop.permute.xlu0 %3552
      %v3555 = vmul.f32 %v3548, %v2963
      %v3556 = vmul.f32 %v3548, %v2965
      %v3557 = vmul.f32 %v3553, %v2971
      %v3558 = vmul.f32 %v3553, %v2973
      %3560 = vset.pattern.permute.xlu0 0
      %3561 = vperm.xlu0 %3560, %v3540
      %v3562 = vpop.permute.xlu0 %3561
      %3565 = vset.pattern.permute.xlu0 0
      %3566 = vperm.xlu0 %3565, %v3542
      %v3567 = vpop.permute.xlu0 %3566
      %v3569 = vmul.f32 %v3562, %v3555
      %v3570 = vmul.f32 %v3562, %v3556
      %v3571 = vmul.f32 %v3567, %v3557
      %v3572 = vmul.f32 %v3567, %v3558
      %v3573 = vsub.f32 0.0, %v3569
      %v3574 = vsub.f32 0.0, %v3570
      %v3575 = vsub.f32 0.0, %v3571
      %v3576 = vsub.f32 0.0, %v3572
      %v3577 = vmul.f32 %v3573, 1.442695
      %v3578 = vpow.pop %v3577
      %v3579 = vmul.f32 %v3574, 1.442695
      %v3580 = vpow.pop %v3579
      %v3581 = vmul.f32 %v3575, 1.442695
      %v3582 = vpow.pop %v3581
      %v3583 = vmul.f32 %v3576, 1.442695
      %v3584 = vpow.pop %v3583
      %v3585 = vadd.f32 %v3578, 1.0
      %v3586 = vadd.f32 %v3580, 1.0
      %v3587 = vadd.f32 %v3582, 1.0
      %v3588 = vadd.f32 %v3584, 1.0
      %v3589 = vrcp.pop %v3585
      %v3590 = vmul.f32 1.0, %v3589
      %v3591 = vrcp.pop %v3586
      %v3592 = vmul.f32 1.0, %v3591
      %v3593 = vrcp.pop %v3587
      %v3594 = vmul.f32 1.0, %v3593
      %v3595 = vrcp.pop %v3588
      %v3596 = vmul.f32 1.0, %v3595
      %v3597 = vmul.f32 %v3555, %v3590
      %v3598 = vmul.f32 %v3556, %v3592
      %v3599 = vmul.f32 %v3557, %v3594
      %v3600 = vmul.f32 %v3558, %v3596
      %3602 = vset.pattern.permute.xlu0 0
      %3603 = vperm.xlu0 %3602, %v481
      %v3604 = vpop.permute.xlu0 %3603
      %3607 = vset.pattern.permute.xlu0 0
      %3608 = vperm.xlu0 %3607, %v482
      %v3609 = vpop.permute.xlu0 %3608
      %v3611 = vmul.f32 %v3604, %v2963
      %v3612 = vmul.f32 %v3604, %v2965
      %v3613 = vmul.f32 %v3609, %v2971
      %v3614 = vmul.f32 %v3609, %v2973
      %v3615 = vadd.f32 %v3597, %v3611
      %v3616 = vadd.f32 %v3598, %v3612
      %v3617 = vadd.f32 %v3599, %v3613
      %v3618 = vadd.f32 %v3600, %v3614
      %3619 = vst [vmem:[%s460] sm:$0xff] %v3615
      %3620 = vst [vmem:[%s460 + $0x8] sm:$0xff] %v3616
      %3621 = vst [vmem:[%s460 + $0x10] sm:$0xff] %v3617
      %3622 = vst [vmem:[%s460 + $0x18] sm:$0xff] %v3618
      %p3623 = scmp.lt.s32.totalorder %s24, 1
      %s3624 = scalar_select %p3623, %s24, 1
      %s3625 = smul.addr %s3624, 4
      %s3626 = smul.addr %s3625, 8
      %s3627 = scalar_lea.vmem %s13, %s3626
      // Predicated region
      $region73: #{am_forward.1} parent=71 // pred_check
        %p3628 = pneg %p325
      $region74: #{am_forward.1} parent=71 // pred_check_branch
        %3630 = sbr.rel (%p3628) target = $region76
      $region75: #{am_forward.1} parent=71 // pred_region
        _
      $region76: #{am_forward.1} parent=71 // pred_fallthru
        _
    $region72: #{am_forward.1} parent=5 // pred_fallthru
      _
    %p3631 = scmp.le.s32.totalorder 2, %s19
    // Predicated region
    $region77: #{am_forward.1} parent=5 // pred_check
      %p3632 = pneg %p3631
    $region78: #{am_forward.1} parent=5 // pred_check_branch
      %3634 = sbr.rel (%p3632) target = $region80
    $region79: #{am_forward.1} parent=5 // pred_region
      %s3635 = ssub.s32 %s19, 2
      // Predicated region
      $region81: #{am_forward.1} parent=79 // pred_check
        %p3636 = pneg %p331
      $region82: #{am_forward.1} parent=79 // pred_check_branch
        %3638 = sbr.rel (%p3636) target = $region84
      $region83: #{am_forward.1} parent=79 // pred_region
        %p3639 = scmp.lt.s32.totalorder %s25, 1
        %s3640 = scalar_select %p3639, %s25, 1
        %s3641 = smul.addr %s3640, 4
        %s3642 = smul.addr %s3641, 8
        %s3643 = scalar_lea.vmem %s13, %s3642
      $region84: #{am_forward.1} parent=79 // pred_fallthru
        _
    $region80: #{am_forward.1} parent=5 // pred_fallthru
      _
  $region6: #{am_forward.1} parent=0 // loop_footer
    %s23 = sadd.s32 1, %s19
  $region7: #{am_forward.1} parent=0 // loop_footer_branch
    %18 = sbr.rel target = $region3
  $region8: #{am_forward.1} parent=0 // loop_exit
    _

</llo_original>
